<compile_context>
chip_gen: v7x
topology: tpu7x:2x2x1
jax: 0.10.0
libtpu: 0.0.40
codegen_flags: <defaults>
</compile_context>

<pallas_src>
import functools

import jax
import jax.numpy as jnp
import numpy as np
from jax.experimental import pallas as pl
from jax.experimental.pallas import tpu as pltpu


# ---------------------------------------------------------------------------
# small helpers
# ---------------------------------------------------------------------------
def _largest_divisor(n, target):
    """Largest divisor of n that is <= target."""
    t = min(n, target)
    while n % t:
        t -= 1
    return t


def _vmem_spec():
    # Whole array resident in VMEM, not pipelined/double-buffered
    # (loop-invariant operands: weights, biases).
    return pl.BlockSpec(memory_space=pltpu.MemorySpace.VMEM)


# ---------------------------------------------------------------------------
# Fused kernel: layer-0 projection + 2-layer LSTM recurrence + FC head.
# Grid = (batch_blocks ["parallel"], time_blocks ["arbitrary"]).
# TS time steps per grid iteration; h/c state resident in VMEM scratch.
# ---------------------------------------------------------------------------
def _char_rnn_kernel(x_ref, wih0_ref, whh0_ref, w1_ref, b0_ref, b1_ref,
                     fcw_ref, fcb_ref, h0_ref, c0_ref,
                     y_ref, hN_ref, cN_ref,
                     h_sc, c_sc, xp_sc, hseq_sc, *, unroll):
    t = pl.program_id(1)
    TS, BB, Vin = x_ref.shape
    H = h_sc.shape[-1]
    G = 4 * H
    cdt = whh0_ref.dtype            # matmul-operand dtype (f32 or bf16)

    @pl.when(t == 0)
    def _():
        h_sc[...] = h0_ref[...]
        c_sc[...] = c0_ref[...]

    # ---- layer-0 input projection for the WHOLE time block: one matmul ----
    # (no sequential dependence -> hoisted out of the recurrence; M = TS*BB
    # instead of TS tiny M = BB matmuls).
    x2 = x_ref[...].reshape(TS * BB, Vin).astype(cdt)
    xp = jnp.dot(x2, wih0_ref[...], preferred_element_type=jnp.float32) + b0_ref[...]
    xp_sc[...] = xp.reshape(TS, BB, G)

    # Bias broadcast hoisted out of the (possibly unrolled) loop: JAX does
    # not CSE broadcast_in_dim.
    b1b = jnp.broadcast_to(b1_ref[...], (BB, G))

    def sg(v):
        # sigmoid(x) == 0.5*tanh(x/2) + 0.5 : a single EUP transcendental
        # instead of exp + reciprocal.
        return 0.5 * jnp.tanh(0.5 * v) + 0.5

    def split_gates(g):             # PyTorch gate order: i, f, g, o
        # NOTE: at realistic n_hidden (multiple of 128) these slices are
        # lane-aligned; at the toy demo size they cut inside one vreg.
        i = sg(g[:, 0 * H:1 * H])
        f = sg(g[:, 1 * H:2 * H])
        gg = jnp.tanh(g[:, 2 * H:3 * H])
        o = sg(g[:, 3 * H:4 * H])
        return i, f, gg, o

    def step(tt, carry):
        h0l, c0l, h1l, c1l = carry
        # layer 0: only the hidden-state matmul is on the serial path.
        g0 = xp_sc[tt] + jnp.dot(h0l.astype(cdt), whh0_ref[...],
                                 preferred_element_type=jnp.float32)
        i0, f0, gg0, o0 = split_gates(g0)
        c0n = f0 * c0l + i0 * gg0
        h0n = o0 * jnp.tanh(c0n)
        # layer 1 (inter-layer dropout identity in eval mode): input and
        # hidden matmuls fused into ONE via the stacked (2H, 4H) weight.
        h01 = jnp.concatenate([h0n, h1l], axis=-1).astype(cdt)
        g1 = jnp.dot(h01, w1_ref[...], preferred_element_type=jnp.float32) + b1b
        i1, f1, gg1, o1 = split_gates(g1)
        c1n = f1 * c1l + i1 * gg1
        h1n = o1 * jnp.tanh(c1n)
        # FC head is applied AFTER the loop (batched, lane-dense store);
        # just stash h1 for this step.
        hseq_sc[tt] = h1n
        return h0n, c0n, h1n, c1n

    carry = (h_sc[0], c_sc[0], h_sc[1], c_sc[1])
    h0l, c0l, h1l, c1l = jax.lax.fori_loop(0, TS, step, carry, unroll=unroll)
    h_sc[0] = h0l
    c_sc[0] = c0l
    h_sc[1] = h1l
    c_sc[1] = c1l

    # ---- FC head: one matmul over the whole time block (M = TS*BB), one ----
    # lane-dense (padded-to-128) store instead of TS masked stores.
    # (post-LSTM dropout is identity in eval mode)
    hseq = hseq_sc[...].reshape(TS * BB, H).astype(cdt)
    lg = jnp.dot(hseq, fcw_ref[...], preferred_element_type=jnp.float32) + fcb_ref[...]
    y_ref[...] = lg.reshape(TS, BB, -1)

    # Final states only need to reach the output once, on the last time block.
    @pl.when(t == pl.num_programs(1) - 1)
    def _():
        hN_ref[...] = h_sc[...]
        cN_ref[...] = c_sc[...]


def _char_rnn_pallas(x_tm, wih0T, whh0T, w1, b0, b1, fcwT, fcb, h0, c0,
                     *, time_block=16, batch_block=None, alias_state=False):
    """x_tm: (S, B, V) time-major one-hot input (compute dtype).
    Returns (logits_tm (S, B, Vp) f32, hN (L, B, H) f32, cN (L, B, H) f32)."""
    S, B, Vin = x_tm.shape
    L, _, H = h0.shape
    Vp = fcwT.shape[1]

    TS = _largest_divisor(S, time_block)
    # Batch-block axis ("parallel"): lets v7x's two TensorCores split the
    # batch.  Blocks must equal B or be a multiple of 8 (sublane tiling).
    if batch_block is None:
        BB = B // 2 if (B >= 256 and (B // 2) % 8 == 0) else B
    else:
        BB = batch_block
    assert B % BB == 0 and (BB == B or BB % 8 == 0)
    nbb, ntb = B // BB, S // TS
    # Full unroll only for short time blocks; partial unroll keeps LLO
    # scheduling quality without vreg/code-size blowup for larger TS.
    unroll = True if TS <= 8 else 4

    # VMEM budget derived from the actual operands instead of a fixed cap.
    # NOTE: on v7x (64 MiB VMEM per TC) use compute_dtype=bfloat16 at large H
    # so the resident weights stay inside the per-core budget.
    def nbytes(shape, dtype):
        return int(np.prod(shape)) * jnp.dtype(dtype).itemsize

    resident = sum(nbytes(a.shape, a.dtype)
                   for a in (wih0T, whh0T, w1, b0, b1, fcwT, fcb))
    pipelined = 2 * (nbytes((TS, BB, Vin), x_tm.dtype)
                     + nbytes((TS, BB, Vp), jnp.float32)
                     + 4 * nbytes((L, BB, H), jnp.float32))
    scratch = (2 * nbytes((L, BB, H), jnp.float32)
               + nbytes((TS, BB, 4 * H), jnp.float32)
               + nbytes((TS, BB, H), jnp.float32))
    vmem_limit = int(min(100 * 1024 * 1024,
                         max(32 * 1024 * 1024,
                             1.5 * (resident + pipelined + scratch) + (2 << 20))))

    grid_spec = pltpu.PrefetchScalarGridSpec(
        num_scalar_prefetch=0,
        grid=(nbb, ntb),
        in_specs=[
            pl.BlockSpec((TS, BB, Vin), lambda b, t: (t, b, 0)),  # raw one-hot x
            _vmem_spec(),                                         # wih0T (V, 4H)
            _vmem_spec(),                                         # whh0T (H, 4H)
            _vmem_spec(),                                         # w1    (2H, 4H)
            _vmem_spec(),                                         # b0    (1, 4H)
            _vmem_spec(),                                         # b1    (1, 4H)
            _vmem_spec(),                                         # fcwT  (H, Vp)
            _vmem_spec(),                                         # fcb   (1, Vp)
            pl.BlockSpec((L, BB, H), lambda b, t: (0, b, 0)),     # h0
            pl.BlockSpec((L, BB, H), lambda b, t: (0, b, 0)),     # c0
        ],
        out_specs=[
            pl.BlockSpec((TS, BB, Vp), lambda b, t: (t, b, 0)),   # logits (time-major)
            pl.BlockSpec((L, BB, H), lambda b, t: (0, b, 0)),     # final h
            pl.BlockSpec((L, BB, H), lambda b, t: (0, b, 0)),     # final c
        ],
        scratch_shapes=[
            pltpu.VMEM((L, BB, H), jnp.float32),        # resident hidden state
            pltpu.VMEM((L, BB, H), jnp.float32),        # resident cell state
            pltpu.VMEM((TS, BB, 4 * H), jnp.float32),   # per-block x projection
            pltpu.VMEM((TS, BB, H), jnp.float32),       # per-block top-layer h sequence
        ],
    )
    out_shape = (
        jax.ShapeDtypeStruct((S, B, Vp), jnp.float32),
        jax.ShapeDtypeStruct((L, B, H), jnp.float32),
        jax.ShapeDtypeStruct((L, B, H), jnp.float32),
    )
    # Optional h0->hN / c0->cN aliasing for step-wise generation loops
    # (avoids an extra (L, B, H) HBM allocation + copy per decode step).
    io_aliases = {8: 1, 9: 2} if alias_state else {}

    kernel = functools.partial(_char_rnn_kernel, unroll=unroll)
    return pl.pallas_call(
        kernel,
        grid_spec=grid_spec,
        out_shape=out_shape,
        input_output_aliases=io_aliases,
        compiler_params=pltpu.CompilerParams(
            dimension_semantics=("parallel", "arbitrary"),
            vmem_limit_bytes=vmem_limit),
    )(x_tm, wih0T, whh0T, w1, b0, b1, fcwT, fcb, h0, c0)


# ---------------------------------------------------------------------------
# CharRNN forward (wrapper) — mirrors CharRNN.forward in eval mode.
# ---------------------------------------------------------------------------
def char_rnn_forward(x, hc, lstm_params, fc_w, fc_b, n_hidden,
                     compute_dtype=jnp.float32,
                     time_block=16, batch_block=None, alias_state=False):
    """x: (batch, seq, vocab) batch-first, like PyTorch. hc = (h0, c0).

    compute_dtype=bfloat16 is recommended at realistic n_hidden on all
    generations (MXU-native, halves resident weight footprint — required to
    fit v7x's 64 MiB/TC VMEM at H>=1024); state/gate math stays f32.
    """
    h0, c0 = hc
    (wih0, whh0, b0), (wih1, whh1, b1) = lstm_params
    B, S, V = x.shape
    H = n_hidden
    assert h0.shape[0] == 2, "kernel implements the 2-layer CharRNN default"

    # Hoisted, one-time weight prep (matmuls feed the MXU directly; no
    # per-time-step .T inside the kernel).
    wih0T = wih0.T.astype(compute_dtype)                           # (V, 4H)
    whh0T = whh0.T.astype(compute_dtype)                           # (H, 4H)
    # Layer-1: fuse the input and hidden matmuls -> one stacked (2H, 4H) weight.
    w1 = jnp.concatenate([wih1.T, whh1.T], axis=0).astype(compute_dtype)
    b0r = b0.reshape(1, 4 * H).astype(jnp.float32)
    b1r = b1.reshape(1, 4 * H).astype(jnp.float32)
    # FC head: pad the lane (vocab) dim to a multiple of 128 so the logit
    # store is a lane-dense unmasked vst; padded columns are sliced off below.
    Vp = ((V + 127) // 128) * 128
    fcwTp = jnp.zeros((H, Vp), compute_dtype).at[:, :V].set(
        fc_w.T.astype(compute_dtype))
    fcbp = jnp.zeros((1, Vp), jnp.float32).at[:, :V].set(
        fc_b.reshape(1, V).astype(jnp.float32))

    x_tm = jnp.transpose(x, (1, 0, 2)).astype(compute_dtype)       # (S, B, V)

    y_tm, hN, cN = _char_rnn_pallas(
        x_tm, wih0T, whh0T, w1, b0r, b1r, fcwTp, fcbp, h0, c0,
        time_block=time_block, batch_block=batch_block, alias_state=alias_state)

    # (S, B, Vp) -> (B*S, V): same row order as PyTorch's reshape + fc.
    logits = jnp.transpose(y_tm, (1, 0, 2))[:, :, :V].reshape(B * S, V)
    return logits, (hN, cN)


# ---------------------------------------------------------------------------
# Pure-JAX reference (for correctness check)
# ---------------------------------------------------------------------------
def char_rnn_reference(x, hc, lstm_params, fc_w, fc_b, n_hidden):
    h0, c0 = hc
    x_tm = jnp.transpose(x, (1, 0, 2))

    def step(carry, x_t):
        h, c = carry
        inp = x_t
        hs, cs = [], []
        for l, (wih, whh, b) in enumerate(lstm_params):
            gates = inp @ wih.T + h[l] @ whh.T + b
            i, f, g, o = jnp.split(gates, 4, axis=-1)
            i, f, o = jax.nn.sigmoid(i), jax.nn.sigmoid(f), jax.nn.sigmoid(o)
            g = jnp.tanh(g)
            c_new = f * c[l] + i * g
            h_new = o * jnp.tanh(c_new)
            hs.append(h_new)
            cs.append(c_new)
            inp = h_new
        return (jnp.stack(hs), jnp.stack(cs)), inp

    (hN, cN), y_tm = jax.lax.scan(step, (h0, c0), x_tm)
    y = jnp.transpose(y_tm, (1, 0, 2))
    y_flat = y.reshape(y.shape[0] * y.shape[1], n_hidden)
    logits = y_flat @ fc_w.T + fc_b
    return logits, (hN, cN)


# ---------------------------------------------------------------------------
if __name__ == "__main__":
    batch, seq = 2, 16
    vocab = 16          # len(tokens)
    n_hidden = 32
    n_layers = 2

    key = jax.random.PRNGKey(0)
    keys = jax.random.split(key, 12)

    # Deterministic parameter init (PyTorch LSTM default: U(-1/sqrt(H), 1/sqrt(H)))
    bound = 1.0 / np.sqrt(n_hidden)

    def u(k, shape, lo, hi):
        return jax.random.uniform(k, shape, jnp.float32, lo, hi)

    # layer 0: input size = vocab; layer 1: input size = n_hidden
    wih0 = u(keys[0], (4 * n_hidden, vocab), -bound, bound)
    whh0 = u(keys[1], (4 * n_hidden, n_hidden), -bound, bound)
    b0 = (u(keys[2], (4 * n_hidden,), -bound, bound)
          + u(keys[3], (4 * n_hidden,), -bound, bound))          # b_ih + b_hh
    wih1 = u(keys[4], (4 * n_hidden, n_hidden), -bound, bound)
    whh1 = u(keys[5], (4 * n_hidden, n_hidden), -bound, bound)
    b1 = (u(keys[6], (4 * n_hidden,), -bound, bound)
          + u(keys[7], (4 * n_hidden,), -bound, bound))
    lstm_params = ((wih0, whh0, b0), (wih1, whh1, b1))

    # fc: init_weights() -> weight U(-1,1), bias 0
    fc_w = u(keys[8], (vocab, n_hidden), -1.0, 1.0)
    fc_b = jnp.zeros((vocab,), jnp.float32)

    # one-hot input (like one_hot_encode) + zero initial hidden state
    tokens = jax.random.randint(keys[9], (batch, seq), 0, vocab)
    x = jax.nn.one_hot(tokens, vocab, dtype=jnp.float32)          # (B, S, V)
    h0 = jnp.zeros((n_layers, batch, n_hidden), jnp.float32)
    c0 = jnp.zeros((n_layers, batch, n_hidden), jnp.float32)

    ref_logits, (ref_h, ref_c) = char_rnn_reference(
        x, (h0, c0), lstm_params, fc_w, fc_b, n_hidden)

    # ---- f32, multiple time blocks (exercises state carry across the grid) --
    logits, (hN, cN) = char_rnn_forward(x, (h0, c0), lstm_params,
                                        fc_w, fc_b, n_hidden, time_block=8)
    jax.block_until_ready((logits, hN, cN))
    np.testing.assert_allclose(np.asarray(logits), np.asarray(ref_logits),
                               rtol=1e-4, atol=1e-4)
    np.testing.assert_allclose(np.asarray(hN), np.asarray(ref_h),
                               rtol=1e-4, atol=1e-4)
    np.testing.assert_allclose(np.asarray(cN), np.asarray(ref_c),
                               rtol=1e-4, atol=1e-4)

    # ---- f32, single large time block (partial-unroll path) ----------------
    logits2, (hN2, cN2) = char_rnn_forward(x, (h0, c0), lstm_params,
                                           fc_w, fc_b, n_hidden, time_block=16)
    jax.block_until_ready((logits2, hN2, cN2))
    np.testing.assert_allclose(np.asarray(logits2), np.asarray(ref_logits),
                               rtol=1e-4, atol=1e-4)
    np.testing.assert_allclose(np.asarray(hN2), np.asarray(ref_h),
                               rtol=1e-4, atol=1e-4)
    np.testing.assert_allclose(np.asarray(cN2), np.asarray(ref_c),
                               rtol=1e-4, atol=1e-4)

    # ---- bf16 matmul operands (MXU-native; state/gate math stays f32) ------
    # NOTE: recurrent state is cast to bf16 at each step's matmul input, so
    # quantization error compounds over long sequences; fine at this scale.
    logits_bf, (hN_bf, cN_bf) = char_rnn_forward(
        x, (h0, c0), lstm_params, fc_w, fc_b, n_hidden,
        compute_dtype=jnp.bfloat16)
    jax.block_until_ready((logits_bf, hN_bf, cN_bf))
    np.testing.assert_allclose(np.asarray(logits_bf), np.asarray(ref_logits),
                               rtol=5e-2, atol=5e-2)
    np.testing.assert_allclose(np.asarray(hN_bf), np.asarray(ref_h),
                               rtol=5e-2, atol=5e-2)
    np.testing.assert_allclose(np.asarray(cN_bf), np.asarray(ref_c),
                               rtol=5e-2, atol=5e-2)

    print("KERNEL_OK")
</pallas_src>

<mosaic_0001>
module attributes {stable_mosaic.version = 11 : i64} {
  func.func @_char_rnn_kernel(%arg0: i32, %arg1: i32, %arg2: memref<8x2x16xf32, #tpu.memory_space<vmem>>, %arg3: memref<16x128xf32, #tpu.memory_space<vmem>>, %arg4: memref<32x128xf32, #tpu.memory_space<vmem>>, %arg5: memref<64x128xf32, #tpu.memory_space<vmem>>, %arg6: memref<1x128xf32, #tpu.memory_space<vmem>>, %arg7: memref<1x128xf32, #tpu.memory_space<vmem>>, %arg8: memref<32x128xf32, #tpu.memory_space<vmem>>, %arg9: memref<1x128xf32, #tpu.memory_space<vmem>>, %arg10: memref<2x2x32xf32, #tpu.memory_space<vmem>>, %arg11: memref<2x2x32xf32, #tpu.memory_space<vmem>>, %arg12: memref<8x2x128xf32, #tpu.memory_space<vmem>>, %arg13: memref<2x2x32xf32, #tpu.memory_space<vmem>>, %arg14: memref<2x2x32xf32, #tpu.memory_space<vmem>>, %arg15: memref<2x2x32xf32, #tpu.memory_space<vmem>>, %arg16: memref<2x2x32xf32, #tpu.memory_space<vmem>>, %arg17: memref<8x2x128xf32, #tpu.memory_space<vmem>>, %arg18: memref<8x2x32xf32, #tpu.memory_space<vmem>>) attributes {dimension_semantics = [#tpu.dimension_semantics<parallel>, #tpu.dimension_semantics<arbitrary>], iteration_bounds = array<i64: 1, 2>, scalar_prefetch = 0 : i64, scratch_operands = 4 : i64, tpu.core_type = #tpu.core_type<tc>, window_params = [{transform_indices = @transform_0, window_bounds = array<i64: 8, 2, 16>}, {pipeline_mode = #tpu.pipeline_mode<synchronous>, transform_indices = @transform_1, window_bounds = array<i64: 16, 128>}, {pipeline_mode = #tpu.pipeline_mode<synchronous>, transform_indices = @transform_2, window_bounds = array<i64: 32, 128>}, {pipeline_mode = #tpu.pipeline_mode<synchronous>, transform_indices = @transform_3, window_bounds = array<i64: 64, 128>}, {pipeline_mode = #tpu.pipeline_mode<synchronous>, transform_indices = @transform_4, window_bounds = array<i64: 1, 128>}, {pipeline_mode = #tpu.pipeline_mode<synchronous>, transform_indices = @transform_5, window_bounds = array<i64: 1, 128>}, {pipeline_mode = #tpu.pipeline_mode<synchronous>, transform_indices = @transform_6, window_bounds = array<i64: 32, 128>}, {pipeline_mode = #tpu.pipeline_mode<synchronous>, transform_indices = @transform_7, window_bounds = array<i64: 1, 128>}, {transform_indices = @transform_8, window_bounds = array<i64: 2, 2, 32>}, {transform_indices = @transform_9, window_bounds = array<i64: 2, 2, 32>}, {transform_indices = @transform_10, window_bounds = array<i64: 8, 2, 128>}, {transform_indices = @transform_11, window_bounds = array<i64: 2, 2, 32>}, {transform_indices = @transform_12, window_bounds = array<i64: 2, 2, 32>}]} {
    %c0_i32 = arith.constant 0 : i32
    %0 = arith.cmpi eq, %arg1, %c0_i32 : i32
    %1 = arith.extui %0 : i1 to i32
    %c0_i32_0 = arith.constant 0 : i32
    %2 = arith.cmpi ne, %1, %c0_i32_0 : i32
    scf.if %2 {
      %c0_273 = arith.constant 0 : index
      %c0_274 = arith.constant 0 : index
      %c0_275 = arith.constant 0 : index
      %655 = vector.load %arg10[%c0_273, %c0_274, %c0_275] : memref<2x2x32xf32, #tpu.memory_space<vmem>>, vector<2x2x32xf32>
      %c0_276 = arith.constant 0 : index
      %c0_277 = arith.constant 0 : index
      %c0_278 = arith.constant 0 : index
      %656 = vector.load %arg15[%c0_276, %c0_277, %c0_278] : memref<2x2x32xf32, #tpu.memory_space<vmem>>, vector<2x2x32xf32>
      tpu.vector_store %arg15[%c0_276, %c0_277, %c0_278], %655 {strides = array<i32>} : memref<2x2x32xf32, #tpu.memory_space<vmem>>, vector<2x2x32xf32>,
      %c0_279 = arith.constant 0 : index
      %c0_280 = arith.constant 0 : index
      %c0_281 = arith.constant 0 : index
      %657 = vector.load %arg11[%c0_279, %c0_280, %c0_281] : memref<2x2x32xf32, #tpu.memory_space<vmem>>, vector<2x2x32xf32>
      %c0_282 = arith.constant 0 : index
      %c0_283 = arith.constant 0 : index
      %c0_284 = arith.constant 0 : index
      %658 = vector.load %arg16[%c0_282, %c0_283, %c0_284] : memref<2x2x32xf32, #tpu.memory_space<vmem>>, vector<2x2x32xf32>
      tpu.vector_store %arg16[%c0_282, %c0_283, %c0_284], %657 {strides = array<i32>} : memref<2x2x32xf32, #tpu.memory_space<vmem>>, vector<2x2x32xf32>,
    } else {
    }
    %c0 = arith.constant 0 : index
    %c0_1 = arith.constant 0 : index
    %c0_2 = arith.constant 0 : index
    %3 = vector.load %arg2[%c0, %c0_1, %c0_2] : memref<8x2x16xf32, #tpu.memory_space<vmem>>, vector<8x2x16xf32>
    %4 = vector.shape_cast %3 : vector<8x2x16xf32> to vector<16x16xf32>
    %c0_3 = arith.constant 0 : index
    %c0_4 = arith.constant 0 : index
    %5 = vector.load %arg3[%c0_3, %c0_4] : memref<16x128xf32, #tpu.memory_space<vmem>>, vector<16x128xf32>
    %cst = arith.constant dense<0.000000e+00> : vector<16x128xf32>
    %6 = tpu.matmul %4, %5, %cst {dimension_numbers = #tpu.dot_dimension_numbers<[1], [0], [0], [1], [0, 0, 1, 1], [], []>} : vector<16x16xf32>, vector<16x128xf32>, vector<16x128xf32> -> vector<16x128xf32>
    %c0_5 = arith.constant 0 : index
    %c0_6 = arith.constant 0 : index
    %7 = vector.load %arg6[%c0_5, %c0_6] : memref<1x128xf32, #tpu.memory_space<vmem>>, vector<1x128xf32>
    %8 = vector.broadcast %7 : vector<1x128xf32> to vector<16x128xf32>
    %9 = arith.addf %6, %8 : vector<16x128xf32>
    %10 = vector.shape_cast %9 : vector<16x128xf32> to vector<8x2x128xf32>
    %c0_7 = arith.constant 0 : index
    %c0_8 = arith.constant 0 : index
    %c0_9 = arith.constant 0 : index
    %11 = vector.load %arg17[%c0_7, %c0_8, %c0_9] : memref<8x2x128xf32, #tpu.memory_space<vmem>>, vector<8x2x128xf32>
    tpu.vector_store %arg17[%c0_7, %c0_8, %c0_9], %10 {strides = array<i32>} : memref<8x2x128xf32, #tpu.memory_space<vmem>>, vector<8x2x128xf32>,
    %c0_10 = arith.constant 0 : index
    %c0_11 = arith.constant 0 : index
    %12 = vector.load %arg7[%c0_10, %c0_11] : memref<1x128xf32, #tpu.memory_space<vmem>>, vector<1x128xf32>
    %13 = vector.shape_cast %12 : vector<1x128xf32> to vector<1x128xf32>
    %14 = vector.broadcast %13 : vector<1x128xf32> to vector<2x128xf32>
    %c0_12 = arith.constant 0 : index
    %c0_13 = arith.constant 0 : index
    %c0_14 = arith.constant 0 : index
    %15 = vector.load %arg15[%c0_12, %c0_13, %c0_14] : memref<2x2x32xf32, #tpu.memory_space<vmem>>, vector<1x2x32xf32>
    %16 = vector.shape_cast %15 : vector<1x2x32xf32> to vector<2x32xf32>
    %c0_15 = arith.constant 0 : index
    %c0_16 = arith.constant 0 : index
    %c0_17 = arith.constant 0 : index
    %17 = vector.load %arg16[%c0_15, %c0_16, %c0_17] : memref<2x2x32xf32, #tpu.memory_space<vmem>>, vector<1x2x32xf32>
    %18 = vector.shape_cast %17 : vector<1x2x32xf32> to vector<2x32xf32>
    %c1 = arith.constant 1 : index
    %c0_18 = arith.constant 0 : index
    %c0_19 = arith.constant 0 : index
    %19 = vector.load %arg15[%c1, %c0_18, %c0_19] : memref<2x2x32xf32, #tpu.memory_space<vmem>>, vector<1x2x32xf32>
    %20 = vector.shape_cast %19 : vector<1x2x32xf32> to vector<2x32xf32>
    %c1_20 = arith.constant 1 : index
    %c0_21 = arith.constant 0 : index
    %c0_22 = arith.constant 0 : index
    %21 = vector.load %arg16[%c1_20, %c0_21, %c0_22] : memref<2x2x32xf32, #tpu.memory_space<vmem>>, vector<1x2x32xf32>
    %22 = vector.shape_cast %21 : vector<1x2x32xf32> to vector<2x32xf32>
    %c0_i32_23 = arith.constant 0 : i32
    %23 = arith.index_cast %c0_i32_23 : i32 to index
    %c0_24 = arith.constant 0 : index
    %c0_25 = arith.constant 0 : index
    %24 = vector.load %arg17[%23, %c0_24, %c0_25] : memref<8x2x128xf32, #tpu.memory_space<vmem>>, vector<1x2x128xf32>
    %25 = vector.shape_cast %24 : vector<1x2x128xf32> to vector<2x128xf32>
    %c0_26 = arith.constant 0 : index
    %c0_27 = arith.constant 0 : index
    %26 = vector.load %arg4[%c0_26, %c0_27] : memref<32x128xf32, #tpu.memory_space<vmem>>, vector<32x128xf32>
    %cst_28 = arith.constant dense<0.000000e+00> : vector<2x128xf32>
    %27 = tpu.matmul %16, %26, %cst_28 {dimension_numbers = #tpu.dot_dimension_numbers<[1], [0], [0], [1], [0, 0, 1, 1], [], []>} : vector<2x32xf32>, vector<32x128xf32>, vector<2x128xf32> -> vector<2x128xf32>
    %28 = arith.addf %25, %27 : vector<2x128xf32>
    %29 = vector.extract_strided_slice %28 {offsets = [0, 0], sizes = [2, 32], strides = [1, 1]} : vector<2x128xf32> to vector<2x32xf32>
    %cst_29 = arith.constant 5.000000e-01 : f32
    %30 = vector.broadcast %cst_29 : f32 to vector<2x32xf32>
    %31 = arith.mulf %30, %29 : vector<2x32xf32>
    %32 = math.tanh %31 : vector<2x32xf32>
    %cst_30 = arith.constant 5.000000e-01 : f32
    %33 = vector.broadcast %cst_30 : f32 to vector<2x32xf32>
    %34 = arith.mulf %33, %32 : vector<2x32xf32>
    %cst_31 = arith.constant 5.000000e-01 : f32
    %35 = vector.broadcast %cst_31 : f32 to vector<2x32xf32>
    %36 = arith.addf %34, %35 : vector<2x32xf32>
    %37 = vector.extract_strided_slice %28 {offsets = [0, 32], sizes = [2, 32], strides = [1, 1]} : vector<2x128xf32> to vector<2x32xf32>
    %cst_32 = arith.constant 5.000000e-01 : f32
    %38 = vector.broadcast %cst_32 : f32 to vector<2x32xf32>
    %39 = arith.mulf %38, %37 : vector<2x32xf32>
    %40 = math.tanh %39 : vector<2x32xf32>
    %cst_33 = arith.constant 5.000000e-01 : f32
    %41 = vector.broadcast %cst_33 : f32 to vector<2x32xf32>
    %42 = arith.mulf %41, %40 : vector<2x32xf32>
    %cst_34 = arith.constant 5.000000e-01 : f32
    %43 = vector.broadcast %cst_34 : f32 to vector<2x32xf32>
    %44 = arith.addf %42, %43 : vector<2x32xf32>
    %45 = vector.extract_strided_slice %28 {offsets = [0, 64], sizes = [2, 32], strides = [1, 1]} : vector<2x128xf32> to vector<2x32xf32>
    %46 = math.tanh %45 : vector<2x32xf32>
    %47 = vector.extract_strided_slice %28 {offsets = [0, 96], sizes = [2, 32], strides = [1, 1]} : vector<2x128xf32> to vector<2x32xf32>
    %cst_35 = arith.constant 5.000000e-01 : f32
    %48 = vector.broadcast %cst_35 : f32 to vector<2x32xf32>
    %49 = arith.mulf %48, %47 : vector<2x32xf32>
    %50 = math.tanh %49 : vector<2x32xf32>
    %cst_36 = arith.constant 5.000000e-01 : f32
    %51 = vector.broadcast %cst_36 : f32 to vector<2x32xf32>
    %52 = arith.mulf %51, %50 : vector<2x32xf32>
    %cst_37 = arith.constant 5.000000e-01 : f32
    %53 = vector.broadcast %cst_37 : f32 to vector<2x32xf32>
    %54 = arith.addf %52, %53 : vector<2x32xf32>
    %55 = arith.mulf %44, %18 : vector<2x32xf32>
    %56 = arith.mulf %36, %46 : vector<2x32xf32>
    %57 = arith.addf %55, %56 : vector<2x32xf32>
    %58 = math.tanh %57 : vector<2x32xf32>
    %59 = arith.mulf %54, %58 : vector<2x32xf32>
    %60 = tpu.concatenate %59, %20 in 1 : vector<2x32xf32>, vector<2x32xf32> -> vector<2x64xf32>
    %c0_38 = arith.constant 0 : index
    %c0_39 = arith.constant 0 : index
    %61 = vector.load %arg5[%c0_38, %c0_39] : memref<64x128xf32, #tpu.memory_space<vmem>>, vector<64x128xf32>
    %cst_40 = arith.constant dense<0.000000e+00> : vector<2x128xf32>
    %62 = tpu.matmul %60, %61, %cst_40 {dimension_numbers = #tpu.dot_dimension_numbers<[1], [0], [0], [1], [0, 0, 1, 1], [], []>} : vector<2x64xf32>, vector<64x128xf32>, vector<2x128xf32> -> vector<2x128xf32>
    %63 = arith.addf %62, %14 : vector<2x128xf32>
    %64 = vector.extract_strided_slice %63 {offsets = [0, 0], sizes = [2, 32], strides = [1, 1]} : vector<2x128xf32> to vector<2x32xf32>
    %cst_41 = arith.constant 5.000000e-01 : f32
    %65 = vector.broadcast %cst_41 : f32 to vector<2x32xf32>
    %66 = arith.mulf %65, %64 : vector<2x32xf32>
    %67 = math.tanh %66 : vector<2x32xf32>
    %cst_42 = arith.constant 5.000000e-01 : f32
    %68 = vector.broadcast %cst_42 : f32 to vector<2x32xf32>
    %69 = arith.mulf %68, %67 : vector<2x32xf32>
    %cst_43 = arith.constant 5.000000e-01 : f32
    %70 = vector.broadcast %cst_43 : f32 to vector<2x32xf32>
    %71 = arith.addf %69, %70 : vector<2x32xf32>
    %72 = vector.extract_strided_slice %63 {offsets = [0, 32], sizes = [2, 32], strides = [1, 1]} : vector<2x128xf32> to vector<2x32xf32>
    %cst_44 = arith.constant 5.000000e-01 : f32
    %73 = vector.broadcast %cst_44 : f32 to vector<2x32xf32>
    %74 = arith.mulf %73, %72 : vector<2x32xf32>
    %75 = math.tanh %74 : vector<2x32xf32>
    %cst_45 = arith.constant 5.000000e-01 : f32
    %76 = vector.broadcast %cst_45 : f32 to vector<2x32xf32>
    %77 = arith.mulf %76, %75 : vector<2x32xf32>
    %cst_46 = arith.constant 5.000000e-01 : f32
    %78 = vector.broadcast %cst_46 : f32 to vector<2x32xf32>
    %79 = arith.addf %77, %78 : vector<2x32xf32>
    %80 = vector.extract_strided_slice %63 {offsets = [0, 64], sizes = [2, 32], strides = [1, 1]} : vector<2x128xf32> to vector<2x32xf32>
    %81 = math.tanh %80 : vector<2x32xf32>
    %82 = vector.extract_strided_slice %63 {offsets = [0, 96], sizes = [2, 32], strides = [1, 1]} : vector<2x128xf32> to vector<2x32xf32>
    %cst_47 = arith.constant 5.000000e-01 : f32
    %83 = vector.broadcast %cst_47 : f32 to vector<2x32xf32>
    %84 = arith.mulf %83, %82 : vector<2x32xf32>
    %85 = math.tanh %84 : vector<2x32xf32>
    %cst_48 = arith.constant 5.000000e-01 : f32
    %86 = vector.broadcast %cst_48 : f32 to vector<2x32xf32>
    %87 = arith.mulf %86, %85 : vector<2x32xf32>
    %cst_49 = arith.constant 5.000000e-01 : f32
    %88 = vector.broadcast %cst_49 : f32 to vector<2x32xf32>
    %89 = arith.addf %87, %88 : vector<2x32xf32>
    %90 = arith.mulf %79, %22 : vector<2x32xf32>
    %91 = arith.mulf %71, %81 : vector<2x32xf32>
    %92 = arith.addf %90, %91 : vector<2x32xf32>
    %93 = math.tanh %92 : vector<2x32xf32>
    %94 = arith.mulf %89, %93 : vector<2x32xf32>
    %95 = arith.index_cast %c0_i32_23 : i32 to index
    %c0_50 = arith.constant 0 : index
    %c0_51 = arith.constant 0 : index
    %96 = vector.load %arg18[%95, %c0_50, %c0_51] : memref<8x2x32xf32, #tpu.memory_space<vmem>>, vector<1x2x32xf32>
    %97 = vector.shape_cast %96 : vector<1x2x32xf32> to vector<2x32xf32>
    %98 = vector.shape_cast %94 : vector<2x32xf32> to vector<1x2x32xf32>
    tpu.vector_store %arg18[%95, %c0_50, %c0_51], %98 {strides = array<i32>} : memref<8x2x32xf32, #tpu.memory_space<vmem>>, vector<1x2x32xf32>,
    %c1_i32 = arith.constant 1 : i32
    %99 = arith.index_cast %c1_i32 : i32 to index
    %c0_52 = arith.constant 0 : index
    %c0_53 = arith.constant 0 : index
    %100 = vector.load %arg17[%99, %c0_52, %c0_53] : memref<8x2x128xf32, #tpu.memory_space<vmem>>, vector<1x2x128xf32>
    %101 = vector.shape_cast %100 : vector<1x2x128xf32> to vector<2x128xf32>
    %c0_54 = arith.constant 0 : index
    %c0_55 = arith.constant 0 : index
    %102 = vector.load %arg4[%c0_54, %c0_55] : memref<32x128xf32, #tpu.memory_space<vmem>>, vector<32x128xf32>
    %cst_56 = arith.constant dense<0.000000e+00> : vector<2x128xf32>
    %103 = tpu.matmul %59, %102, %cst_56 {dimension_numbers = #tpu.dot_dimension_numbers<[1], [0], [0], [1], [0, 0, 1, 1], [], []>} : vector<2x32xf32>, vector<32x128xf32>, vector<2x128xf32> -> vector<2x128xf32>
    %104 = arith.addf %101, %103 : vector<2x128xf32>
    %105 = vector.extract_strided_slice %104 {offsets = [0, 0], sizes = [2, 32], strides = [1, 1]} : vector<2x128xf32> to vector<2x32xf32>
    %cst_57 = arith.constant 5.000000e-01 : f32
    %106 = vector.broadcast %cst_57 : f32 to vector<2x32xf32>
    %107 = arith.mulf %106, %105 : vector<2x32xf32>
    %108 = math.tanh %107 : vector<2x32xf32>
    %cst_58 = arith.constant 5.000000e-01 : f32
    %109 = vector.broadcast %cst_58 : f32 to vector<2x32xf32>
    %110 = arith.mulf %109, %108 : vector<2x32xf32>
    %cst_59 = arith.constant 5.000000e-01 : f32
    %111 = vector.broadcast %cst_59 : f32 to vector<2x32xf32>
    %112 = arith.addf %110, %111 : vector<2x32xf32>
    %113 = vector.extract_strided_slice %104 {offsets = [0, 32], sizes = [2, 32], strides = [1, 1]} : vector<2x128xf32> to vector<2x32xf32>
    %cst_60 = arith.constant 5.000000e-01 : f32
    %114 = vector.broadcast %cst_60 : f32 to vector<2x32xf32>
    %115 = arith.mulf %114, %113 : vector<2x32xf32>
    %116 = math.tanh %115 : vector<2x32xf32>
    %cst_61 = arith.constant 5.000000e-01 : f32
    %117 = vector.broadcast %cst_61 : f32 to vector<2x32xf32>
    %118 = arith.mulf %117, %116 : vector<2x32xf32>
    %cst_62 = arith.constant 5.000000e-01 : f32
    %119 = vector.broadcast %cst_62 : f32 to vector<2x32xf32>
    %120 = arith.addf %118, %119 : vector<2x32xf32>
    %121 = vector.extract_strided_slice %104 {offsets = [0, 64], sizes = [2, 32], strides = [1, 1]} : vector<2x128xf32> to vector<2x32xf32>
    %122 = math.tanh %121 : vector<2x32xf32>
    %123 = vector.extract_strided_slice %104 {offsets = [0, 96], sizes = [2, 32], strides = [1, 1]} : vector<2x128xf32> to vector<2x32xf32>
    %cst_63 = arith.constant 5.000000e-01 : f32
    %124 = vector.broadcast %cst_63 : f32 to vector<2x32xf32>
    %125 = arith.mulf %124, %123 : vector<2x32xf32>
    %126 = math.tanh %125 : vector<2x32xf32>
    %cst_64 = arith.constant 5.000000e-01 : f32
    %127 = vector.broadcast %cst_64 : f32 to vector<2x32xf32>
    %128 = arith.mulf %127, %126 : vector<2x32xf32>
    %cst_65 = arith.constant 5.000000e-01 : f32
    %129 = vector.broadcast %cst_65 : f32 to vector<2x32xf32>
    %130 = arith.addf %128, %129 : vector<2x32xf32>
    %131 = arith.mulf %120, %57 : vector<2x32xf32>
    %132 = arith.mulf %112, %122 : vector<2x32xf32>
    %133 = arith.addf %131, %132 : vector<2x32xf32>
    %134 = math.tanh %133 : vector<2x32xf32>
    %135 = arith.mulf %130, %134 : vector<2x32xf32>
    %136 = tpu.concatenate %135, %94 in 1 : vector<2x32xf32>, vector<2x32xf32> -> vector<2x64xf32>
    %c0_66 = arith.constant 0 : index
    %c0_67 = arith.constant 0 : index
    %137 = vector.load %arg5[%c0_66, %c0_67] : memref<64x128xf32, #tpu.memory_space<vmem>>, vector<64x128xf32>
    %cst_68 = arith.constant dense<0.000000e+00> : vector<2x128xf32>
    %138 = tpu.matmul %136, %137, %cst_68 {dimension_numbers = #tpu.dot_dimension_numbers<[1], [0], [0], [1], [0, 0, 1, 1], [], []>} : vector<2x64xf32>, vector<64x128xf32>, vector<2x128xf32> -> vector<2x128xf32>
    %139 = arith.addf %138, %14 : vector<2x128xf32>
    %140 = vector.extract_strided_slice %139 {offsets = [0, 0], sizes = [2, 32], strides = [1, 1]} : vector<2x128xf32> to vector<2x32xf32>
    %cst_69 = arith.constant 5.000000e-01 : f32
    %141 = vector.broadcast %cst_69 : f32 to vector<2x32xf32>
    %142 = arith.mulf %141, %140 : vector<2x32xf32>
    %143 = math.tanh %142 : vector<2x32xf32>
    %cst_70 = arith.constant 5.000000e-01 : f32
    %144 = vector.broadcast %cst_70 : f32 to vector<2x32xf32>
    %145 = arith.mulf %144, %143 : vector<2x32xf32>
    %cst_71 = arith.constant 5.000000e-01 : f32
    %146 = vector.broadcast %cst_71 : f32 to vector<2x32xf32>
    %147 = arith.addf %145, %146 : vector<2x32xf32>
    %148 = vector.extract_strided_slice %139 {offsets = [0, 32], sizes = [2, 32], strides = [1, 1]} : vector<2x128xf32> to vector<2x32xf32>
    %cst_72 = arith.constant 5.000000e-01 : f32
    %149 = vector.broadcast %cst_72 : f32 to vector<2x32xf32>
    %150 = arith.mulf %149, %148 : vector<2x32xf32>
    %151 = math.tanh %150 : vector<2x32xf32>
    %cst_73 = arith.constant 5.000000e-01 : f32
    %152 = vector.broadcast %cst_73 : f32 to vector<2x32xf32>
    %153 = arith.mulf %152, %151 : vector<2x32xf32>
    %cst_74 = arith.constant 5.000000e-01 : f32
    %154 = vector.broadcast %cst_74 : f32 to vector<2x32xf32>
    %155 = arith.addf %153, %154 : vector<2x32xf32>
    %156 = vector.extract_strided_slice %139 {offsets = [0, 64], sizes = [2, 32], strides = [1, 1]} : vector<2x128xf32> to vector<2x32xf32>
    %157 = math.tanh %156 : vector<2x32xf32>
    %158 = vector.extract_strided_slice %139 {offsets = [0, 96], sizes = [2, 32], strides = [1, 1]} : vector<2x128xf32> to vector<2x32xf32>
    %cst_75 = arith.constant 5.000000e-01 : f32
    %159 = vector.broadcast %cst_75 : f32 to vector<2x32xf32>
    %160 = arith.mulf %159, %158 : vector<2x32xf32>
    %161 = math.tanh %160 : vector<2x32xf32>
    %cst_76 = arith.constant 5.000000e-01 : f32
    %162 = vector.broadcast %cst_76 : f32 to vector<2x32xf32>
    %163 = arith.mulf %162, %161 : vector<2x32xf32>
    %cst_77 = arith.constant 5.000000e-01 : f32
    %164 = vector.broadcast %cst_77 : f32 to vector<2x32xf32>
    %165 = arith.addf %163, %164 : vector<2x32xf32>
    %166 = arith.mulf %155, %92 : vector<2x32xf32>
    %167 = arith.mulf %147, %157 : vector<2x32xf32>
    %168 = arith.addf %166, %167 : vector<2x32xf32>
    %169 = math.tanh %168 : vector<2x32xf32>
    %170 = arith.mulf %165, %169 : vector<2x32xf32>
    %171 = arith.index_cast %c1_i32 : i32 to index
    %c0_78 = arith.constant 0 : index
    %c0_79 = arith.constant 0 : index
    %172 = vector.load %arg18[%171, %c0_78, %c0_79] : memref<8x2x32xf32, #tpu.memory_space<vmem>>, vector<1x2x32xf32>
    %173 = vector.shape_cast %172 : vector<1x2x32xf32> to vector<2x32xf32>
    %174 = vector.shape_cast %170 : vector<2x32xf32> to vector<1x2x32xf32>
    tpu.vector_store %arg18[%171, %c0_78, %c0_79], %174 {strides = array<i32>} : memref<8x2x32xf32, #tpu.memory_space<vmem>>, vector<1x2x32xf32>,
    %c2_i32 = arith.constant 2 : i32
    %175 = arith.index_cast %c2_i32 : i32 to index
    %c0_80 = arith.constant 0 : index
    %c0_81 = arith.constant 0 : index
    %176 = vector.load %arg17[%175, %c0_80, %c0_81] : memref<8x2x128xf32, #tpu.memory_space<vmem>>, vector<1x2x128xf32>
    %177 = vector.shape_cast %176 : vector<1x2x128xf32> to vector<2x128xf32>
    %c0_82 = arith.constant 0 : index
    %c0_83 = arith.constant 0 : index
    %178 = vector.load %arg4[%c0_82, %c0_83] : memref<32x128xf32, #tpu.memory_space<vmem>>, vector<32x128xf32>
    %cst_84 = arith.constant dense<0.000000e+00> : vector<2x128xf32>
    %179 = tpu.matmul %135, %178, %cst_84 {dimension_numbers = #tpu.dot_dimension_numbers<[1], [0], [0], [1], [0, 0, 1, 1], [], []>} : vector<2x32xf32>, vector<32x128xf32>, vector<2x128xf32> -> vector<2x128xf32>
    %180 = arith.addf %177, %179 : vector<2x128xf32>
    %181 = vector.extract_strided_slice %180 {offsets = [0, 0], sizes = [2, 32], strides = [1, 1]} : vector<2x128xf32> to vector<2x32xf32>
    %cst_85 = arith.constant 5.000000e-01 : f32
    %182 = vector.broadcast %cst_85 : f32 to vector<2x32xf32>
    %183 = arith.mulf %182, %181 : vector<2x32xf32>
    %184 = math.tanh %183 : vector<2x32xf32>
    %cst_86 = arith.constant 5.000000e-01 : f32
    %185 = vector.broadcast %cst_86 : f32 to vector<2x32xf32>
    %186 = arith.mulf %185, %184 : vector<2x32xf32>
    %cst_87 = arith.constant 5.000000e-01 : f32
    %187 = vector.broadcast %cst_87 : f32 to vector<2x32xf32>
    %188 = arith.addf %186, %187 : vector<2x32xf32>
    %189 = vector.extract_strided_slice %180 {offsets = [0, 32], sizes = [2, 32], strides = [1, 1]} : vector<2x128xf32> to vector<2x32xf32>
    %cst_88 = arith.constant 5.000000e-01 : f32
    %190 = vector.broadcast %cst_88 : f32 to vector<2x32xf32>
    %191 = arith.mulf %190, %189 : vector<2x32xf32>
    %192 = math.tanh %191 : vector<2x32xf32>
    %cst_89 = arith.constant 5.000000e-01 : f32
    %193 = vector.broadcast %cst_89 : f32 to vector<2x32xf32>
    %194 = arith.mulf %193, %192 : vector<2x32xf32>
    %cst_90 = arith.constant 5.000000e-01 : f32
    %195 = vector.broadcast %cst_90 : f32 to vector<2x32xf32>
    %196 = arith.addf %194, %195 : vector<2x32xf32>
    %197 = vector.extract_strided_slice %180 {offsets = [0, 64], sizes = [2, 32], strides = [1, 1]} : vector<2x128xf32> to vector<2x32xf32>
    %198 = math.tanh %197 : vector<2x32xf32>
    %199 = vector.extract_strided_slice %180 {offsets = [0, 96], sizes = [2, 32], strides = [1, 1]} : vector<2x128xf32> to vector<2x32xf32>
    %cst_91 = arith.constant 5.000000e-01 : f32
    %200 = vector.broadcast %cst_91 : f32 to vector<2x32xf32>
    %201 = arith.mulf %200, %199 : vector<2x32xf32>
    %202 = math.tanh %201 : vector<2x32xf32>
    %cst_92 = arith.constant 5.000000e-01 : f32
    %203 = vector.broadcast %cst_92 : f32 to vector<2x32xf32>
    %204 = arith.mulf %203, %202 : vector<2x32xf32>
    %cst_93 = arith.constant 5.000000e-01 : f32
    %205 = vector.broadcast %cst_93 : f32 to vector<2x32xf32>
    %206 = arith.addf %204, %205 : vector<2x32xf32>
    %207 = arith.mulf %196, %133 : vector<2x32xf32>
    %208 = arith.mulf %188, %198 : vector<2x32xf32>
    %209 = arith.addf %207, %208 : vector<2x32xf32>
    %210 = math.tanh %209 : vector<2x32xf32>
    %211 = arith.mulf %206, %210 : vector<2x32xf32>
    %212 = tpu.concatenate %211, %170 in 1 : vector<2x32xf32>, vector<2x32xf32> -> vector<2x64xf32>
    %c0_94 = arith.constant 0 : index
    %c0_95 = arith.constant 0 : index
    %213 = vector.load %arg5[%c0_94, %c0_95] : memref<64x128xf32, #tpu.memory_space<vmem>>, vector<64x128xf32>
    %cst_96 = arith.constant dense<0.000000e+00> : vector<2x128xf32>
    %214 = tpu.matmul %212, %213, %cst_96 {dimension_numbers = #tpu.dot_dimension_numbers<[1], [0], [0], [1], [0, 0, 1, 1], [], []>} : vector<2x64xf32>, vector<64x128xf32>, vector<2x128xf32> -> vector<2x128xf32>
    %215 = arith.addf %214, %14 : vector<2x128xf32>
    %216 = vector.extract_strided_slice %215 {offsets = [0, 0], sizes = [2, 32], strides = [1, 1]} : vector<2x128xf32> to vector<2x32xf32>
    %cst_97 = arith.constant 5.000000e-01 : f32
    %217 = vector.broadcast %cst_97 : f32 to vector<2x32xf32>
    %218 = arith.mulf %217, %216 : vector<2x32xf32>
    %219 = math.tanh %218 : vector<2x32xf32>
    %cst_98 = arith.constant 5.000000e-01 : f32
    %220 = vector.broadcast %cst_98 : f32 to vector<2x32xf32>
    %221 = arith.mulf %220, %219 : vector<2x32xf32>
    %cst_99 = arith.constant 5.000000e-01 : f32
    %222 = vector.broadcast %cst_99 : f32 to vector<2x32xf32>
    %223 = arith.addf %221, %222 : vector<2x32xf32>
    %224 = vector.extract_strided_slice %215 {offsets = [0, 32], sizes = [2, 32], strides = [1, 1]} : vector<2x128xf32> to vector<2x32xf32>
    %cst_100 = arith.constant 5.000000e-01 : f32
    %225 = vector.broadcast %cst_100 : f32 to vector<2x32xf32>
    %226 = arith.mulf %225, %224 : vector<2x32xf32>
    %227 = math.tanh %226 : vector<2x32xf32>
    %cst_101 = arith.constant 5.000000e-01 : f32
    %228 = vector.broadcast %cst_101 : f32 to vector<2x32xf32>
    %229 = arith.mulf %228, %227 : vector<2x32xf32>
    %cst_102 = arith.constant 5.000000e-01 : f32
    %230 = vector.broadcast %cst_102 : f32 to vector<2x32xf32>
    %231 = arith.addf %229, %230 : vector<2x32xf32>
    %232 = vector.extract_strided_slice %215 {offsets = [0, 64], sizes = [2, 32], strides = [1, 1]} : vector<2x128xf32> to vector<2x32xf32>
    %233 = math.tanh %232 : vector<2x32xf32>
    %234 = vector.extract_strided_slice %215 {offsets = [0, 96], sizes = [2, 32], strides = [1, 1]} : vector<2x128xf32> to vector<2x32xf32>
    %cst_103 = arith.constant 5.000000e-01 : f32
    %235 = vector.broadcast %cst_103 : f32 to vector<2x32xf32>
    %236 = arith.mulf %235, %234 : vector<2x32xf32>
    %237 = math.tanh %236 : vector<2x32xf32>
    %cst_104 = arith.constant 5.000000e-01 : f32
    %238 = vector.broadcast %cst_104 : f32 to vector<2x32xf32>
    %239 = arith.mulf %238, %237 : vector<2x32xf32>
    %cst_105 = arith.constant 5.000000e-01 : f32
    %240 = vector.broadcast %cst_105 : f32 to vector<2x32xf32>
    %241 = arith.addf %239, %240 : vector<2x32xf32>
    %242 = arith.mulf %231, %168 : vector<2x32xf32>
    %243 = arith.mulf %223, %233 : vector<2x32xf32>
    %244 = arith.addf %242, %243 : vector<2x32xf32>
    %245 = math.tanh %244 : vector<2x32xf32>
    %246 = arith.mulf %241, %245 : vector<2x32xf32>
    %247 = arith.index_cast %c2_i32 : i32 to index
    %c0_106 = arith.constant 0 : index
    %c0_107 = arith.constant 0 : index
    %248 = vector.load %arg18[%247, %c0_106, %c0_107] : memref<8x2x32xf32, #tpu.memory_space<vmem>>, vector<1x2x32xf32>
    %249 = vector.shape_cast %248 : vector<1x2x32xf32> to vector<2x32xf32>
    %250 = vector.shape_cast %246 : vector<2x32xf32> to vector<1x2x32xf32>
    tpu.vector_store %arg18[%247, %c0_106, %c0_107], %250 {strides = array<i32>} : memref<8x2x32xf32, #tpu.memory_space<vmem>>, vector<1x2x32xf32>,
    %c3_i32 = arith.constant 3 : i32
    %251 = arith.index_cast %c3_i32 : i32 to index
    %c0_108 = arith.constant 0 : index
    %c0_109 = arith.constant 0 : index
    %252 = vector.load %arg17[%251, %c0_108, %c0_109] : memref<8x2x128xf32, #tpu.memory_space<vmem>>, vector<1x2x128xf32>
    %253 = vector.shape_cast %252 : vector<1x2x128xf32> to vector<2x128xf32>
    %c0_110 = arith.constant 0 : index
    %c0_111 = arith.constant 0 : index
    %254 = vector.load %arg4[%c0_110, %c0_111] : memref<32x128xf32, #tpu.memory_space<vmem>>, vector<32x128xf32>
    %cst_112 = arith.constant dense<0.000000e+00> : vector<2x128xf32>
    %255 = tpu.matmul %211, %254, %cst_112 {dimension_numbers = #tpu.dot_dimension_numbers<[1], [0], [0], [1], [0, 0, 1, 1], [], []>} : vector<2x32xf32>, vector<32x128xf32>, vector<2x128xf32> -> vector<2x128xf32>
    %256 = arith.addf %253, %255 : vector<2x128xf32>
    %257 = vector.extract_strided_slice %256 {offsets = [0, 0], sizes = [2, 32], strides = [1, 1]} : vector<2x128xf32> to vector<2x32xf32>
    %cst_113 = arith.constant 5.000000e-01 : f32
    %258 = vector.broadcast %cst_113 : f32 to vector<2x32xf32>
    %259 = arith.mulf %258, %257 : vector<2x32xf32>
    %260 = math.tanh %259 : vector<2x32xf32>
    %cst_114 = arith.constant 5.000000e-01 : f32
    %261 = vector.broadcast %cst_114 : f32 to vector<2x32xf32>
    %262 = arith.mulf %261, %260 : vector<2x32xf32>
    %cst_115 = arith.constant 5.000000e-01 : f32
    %263 = vector.broadcast %cst_115 : f32 to vector<2x32xf32>
    %264 = arith.addf %262, %263 : vector<2x32xf32>
    %265 = vector.extract_strided_slice %256 {offsets = [0, 32], sizes = [2, 32], strides = [1, 1]} : vector<2x128xf32> to vector<2x32xf32>
    %cst_116 = arith.constant 5.000000e-01 : f32
    %266 = vector.broadcast %cst_116 : f32 to vector<2x32xf32>
    %267 = arith.mulf %266, %265 : vector<2x32xf32>
    %268 = math.tanh %267 : vector<2x32xf32>
    %cst_117 = arith.constant 5.000000e-01 : f32
    %269 = vector.broadcast %cst_117 : f32 to vector<2x32xf32>
    %270 = arith.mulf %269, %268 : vector<2x32xf32>
    %cst_118 = arith.constant 5.000000e-01 : f32
    %271 = vector.broadcast %cst_118 : f32 to vector<2x32xf32>
    %272 = arith.addf %270, %271 : vector<2x32xf32>
    %273 = vector.extract_strided_slice %256 {offsets = [0, 64], sizes = [2, 32], strides = [1, 1]} : vector<2x128xf32> to vector<2x32xf32>
    %274 = math.tanh %273 : vector<2x32xf32>
    %275 = vector.extract_strided_slice %256 {offsets = [0, 96], sizes = [2, 32], strides = [1, 1]} : vector<2x128xf32> to vector<2x32xf32>
    %cst_119 = arith.constant 5.000000e-01 : f32
    %276 = vector.broadcast %cst_119 : f32 to vector<2x32xf32>
    %277 = arith.mulf %276, %275 : vector<2x32xf32>
    %278 = math.tanh %277 : vector<2x32xf32>
    %cst_120 = arith.constant 5.000000e-01 : f32
    %279 = vector.broadcast %cst_120 : f32 to vector<2x32xf32>
    %280 = arith.mulf %279, %278 : vector<2x32xf32>
    %cst_121 = arith.constant 5.000000e-01 : f32
    %281 = vector.broadcast %cst_121 : f32 to vector<2x32xf32>
    %282 = arith.addf %280, %281 : vector<2x32xf32>
    %283 = arith.mulf %272, %209 : vector<2x32xf32>
    %284 = arith.mulf %264, %274 : vector<2x32xf32>
    %285 = arith.addf %283, %284 : vector<2x32xf32>
    %286 = math.tanh %285 : vector<2x32xf32>
    %287 = arith.mulf %282, %286 : vector<2x32xf32>
    %288 = tpu.concatenate %287, %246 in 1 : vector<2x32xf32>, vector<2x32xf32> -> vector<2x64xf32>
    %c0_122 = arith.constant 0 : index
    %c0_123 = arith.constant 0 : index
    %289 = vector.load %arg5[%c0_122, %c0_123] : memref<64x128xf32, #tpu.memory_space<vmem>>, vector<64x128xf32>
    %cst_124 = arith.constant dense<0.000000e+00> : vector<2x128xf32>
    %290 = tpu.matmul %288, %289, %cst_124 {dimension_numbers = #tpu.dot_dimension_numbers<[1], [0], [0], [1], [0, 0, 1, 1], [], []>} : vector<2x64xf32>, vector<64x128xf32>, vector<2x128xf32> -> vector<2x128xf32>
    %291 = arith.addf %290, %14 : vector<2x128xf32>
    %292 = vector.extract_strided_slice %291 {offsets = [0, 0], sizes = [2, 32], strides = [1, 1]} : vector<2x128xf32> to vector<2x32xf32>
    %cst_125 = arith.constant 5.000000e-01 : f32
    %293 = vector.broadcast %cst_125 : f32 to vector<2x32xf32>
    %294 = arith.mulf %293, %292 : vector<2x32xf32>
    %295 = math.tanh %294 : vector<2x32xf32>
    %cst_126 = arith.constant 5.000000e-01 : f32
    %296 = vector.broadcast %cst_126 : f32 to vector<2x32xf32>
    %297 = arith.mulf %296, %295 : vector<2x32xf32>
    %cst_127 = arith.constant 5.000000e-01 : f32
    %298 = vector.broadcast %cst_127 : f32 to vector<2x32xf32>
    %299 = arith.addf %297, %298 : vector<2x32xf32>
    %300 = vector.extract_strided_slice %291 {offsets = [0, 32], sizes = [2, 32], strides = [1, 1]} : vector<2x128xf32> to vector<2x32xf32>
    %cst_128 = arith.constant 5.000000e-01 : f32
    %301 = vector.broadcast %cst_128 : f32 to vector<2x32xf32>
    %302 = arith.mulf %301, %300 : vector<2x32xf32>
    %303 = math.tanh %302 : vector<2x32xf32>
    %cst_129 = arith.constant 5.000000e-01 : f32
    %304 = vector.broadcast %cst_129 : f32 to vector<2x32xf32>
    %305 = arith.mulf %304, %303 : vector<2x32xf32>
    %cst_130 = arith.constant 5.000000e-01 : f32
    %306 = vector.broadcast %cst_130 : f32 to vector<2x32xf32>
    %307 = arith.addf %305, %306 : vector<2x32xf32>
    %308 = vector.extract_strided_slice %291 {offsets = [0, 64], sizes = [2, 32], strides = [1, 1]} : vector<2x128xf32> to vector<2x32xf32>
    %309 = math.tanh %308 : vector<2x32xf32>
    %310 = vector.extract_strided_slice %291 {offsets = [0, 96], sizes = [2, 32], strides = [1, 1]} : vector<2x128xf32> to vector<2x32xf32>
    %cst_131 = arith.constant 5.000000e-01 : f32
    %311 = vector.broadcast %cst_131 : f32 to vector<2x32xf32>
    %312 = arith.mulf %311, %310 : vector<2x32xf32>
    %313 = math.tanh %312 : vector<2x32xf32>
    %cst_132 = arith.constant 5.000000e-01 : f32
    %314 = vector.broadcast %cst_132 : f32 to vector<2x32xf32>
    %315 = arith.mulf %314, %313 : vector<2x32xf32>
    %cst_133 = arith.constant 5.000000e-01 : f32
    %316 = vector.broadcast %cst_133 : f32 to vector<2x32xf32>
    %317 = arith.addf %315, %316 : vector<2x32xf32>
    %318 = arith.mulf %307, %244 : vector<2x32xf32>
    %319 = arith.mulf %299, %309 : vector<2x32xf32>
    %320 = arith.addf %318, %319 : vector<2x32xf32>
    %321 = math.tanh %320 : vector<2x32xf32>
    %322 = arith.mulf %317, %321 : vector<2x32xf32>
    %323 = arith.index_cast %c3_i32 : i32 to index
    %c0_134 = arith.constant 0 : index
    %c0_135 = arith.constant 0 : index
    %324 = vector.load %arg18[%323, %c0_134, %c0_135] : memref<8x2x32xf32, #tpu.memory_space<vmem>>, vector<1x2x32xf32>
    %325 = vector.shape_cast %324 : vector<1x2x32xf32> to vector<2x32xf32>
    %326 = vector.shape_cast %322 : vector<2x32xf32> to vector<1x2x32xf32>
    tpu.vector_store %arg18[%323, %c0_134, %c0_135], %326 {strides = array<i32>} : memref<8x2x32xf32, #tpu.memory_space<vmem>>, vector<1x2x32xf32>,
    %c4_i32 = arith.constant 4 : i32
    %327 = arith.index_cast %c4_i32 : i32 to index
    %c0_136 = arith.constant 0 : index
    %c0_137 = arith.constant 0 : index
    %328 = vector.load %arg17[%327, %c0_136, %c0_137] : memref<8x2x128xf32, #tpu.memory_space<vmem>>, vector<1x2x128xf32>
    %329 = vector.shape_cast %328 : vector<1x2x128xf32> to vector<2x128xf32>
    %c0_138 = arith.constant 0 : index
    %c0_139 = arith.constant 0 : index
    %330 = vector.load %arg4[%c0_138, %c0_139] : memref<32x128xf32, #tpu.memory_space<vmem>>, vector<32x128xf32>
    %cst_140 = arith.constant dense<0.000000e+00> : vector<2x128xf32>
    %331 = tpu.matmul %287, %330, %cst_140 {dimension_numbers = #tpu.dot_dimension_numbers<[1], [0], [0], [1], [0, 0, 1, 1], [], []>} : vector<2x32xf32>, vector<32x128xf32>, vector<2x128xf32> -> vector<2x128xf32>
    %332 = arith.addf %329, %331 : vector<2x128xf32>
    %333 = vector.extract_strided_slice %332 {offsets = [0, 0], sizes = [2, 32], strides = [1, 1]} : vector<2x128xf32> to vector<2x32xf32>
    %cst_141 = arith.constant 5.000000e-01 : f32
    %334 = vector.broadcast %cst_141 : f32 to vector<2x32xf32>
    %335 = arith.mulf %334, %333 : vector<2x32xf32>
    %336 = math.tanh %335 : vector<2x32xf32>
    %cst_142 = arith.constant 5.000000e-01 : f32
    %337 = vector.broadcast %cst_142 : f32 to vector<2x32xf32>
    %338 = arith.mulf %337, %336 : vector<2x32xf32>
    %cst_143 = arith.constant 5.000000e-01 : f32
    %339 = vector.broadcast %cst_143 : f32 to vector<2x32xf32>
    %340 = arith.addf %338, %339 : vector<2x32xf32>
    %341 = vector.extract_strided_slice %332 {offsets = [0, 32], sizes = [2, 32], strides = [1, 1]} : vector<2x128xf32> to vector<2x32xf32>
    %cst_144 = arith.constant 5.000000e-01 : f32
    %342 = vector.broadcast %cst_144 : f32 to vector<2x32xf32>
    %343 = arith.mulf %342, %341 : vector<2x32xf32>
    %344 = math.tanh %343 : vector<2x32xf32>
    %cst_145 = arith.constant 5.000000e-01 : f32
    %345 = vector.broadcast %cst_145 : f32 to vector<2x32xf32>
    %346 = arith.mulf %345, %344 : vector<2x32xf32>
    %cst_146 = arith.constant 5.000000e-01 : f32
    %347 = vector.broadcast %cst_146 : f32 to vector<2x32xf32>
    %348 = arith.addf %346, %347 : vector<2x32xf32>
    %349 = vector.extract_strided_slice %332 {offsets = [0, 64], sizes = [2, 32], strides = [1, 1]} : vector<2x128xf32> to vector<2x32xf32>
    %350 = math.tanh %349 : vector<2x32xf32>
    %351 = vector.extract_strided_slice %332 {offsets = [0, 96], sizes = [2, 32], strides = [1, 1]} : vector<2x128xf32> to vector<2x32xf32>
    %cst_147 = arith.constant 5.000000e-01 : f32
    %352 = vector.broadcast %cst_147 : f32 to vector<2x32xf32>
    %353 = arith.mulf %352, %351 : vector<2x32xf32>
    %354 = math.tanh %353 : vector<2x32xf32>
    %cst_148 = arith.constant 5.000000e-01 : f32
    %355 = vector.broadcast %cst_148 : f32 to vector<2x32xf32>
    %356 = arith.mulf %355, %354 : vector<2x32xf32>
    %cst_149 = arith.constant 5.000000e-01 : f32
    %357 = vector.broadcast %cst_149 : f32 to vector<2x32xf32>
    %358 = arith.addf %356, %357 : vector<2x32xf32>
    %359 = arith.mulf %348, %285 : vector<2x32xf32>
    %360 = arith.mulf %340, %350 : vector<2x32xf32>
    %361 = arith.addf %359, %360 : vector<2x32xf32>
    %362 = math.tanh %361 : vector<2x32xf32>
    %363 = arith.mulf %358, %362 : vector<2x32xf32>
    %364 = tpu.concatenate %363, %322 in 1 : vector<2x32xf32>, vector<2x32xf32> -> vector<2x64xf32>
    %c0_150 = arith.constant 0 : index
    %c0_151 = arith.constant 0 : index
    %365 = vector.load %arg5[%c0_150, %c0_151] : memref<64x128xf32, #tpu.memory_space<vmem>>, vector<64x128xf32>
    %cst_152 = arith.constant dense<0.000000e+00> : vector<2x128xf32>
    %366 = tpu.matmul %364, %365, %cst_152 {dimension_numbers = #tpu.dot_dimension_numbers<[1], [0], [0], [1], [0, 0, 1, 1], [], []>} : vector<2x64xf32>, vector<64x128xf32>, vector<2x128xf32> -> vector<2x128xf32>
    %367 = arith.addf %366, %14 : vector<2x128xf32>
    %368 = vector.extract_strided_slice %367 {offsets = [0, 0], sizes = [2, 32], strides = [1, 1]} : vector<2x128xf32> to vector<2x32xf32>
    %cst_153 = arith.constant 5.000000e-01 : f32
    %369 = vector.broadcast %cst_153 : f32 to vector<2x32xf32>
    %370 = arith.mulf %369, %368 : vector<2x32xf32>
    %371 = math.tanh %370 : vector<2x32xf32>
    %cst_154 = arith.constant 5.000000e-01 : f32
    %372 = vector.broadcast %cst_154 : f32 to vector<2x32xf32>
    %373 = arith.mulf %372, %371 : vector<2x32xf32>
    %cst_155 = arith.constant 5.000000e-01 : f32
    %374 = vector.broadcast %cst_155 : f32 to vector<2x32xf32>
    %375 = arith.addf %373, %374 : vector<2x32xf32>
    %376 = vector.extract_strided_slice %367 {offsets = [0, 32], sizes = [2, 32], strides = [1, 1]} : vector<2x128xf32> to vector<2x32xf32>
    %cst_156 = arith.constant 5.000000e-01 : f32
    %377 = vector.broadcast %cst_156 : f32 to vector<2x32xf32>
    %378 = arith.mulf %377, %376 : vector<2x32xf32>
    %379 = math.tanh %378 : vector<2x32xf32>
    %cst_157 = arith.constant 5.000000e-01 : f32
    %380 = vector.broadcast %cst_157 : f32 to vector<2x32xf32>
    %381 = arith.mulf %380, %379 : vector<2x32xf32>
    %cst_158 = arith.constant 5.000000e-01 : f32
    %382 = vector.broadcast %cst_158 : f32 to vector<2x32xf32>
    %383 = arith.addf %381, %382 : vector<2x32xf32>
    %384 = vector.extract_strided_slice %367 {offsets = [0, 64], sizes = [2, 32], strides = [1, 1]} : vector<2x128xf32> to vector<2x32xf32>
    %385 = math.tanh %384 : vector<2x32xf32>
    %386 = vector.extract_strided_slice %367 {offsets = [0, 96], sizes = [2, 32], strides = [1, 1]} : vector<2x128xf32> to vector<2x32xf32>
    %cst_159 = arith.constant 5.000000e-01 : f32
    %387 = vector.broadcast %cst_159 : f32 to vector<2x32xf32>
    %388 = arith.mulf %387, %386 : vector<2x32xf32>
    %389 = math.tanh %388 : vector<2x32xf32>
    %cst_160 = arith.constant 5.000000e-01 : f32
    %390 = vector.broadcast %cst_160 : f32 to vector<2x32xf32>
    %391 = arith.mulf %390, %389 : vector<2x32xf32>
    %cst_161 = arith.constant 5.000000e-01 : f32
    %392 = vector.broadcast %cst_161 : f32 to vector<2x32xf32>
    %393 = arith.addf %391, %392 : vector<2x32xf32>
    %394 = arith.mulf %383, %320 : vector<2x32xf32>
    %395 = arith.mulf %375, %385 : vector<2x32xf32>
    %396 = arith.addf %394, %395 : vector<2x32xf32>
    %397 = math.tanh %396 : vector<2x32xf32>
    %398 = arith.mulf %393, %397 : vector<2x32xf32>
    %399 = arith.index_cast %c4_i32 : i32 to index
    %c0_162 = arith.constant 0 : index
    %c0_163 = arith.constant 0 : index
    %400 = vector.load %arg18[%399, %c0_162, %c0_163] : memref<8x2x32xf32, #tpu.memory_space<vmem>>, vector<1x2x32xf32>
    %401 = vector.shape_cast %400 : vector<1x2x32xf32> to vector<2x32xf32>
    %402 = vector.shape_cast %398 : vector<2x32xf32> to vector<1x2x32xf32>
    tpu.vector_store %arg18[%399, %c0_162, %c0_163], %402 {strides = array<i32>} : memref<8x2x32xf32, #tpu.memory_space<vmem>>, vector<1x2x32xf32>,
    %c5_i32 = arith.constant 5 : i32
    %403 = arith.index_cast %c5_i32 : i32 to index
    %c0_164 = arith.constant 0 : index
    %c0_165 = arith.constant 0 : index
    %404 = vector.load %arg17[%403, %c0_164, %c0_165] : memref<8x2x128xf32, #tpu.memory_space<vmem>>, vector<1x2x128xf32>
    %405 = vector.shape_cast %404 : vector<1x2x128xf32> to vector<2x128xf32>
    %c0_166 = arith.constant 0 : index
    %c0_167 = arith.constant 0 : index
    %406 = vector.load %arg4[%c0_166, %c0_167] : memref<32x128xf32, #tpu.memory_space<vmem>>, vector<32x128xf32>
    %cst_168 = arith.constant dense<0.000000e+00> : vector<2x128xf32>
    %407 = tpu.matmul %363, %406, %cst_168 {dimension_numbers = #tpu.dot_dimension_numbers<[1], [0], [0], [1], [0, 0, 1, 1], [], []>} : vector<2x32xf32>, vector<32x128xf32>, vector<2x128xf32> -> vector<2x128xf32>
    %408 = arith.addf %405, %407 : vector<2x128xf32>
    %409 = vector.extract_strided_slice %408 {offsets = [0, 0], sizes = [2, 32], strides = [1, 1]} : vector<2x128xf32> to vector<2x32xf32>
    %cst_169 = arith.constant 5.000000e-01 : f32
    %410 = vector.broadcast %cst_169 : f32 to vector<2x32xf32>
    %411 = arith.mulf %410, %409 : vector<2x32xf32>
    %412 = math.tanh %411 : vector<2x32xf32>
    %cst_170 = arith.constant 5.000000e-01 : f32
    %413 = vector.broadcast %cst_170 : f32 to vector<2x32xf32>
    %414 = arith.mulf %413, %412 : vector<2x32xf32>
    %cst_171 = arith.constant 5.000000e-01 : f32
    %415 = vector.broadcast %cst_171 : f32 to vector<2x32xf32>
    %416 = arith.addf %414, %415 : vector<2x32xf32>
    %417 = vector.extract_strided_slice %408 {offsets = [0, 32], sizes = [2, 32], strides = [1, 1]} : vector<2x128xf32> to vector<2x32xf32>
    %cst_172 = arith.constant 5.000000e-01 : f32
    %418 = vector.broadcast %cst_172 : f32 to vector<2x32xf32>
    %419 = arith.mulf %418, %417 : vector<2x32xf32>
    %420 = math.tanh %419 : vector<2x32xf32>
    %cst_173 = arith.constant 5.000000e-01 : f32
    %421 = vector.broadcast %cst_173 : f32 to vector<2x32xf32>
    %422 = arith.mulf %421, %420 : vector<2x32xf32>
    %cst_174 = arith.constant 5.000000e-01 : f32
    %423 = vector.broadcast %cst_174 : f32 to vector<2x32xf32>
    %424 = arith.addf %422, %423 : vector<2x32xf32>
    %425 = vector.extract_strided_slice %408 {offsets = [0, 64], sizes = [2, 32], strides = [1, 1]} : vector<2x128xf32> to vector<2x32xf32>
    %426 = math.tanh %425 : vector<2x32xf32>
    %427 = vector.extract_strided_slice %408 {offsets = [0, 96], sizes = [2, 32], strides = [1, 1]} : vector<2x128xf32> to vector<2x32xf32>
    %cst_175 = arith.constant 5.000000e-01 : f32
    %428 = vector.broadcast %cst_175 : f32 to vector<2x32xf32>
    %429 = arith.mulf %428, %427 : vector<2x32xf32>
    %430 = math.tanh %429 : vector<2x32xf32>
    %cst_176 = arith.constant 5.000000e-01 : f32
    %431 = vector.broadcast %cst_176 : f32 to vector<2x32xf32>
    %432 = arith.mulf %431, %430 : vector<2x32xf32>
    %cst_177 = arith.constant 5.000000e-01 : f32
    %433 = vector.broadcast %cst_177 : f32 to vector<2x32xf32>
    %434 = arith.addf %432, %433 : vector<2x32xf32>
    %435 = arith.mulf %424, %361 : vector<2x32xf32>
    %436 = arith.mulf %416, %426 : vector<2x32xf32>
    %437 = arith.addf %435, %436 : vector<2x32xf32>
    %438 = math.tanh %437 : vector<2x32xf32>
    %439 = arith.mulf %434, %438 : vector<2x32xf32>
    %440 = tpu.concatenate %439, %398 in 1 : vector<2x32xf32>, vector<2x32xf32> -> vector<2x64xf32>
    %c0_178 = arith.constant 0 : index
    %c0_179 = arith.constant 0 : index
    %441 = vector.load %arg5[%c0_178, %c0_179] : memref<64x128xf32, #tpu.memory_space<vmem>>, vector<64x128xf32>
    %cst_180 = arith.constant dense<0.000000e+00> : vector<2x128xf32>
    %442 = tpu.matmul %440, %441, %cst_180 {dimension_numbers = #tpu.dot_dimension_numbers<[1], [0], [0], [1], [0, 0, 1, 1], [], []>} : vector<2x64xf32>, vector<64x128xf32>, vector<2x128xf32> -> vector<2x128xf32>
    %443 = arith.addf %442, %14 : vector<2x128xf32>
    %444 = vector.extract_strided_slice %443 {offsets = [0, 0], sizes = [2, 32], strides = [1, 1]} : vector<2x128xf32> to vector<2x32xf32>
    %cst_181 = arith.constant 5.000000e-01 : f32
    %445 = vector.broadcast %cst_181 : f32 to vector<2x32xf32>
    %446 = arith.mulf %445, %444 : vector<2x32xf32>
    %447 = math.tanh %446 : vector<2x32xf32>
    %cst_182 = arith.constant 5.000000e-01 : f32
    %448 = vector.broadcast %cst_182 : f32 to vector<2x32xf32>
    %449 = arith.mulf %448, %447 : vector<2x32xf32>
    %cst_183 = arith.constant 5.000000e-01 : f32
    %450 = vector.broadcast %cst_183 : f32 to vector<2x32xf32>
    %451 = arith.addf %449, %450 : vector<2x32xf32>
    %452 = vector.extract_strided_slice %443 {offsets = [0, 32], sizes = [2, 32], strides = [1, 1]} : vector<2x128xf32> to vector<2x32xf32>
    %cst_184 = arith.constant 5.000000e-01 : f32
    %453 = vector.broadcast %cst_184 : f32 to vector<2x32xf32>
    %454 = arith.mulf %453, %452 : vector<2x32xf32>
    %455 = math.tanh %454 : vector<2x32xf32>
    %cst_185 = arith.constant 5.000000e-01 : f32
    %456 = vector.broadcast %cst_185 : f32 to vector<2x32xf32>
    %457 = arith.mulf %456, %455 : vector<2x32xf32>
    %cst_186 = arith.constant 5.000000e-01 : f32
    %458 = vector.broadcast %cst_186 : f32 to vector<2x32xf32>
    %459 = arith.addf %457, %458 : vector<2x32xf32>
    %460 = vector.extract_strided_slice %443 {offsets = [0, 64], sizes = [2, 32], strides = [1, 1]} : vector<2x128xf32> to vector<2x32xf32>
    %461 = math.tanh %460 : vector<2x32xf32>
    %462 = vector.extract_strided_slice %443 {offsets = [0, 96], sizes = [2, 32], strides = [1, 1]} : vector<2x128xf32> to vector<2x32xf32>
    %cst_187 = arith.constant 5.000000e-01 : f32
    %463 = vector.broadcast %cst_187 : f32 to vector<2x32xf32>
    %464 = arith.mulf %463, %462 : vector<2x32xf32>
    %465 = math.tanh %464 : vector<2x32xf32>
    %cst_188 = arith.constant 5.000000e-01 : f32
    %466 = vector.broadcast %cst_188 : f32 to vector<2x32xf32>
    %467 = arith.mulf %466, %465 : vector<2x32xf32>
    %cst_189 = arith.constant 5.000000e-01 : f32
    %468 = vector.broadcast %cst_189 : f32 to vector<2x32xf32>
    %469 = arith.addf %467, %468 : vector<2x32xf32>
    %470 = arith.mulf %459, %396 : vector<2x32xf32>
    %471 = arith.mulf %451, %461 : vector<2x32xf32>
    %472 = arith.addf %470, %471 : vector<2x32xf32>
    %473 = math.tanh %472 : vector<2x32xf32>
    %474 = arith.mulf %469, %473 : vector<2x32xf32>
    %475 = arith.index_cast %c5_i32 : i32 to index
    %c0_190 = arith.constant 0 : index
    %c0_191 = arith.constant 0 : index
    %476 = vector.load %arg18[%475, %c0_190, %c0_191] : memref<8x2x32xf32, #tpu.memory_space<vmem>>, vector<1x2x32xf32>
    %477 = vector.shape_cast %476 : vector<1x2x32xf32> to vector<2x32xf32>
    %478 = vector.shape_cast %474 : vector<2x32xf32> to vector<1x2x32xf32>
    tpu.vector_store %arg18[%475, %c0_190, %c0_191], %478 {strides = array<i32>} : memref<8x2x32xf32, #tpu.memory_space<vmem>>, vector<1x2x32xf32>,
    %c6_i32 = arith.constant 6 : i32
    %479 = arith.index_cast %c6_i32 : i32 to index
    %c0_192 = arith.constant 0 : index
    %c0_193 = arith.constant 0 : index
    %480 = vector.load %arg17[%479, %c0_192, %c0_193] : memref<8x2x128xf32, #tpu.memory_space<vmem>>, vector<1x2x128xf32>
    %481 = vector.shape_cast %480 : vector<1x2x128xf32> to vector<2x128xf32>
    %c0_194 = arith.constant 0 : index
    %c0_195 = arith.constant 0 : index
    %482 = vector.load %arg4[%c0_194, %c0_195] : memref<32x128xf32, #tpu.memory_space<vmem>>, vector<32x128xf32>
    %cst_196 = arith.constant dense<0.000000e+00> : vector<2x128xf32>
    %483 = tpu.matmul %439, %482, %cst_196 {dimension_numbers = #tpu.dot_dimension_numbers<[1], [0], [0], [1], [0, 0, 1, 1], [], []>} : vector<2x32xf32>, vector<32x128xf32>, vector<2x128xf32> -> vector<2x128xf32>
    %484 = arith.addf %481, %483 : vector<2x128xf32>
    %485 = vector.extract_strided_slice %484 {offsets = [0, 0], sizes = [2, 32], strides = [1, 1]} : vector<2x128xf32> to vector<2x32xf32>
    %cst_197 = arith.constant 5.000000e-01 : f32
    %486 = vector.broadcast %cst_197 : f32 to vector<2x32xf32>
    %487 = arith.mulf %486, %485 : vector<2x32xf32>
    %488 = math.tanh %487 : vector<2x32xf32>
    %cst_198 = arith.constant 5.000000e-01 : f32
    %489 = vector.broadcast %cst_198 : f32 to vector<2x32xf32>
    %490 = arith.mulf %489, %488 : vector<2x32xf32>
    %cst_199 = arith.constant 5.000000e-01 : f32
    %491 = vector.broadcast %cst_199 : f32 to vector<2x32xf32>
    %492 = arith.addf %490, %491 : vector<2x32xf32>
    %493 = vector.extract_strided_slice %484 {offsets = [0, 32], sizes = [2, 32], strides = [1, 1]} : vector<2x128xf32> to vector<2x32xf32>
    %cst_200 = arith.constant 5.000000e-01 : f32
    %494 = vector.broadcast %cst_200 : f32 to vector<2x32xf32>
    %495 = arith.mulf %494, %493 : vector<2x32xf32>
    %496 = math.tanh %495 : vector<2x32xf32>
    %cst_201 = arith.constant 5.000000e-01 : f32
    %497 = vector.broadcast %cst_201 : f32 to vector<2x32xf32>
    %498 = arith.mulf %497, %496 : vector<2x32xf32>
    %cst_202 = arith.constant 5.000000e-01 : f32
    %499 = vector.broadcast %cst_202 : f32 to vector<2x32xf32>
    %500 = arith.addf %498, %499 : vector<2x32xf32>
    %501 = vector.extract_strided_slice %484 {offsets = [0, 64], sizes = [2, 32], strides = [1, 1]} : vector<2x128xf32> to vector<2x32xf32>
    %502 = math.tanh %501 : vector<2x32xf32>
    %503 = vector.extract_strided_slice %484 {offsets = [0, 96], sizes = [2, 32], strides = [1, 1]} : vector<2x128xf32> to vector<2x32xf32>
    %cst_203 = arith.constant 5.000000e-01 : f32
    %504 = vector.broadcast %cst_203 : f32 to vector<2x32xf32>
    %505 = arith.mulf %504, %503 : vector<2x32xf32>
    %506 = math.tanh %505 : vector<2x32xf32>
    %cst_204 = arith.constant 5.000000e-01 : f32
    %507 = vector.broadcast %cst_204 : f32 to vector<2x32xf32>
    %508 = arith.mulf %507, %506 : vector<2x32xf32>
    %cst_205 = arith.constant 5.000000e-01 : f32
    %509 = vector.broadcast %cst_205 : f32 to vector<2x32xf32>
    %510 = arith.addf %508, %509 : vector<2x32xf32>
    %511 = arith.mulf %500, %437 : vector<2x32xf32>
    %512 = arith.mulf %492, %502 : vector<2x32xf32>
    %513 = arith.addf %511, %512 : vector<2x32xf32>
    %514 = math.tanh %513 : vector<2x32xf32>
    %515 = arith.mulf %510, %514 : vector<2x32xf32>
    %516 = tpu.concatenate %515, %474 in 1 : vector<2x32xf32>, vector<2x32xf32> -> vector<2x64xf32>
    %c0_206 = arith.constant 0 : index
    %c0_207 = arith.constant 0 : index
    %517 = vector.load %arg5[%c0_206, %c0_207] : memref<64x128xf32, #tpu.memory_space<vmem>>, vector<64x128xf32>
    %cst_208 = arith.constant dense<0.000000e+00> : vector<2x128xf32>
    %518 = tpu.matmul %516, %517, %cst_208 {dimension_numbers = #tpu.dot_dimension_numbers<[1], [0], [0], [1], [0, 0, 1, 1], [], []>} : vector<2x64xf32>, vector<64x128xf32>, vector<2x128xf32> -> vector<2x128xf32>
    %519 = arith.addf %518, %14 : vector<2x128xf32>
    %520 = vector.extract_strided_slice %519 {offsets = [0, 0], sizes = [2, 32], strides = [1, 1]} : vector<2x128xf32> to vector<2x32xf32>
    %cst_209 = arith.constant 5.000000e-01 : f32
    %521 = vector.broadcast %cst_209 : f32 to vector<2x32xf32>
    %522 = arith.mulf %521, %520 : vector<2x32xf32>
    %523 = math.tanh %522 : vector<2x32xf32>
    %cst_210 = arith.constant 5.000000e-01 : f32
    %524 = vector.broadcast %cst_210 : f32 to vector<2x32xf32>
    %525 = arith.mulf %524, %523 : vector<2x32xf32>
    %cst_211 = arith.constant 5.000000e-01 : f32
    %526 = vector.broadcast %cst_211 : f32 to vector<2x32xf32>
    %527 = arith.addf %525, %526 : vector<2x32xf32>
    %528 = vector.extract_strided_slice %519 {offsets = [0, 32], sizes = [2, 32], strides = [1, 1]} : vector<2x128xf32> to vector<2x32xf32>
    %cst_212 = arith.constant 5.000000e-01 : f32
    %529 = vector.broadcast %cst_212 : f32 to vector<2x32xf32>
    %530 = arith.mulf %529, %528 : vector<2x32xf32>
    %531 = math.tanh %530 : vector<2x32xf32>
    %cst_213 = arith.constant 5.000000e-01 : f32
    %532 = vector.broadcast %cst_213 : f32 to vector<2x32xf32>
    %533 = arith.mulf %532, %531 : vector<2x32xf32>
    %cst_214 = arith.constant 5.000000e-01 : f32
    %534 = vector.broadcast %cst_214 : f32 to vector<2x32xf32>
    %535 = arith.addf %533, %534 : vector<2x32xf32>
    %536 = vector.extract_strided_slice %519 {offsets = [0, 64], sizes = [2, 32], strides = [1, 1]} : vector<2x128xf32> to vector<2x32xf32>
    %537 = math.tanh %536 : vector<2x32xf32>
    %538 = vector.extract_strided_slice %519 {offsets = [0, 96], sizes = [2, 32], strides = [1, 1]} : vector<2x128xf32> to vector<2x32xf32>
    %cst_215 = arith.constant 5.000000e-01 : f32
    %539 = vector.broadcast %cst_215 : f32 to vector<2x32xf32>
    %540 = arith.mulf %539, %538 : vector<2x32xf32>
    %541 = math.tanh %540 : vector<2x32xf32>
    %cst_216 = arith.constant 5.000000e-01 : f32
    %542 = vector.broadcast %cst_216 : f32 to vector<2x32xf32>
    %543 = arith.mulf %542, %541 : vector<2x32xf32>
    %cst_217 = arith.constant 5.000000e-01 : f32
    %544 = vector.broadcast %cst_217 : f32 to vector<2x32xf32>
    %545 = arith.addf %543, %544 : vector<2x32xf32>
    %546 = arith.mulf %535, %472 : vector<2x32xf32>
    %547 = arith.mulf %527, %537 : vector<2x32xf32>
    %548 = arith.addf %546, %547 : vector<2x32xf32>
    %549 = math.tanh %548 : vector<2x32xf32>
    %550 = arith.mulf %545, %549 : vector<2x32xf32>
    %551 = arith.index_cast %c6_i32 : i32 to index
    %c0_218 = arith.constant 0 : index
    %c0_219 = arith.constant 0 : index
    %552 = vector.load %arg18[%551, %c0_218, %c0_219] : memref<8x2x32xf32, #tpu.memory_space<vmem>>, vector<1x2x32xf32>
    %553 = vector.shape_cast %552 : vector<1x2x32xf32> to vector<2x32xf32>
    %554 = vector.shape_cast %550 : vector<2x32xf32> to vector<1x2x32xf32>
    tpu.vector_store %arg18[%551, %c0_218, %c0_219], %554 {strides = array<i32>} : memref<8x2x32xf32, #tpu.memory_space<vmem>>, vector<1x2x32xf32>,
    %c7_i32 = arith.constant 7 : i32
    %555 = arith.index_cast %c7_i32 : i32 to index
    %c0_220 = arith.constant 0 : index
    %c0_221 = arith.constant 0 : index
    %556 = vector.load %arg17[%555, %c0_220, %c0_221] : memref<8x2x128xf32, #tpu.memory_space<vmem>>, vector<1x2x128xf32>
    %557 = vector.shape_cast %556 : vector<1x2x128xf32> to vector<2x128xf32>
    %c0_222 = arith.constant 0 : index
    %c0_223 = arith.constant 0 : index
    %558 = vector.load %arg4[%c0_222, %c0_223] : memref<32x128xf32, #tpu.memory_space<vmem>>, vector<32x128xf32>
    %cst_224 = arith.constant dense<0.000000e+00> : vector<2x128xf32>
    %559 = tpu.matmul %515, %558, %cst_224 {dimension_numbers = #tpu.dot_dimension_numbers<[1], [0], [0], [1], [0, 0, 1, 1], [], []>} : vector<2x32xf32>, vector<32x128xf32>, vector<2x128xf32> -> vector<2x128xf32>
    %560 = arith.addf %557, %559 : vector<2x128xf32>
    %561 = vector.extract_strided_slice %560 {offsets = [0, 0], sizes = [2, 32], strides = [1, 1]} : vector<2x128xf32> to vector<2x32xf32>
    %cst_225 = arith.constant 5.000000e-01 : f32
    %562 = vector.broadcast %cst_225 : f32 to vector<2x32xf32>
    %563 = arith.mulf %562, %561 : vector<2x32xf32>
    %564 = math.tanh %563 : vector<2x32xf32>
    %cst_226 = arith.constant 5.000000e-01 : f32
    %565 = vector.broadcast %cst_226 : f32 to vector<2x32xf32>
    %566 = arith.mulf %565, %564 : vector<2x32xf32>
    %cst_227 = arith.constant 5.000000e-01 : f32
    %567 = vector.broadcast %cst_227 : f32 to vector<2x32xf32>
    %568 = arith.addf %566, %567 : vector<2x32xf32>
    %569 = vector.extract_strided_slice %560 {offsets = [0, 32], sizes = [2, 32], strides = [1, 1]} : vector<2x128xf32> to vector<2x32xf32>
    %cst_228 = arith.constant 5.000000e-01 : f32
    %570 = vector.broadcast %cst_228 : f32 to vector<2x32xf32>
    %571 = arith.mulf %570, %569 : vector<2x32xf32>
    %572 = math.tanh %571 : vector<2x32xf32>
    %cst_229 = arith.constant 5.000000e-01 : f32
    %573 = vector.broadcast %cst_229 : f32 to vector<2x32xf32>
    %574 = arith.mulf %573, %572 : vector<2x32xf32>
    %cst_230 = arith.constant 5.000000e-01 : f32
    %575 = vector.broadcast %cst_230 : f32 to vector<2x32xf32>
    %576 = arith.addf %574, %575 : vector<2x32xf32>
    %577 = vector.extract_strided_slice %560 {offsets = [0, 64], sizes = [2, 32], strides = [1, 1]} : vector<2x128xf32> to vector<2x32xf32>
    %578 = math.tanh %577 : vector<2x32xf32>
    %579 = vector.extract_strided_slice %560 {offsets = [0, 96], sizes = [2, 32], strides = [1, 1]} : vector<2x128xf32> to vector<2x32xf32>
    %cst_231 = arith.constant 5.000000e-01 : f32
    %580 = vector.broadcast %cst_231 : f32 to vector<2x32xf32>
    %581 = arith.mulf %580, %579 : vector<2x32xf32>
    %582 = math.tanh %581 : vector<2x32xf32>
    %cst_232 = arith.constant 5.000000e-01 : f32
    %583 = vector.broadcast %cst_232 : f32 to vector<2x32xf32>
    %584 = arith.mulf %583, %582 : vector<2x32xf32>
    %cst_233 = arith.constant 5.000000e-01 : f32
    %585 = vector.broadcast %cst_233 : f32 to vector<2x32xf32>
    %586 = arith.addf %584, %585 : vector<2x32xf32>
    %587 = arith.mulf %576, %513 : vector<2x32xf32>
    %588 = arith.mulf %568, %578 : vector<2x32xf32>
    %589 = arith.addf %587, %588 : vector<2x32xf32>
    %590 = math.tanh %589 : vector<2x32xf32>
    %591 = arith.mulf %586, %590 : vector<2x32xf32>
    %592 = tpu.concatenate %591, %550 in 1 : vector<2x32xf32>, vector<2x32xf32> -> vector<2x64xf32>
    %c0_234 = arith.constant 0 : index
    %c0_235 = arith.constant 0 : index
    %593 = vector.load %arg5[%c0_234, %c0_235] : memref<64x128xf32, #tpu.memory_space<vmem>>, vector<64x128xf32>
    %cst_236 = arith.constant dense<0.000000e+00> : vector<2x128xf32>
    %594 = tpu.matmul %592, %593, %cst_236 {dimension_numbers = #tpu.dot_dimension_numbers<[1], [0], [0], [1], [0, 0, 1, 1], [], []>} : vector<2x64xf32>, vector<64x128xf32>, vector<2x128xf32> -> vector<2x128xf32>
    %595 = arith.addf %594, %14 : vector<2x128xf32>
    %596 = vector.extract_strided_slice %595 {offsets = [0, 0], sizes = [2, 32], strides = [1, 1]} : vector<2x128xf32> to vector<2x32xf32>
    %cst_237 = arith.constant 5.000000e-01 : f32
    %597 = vector.broadcast %cst_237 : f32 to vector<2x32xf32>
    %598 = arith.mulf %597, %596 : vector<2x32xf32>
    %599 = math.tanh %598 : vector<2x32xf32>
    %cst_238 = arith.constant 5.000000e-01 : f32
    %600 = vector.broadcast %cst_238 : f32 to vector<2x32xf32>
    %601 = arith.mulf %600, %599 : vector<2x32xf32>
    %cst_239 = arith.constant 5.000000e-01 : f32
    %602 = vector.broadcast %cst_239 : f32 to vector<2x32xf32>
    %603 = arith.addf %601, %602 : vector<2x32xf32>
    %604 = vector.extract_strided_slice %595 {offsets = [0, 32], sizes = [2, 32], strides = [1, 1]} : vector<2x128xf32> to vector<2x32xf32>
    %cst_240 = arith.constant 5.000000e-01 : f32
    %605 = vector.broadcast %cst_240 : f32 to vector<2x32xf32>
    %606 = arith.mulf %605, %604 : vector<2x32xf32>
    %607 = math.tanh %606 : vector<2x32xf32>
    %cst_241 = arith.constant 5.000000e-01 : f32
    %608 = vector.broadcast %cst_241 : f32 to vector<2x32xf32>
    %609 = arith.mulf %608, %607 : vector<2x32xf32>
    %cst_242 = arith.constant 5.000000e-01 : f32
    %610 = vector.broadcast %cst_242 : f32 to vector<2x32xf32>
    %611 = arith.addf %609, %610 : vector<2x32xf32>
    %612 = vector.extract_strided_slice %595 {offsets = [0, 64], sizes = [2, 32], strides = [1, 1]} : vector<2x128xf32> to vector<2x32xf32>
    %613 = math.tanh %612 : vector<2x32xf32>
    %614 = vector.extract_strided_slice %595 {offsets = [0, 96], sizes = [2, 32], strides = [1, 1]} : vector<2x128xf32> to vector<2x32xf32>
    %cst_243 = arith.constant 5.000000e-01 : f32
    %615 = vector.broadcast %cst_243 : f32 to vector<2x32xf32>
    %616 = arith.mulf %615, %614 : vector<2x32xf32>
    %617 = math.tanh %616 : vector<2x32xf32>
    %cst_244 = arith.constant 5.000000e-01 : f32
    %618 = vector.broadcast %cst_244 : f32 to vector<2x32xf32>
    %619 = arith.mulf %618, %617 : vector<2x32xf32>
    %cst_245 = arith.constant 5.000000e-01 : f32
    %620 = vector.broadcast %cst_245 : f32 to vector<2x32xf32>
    %621 = arith.addf %619, %620 : vector<2x32xf32>
    %622 = arith.mulf %611, %548 : vector<2x32xf32>
    %623 = arith.mulf %603, %613 : vector<2x32xf32>
    %624 = arith.addf %622, %623 : vector<2x32xf32>
    %625 = math.tanh %624 : vector<2x32xf32>
    %626 = arith.mulf %621, %625 : vector<2x32xf32>
    %627 = arith.index_cast %c7_i32 : i32 to index
    %c0_246 = arith.constant 0 : index
    %c0_247 = arith.constant 0 : index
    %628 = vector.load %arg18[%627, %c0_246, %c0_247] : memref<8x2x32xf32, #tpu.memory_space<vmem>>, vector<1x2x32xf32>
    %629 = vector.shape_cast %628 : vector<1x2x32xf32> to vector<2x32xf32>
    %630 = vector.shape_cast %626 : vector<2x32xf32> to vector<1x2x32xf32>
    tpu.vector_store %arg18[%627, %c0_246, %c0_247], %630 {strides = array<i32>} : memref<8x2x32xf32, #tpu.memory_space<vmem>>, vector<1x2x32xf32>,
    %c8_i32 = arith.constant 8 : i32
    %c0_248 = arith.constant 0 : index
    %c0_249 = arith.constant 0 : index
    %c0_250 = arith.constant 0 : index
    %631 = vector.load %arg15[%c0_248, %c0_249, %c0_250] : memref<2x2x32xf32, #tpu.memory_space<vmem>>, vector<1x2x32xf32>
    %632 = vector.shape_cast %631 : vector<1x2x32xf32> to vector<2x32xf32>
    %633 = vector.shape_cast %591 : vector<2x32xf32> to vector<1x2x32xf32>
    tpu.vector_store %arg15[%c0_248, %c0_249, %c0_250], %633 {strides = array<i32>} : memref<2x2x32xf32, #tpu.memory_space<vmem>>, vector<1x2x32xf32>,
    %c0_251 = arith.constant 0 : index
    %c0_252 = arith.constant 0 : index
    %c0_253 = arith.constant 0 : index
    %634 = vector.load %arg16[%c0_251, %c0_252, %c0_253] : memref<2x2x32xf32, #tpu.memory_space<vmem>>, vector<1x2x32xf32>
    %635 = vector.shape_cast %634 : vector<1x2x32xf32> to vector<2x32xf32>
    %636 = vector.shape_cast %589 : vector<2x32xf32> to vector<1x2x32xf32>
    tpu.vector_store %arg16[%c0_251, %c0_252, %c0_253], %636 {strides = array<i32>} : memref<2x2x32xf32, #tpu.memory_space<vmem>>, vector<1x2x32xf32>,
    %c1_254 = arith.constant 1 : index
    %c0_255 = arith.constant 0 : index
    %c0_256 = arith.constant 0 : index
    %637 = vector.load %arg15[%c1_254, %c0_255, %c0_256] : memref<2x2x32xf32, #tpu.memory_space<vmem>>, vector<1x2x32xf32>
    %638 = vector.shape_cast %637 : vector<1x2x32xf32> to vector<2x32xf32>
    %639 = vector.shape_cast %626 : vector<2x32xf32> to vector<1x2x32xf32>
    tpu.vector_store %arg15[%c1_254, %c0_255, %c0_256], %639 {strides = array<i32>} : memref<2x2x32xf32, #tpu.memory_space<vmem>>, vector<1x2x32xf32>,
    %c1_257 = arith.constant 1 : index
    %c0_258 = arith.constant 0 : index
    %c0_259 = arith.constant 0 : index
    %640 = vector.load %arg16[%c1_257, %c0_258, %c0_259] : memref<2x2x32xf32, #tpu.memory_space<vmem>>, vector<1x2x32xf32>
    %641 = vector.shape_cast %640 : vector<1x2x32xf32> to vector<2x32xf32>
    %642 = vector.shape_cast %624 : vector<2x32xf32> to vector<1x2x32xf32>
    tpu.vector_store %arg16[%c1_257, %c0_258, %c0_259], %642 {strides = array<i32>} : memref<2x2x32xf32, #tpu.memory_space<vmem>>, vector<1x2x32xf32>,
    %c0_260 = arith.constant 0 : index
    %c0_261 = arith.constant 0 : index
    %c0_262 = arith.constant 0 : index
    %643 = vector.load %arg18[%c0_260, %c0_261, %c0_262] : memref<8x2x32xf32, #tpu.memory_space<vmem>>, vector<8x2x32xf32>
    %644 = vector.shape_cast %643 : vector<8x2x32xf32> to vector<16x32xf32>
    %c0_263 = arith.constant 0 : index
    %c0_264 = arith.constant 0 : index
    %645 = vector.load %arg8[%c0_263, %c0_264] : memref<32x128xf32, #tpu.memory_space<vmem>>, vector<32x128xf32>
    %cst_265 = arith.constant dense<0.000000e+00> : vector<16x128xf32>
    %646 = tpu.matmul %644, %645, %cst_265 {dimension_numbers = #tpu.dot_dimension_numbers<[1], [0], [0], [1], [0, 0, 1, 1], [], []>} : vector<16x32xf32>, vector<32x128xf32>, vector<16x128xf32> -> vector<16x128xf32>
    %c0_266 = arith.constant 0 : index
    %c0_267 = arith.constant 0 : index
    %647 = vector.load %arg9[%c0_266, %c0_267] : memref<1x128xf32, #tpu.memory_space<vmem>>, vector<1x128xf32>
    %648 = vector.broadcast %647 : vector<1x128xf32> to vector<16x128xf32>
    %649 = arith.addf %646, %648 : vector<16x128xf32>
    %650 = vector.shape_cast %649 : vector<16x128xf32> to vector<8x2x128xf32>
    %c0_268 = arith.constant 0 : index
    %c0_269 = arith.constant 0 : index
    %c0_270 = arith.constant 0 : index
    %651 = vector.load %arg12[%c0_268, %c0_269, %c0_270] : memref<8x2x128xf32, #tpu.memory_space<vmem>>, vector<8x2x128xf32>
    tpu.vector_store %arg12[%c0_268, %c0_269, %c0_270], %650 {strides = array<i32>} : memref<8x2x128xf32, #tpu.memory_space<vmem>>, vector<8x2x128xf32>,
    %c1_i32_271 = arith.constant 1 : i32
    %652 = arith.cmpi eq, %arg1, %c1_i32_271 : i32
    %653 = arith.extui %652 : i1 to i32
    %c0_i32_272 = arith.constant 0 : i32
    %654 = arith.cmpi ne, %653, %c0_i32_272 : i32
    scf.if %654 {
      %c0_273 = arith.constant 0 : index
      %c0_274 = arith.constant 0 : index
      %c0_275 = arith.constant 0 : index
      %655 = vector.load %arg15[%c0_273, %c0_274, %c0_275] : memref<2x2x32xf32, #tpu.memory_space<vmem>>, vector<2x2x32xf32>
      %c0_276 = arith.constant 0 : index
      %c0_277 = arith.constant 0 : index
      %c0_278 = arith.constant 0 : index
      %656 = vector.load %arg13[%c0_276, %c0_277, %c0_278] : memref<2x2x32xf32, #tpu.memory_space<vmem>>, vector<2x2x32xf32>
      tpu.vector_store %arg13[%c0_276, %c0_277, %c0_278], %655 {strides = array<i32>} : memref<2x2x32xf32, #tpu.memory_space<vmem>>, vector<2x2x32xf32>,
      %c0_279 = arith.constant 0 : index
      %c0_280 = arith.constant 0 : index
      %c0_281 = arith.constant 0 : index
      %657 = vector.load %arg16[%c0_279, %c0_280, %c0_281] : memref<2x2x32xf32, #tpu.memory_space<vmem>>, vector<2x2x32xf32>
      %c0_282 = arith.constant 0 : index
      %c0_283 = arith.constant 0 : index
      %c0_284 = arith.constant 0 : index
      %658 = vector.load %arg14[%c0_282, %c0_283, %c0_284] : memref<2x2x32xf32, #tpu.memory_space<vmem>>, vector<2x2x32xf32>
      tpu.vector_store %arg14[%c0_282, %c0_283, %c0_284], %657 {strides = array<i32>} : memref<2x2x32xf32, #tpu.memory_space<vmem>>, vector<2x2x32xf32>,
    } else {
    }
    return
  }
  func.func @transform_0(%arg0: i32, %arg1: i32) -> (i32, i32, i32) {
    %c0_i32 = arith.constant 0 : i32
    %c0_i32_0 = arith.constant 0 : i32
    return %arg1, %arg0, %c0_i32 : i32, i32, i32
  }
  func.func @transform_1(%arg0: i32, %arg1: i32) -> (i32, i32) {
    %c0_i32 = arith.constant 0 : i32
    %c0_i32_0 = arith.constant 0 : i32
    %c0_i32_1 = arith.constant 0 : i32
    return %c0_i32, %c0_i32_0 : i32, i32
  }
  func.func @transform_2(%arg0: i32, %arg1: i32) -> (i32, i32) {
    %c0_i32 = arith.constant 0 : i32
    %c0_i32_0 = arith.constant 0 : i32
    %c0_i32_1 = arith.constant 0 : i32
    return %c0_i32, %c0_i32_0 : i32, i32
  }
  func.func @transform_3(%arg0: i32, %arg1: i32) -> (i32, i32) {
    %c0_i32 = arith.constant 0 : i32
    %c0_i32_0 = arith.constant 0 : i32
    %c0_i32_1 = arith.constant 0 : i32
    return %c0_i32, %c0_i32_0 : i32, i32
  }
  func.func @transform_4(%arg0: i32, %arg1: i32) -> (i32, i32) {
    %c0_i32 = arith.constant 0 : i32
    %c0_i32_0 = arith.constant 0 : i32
    %c0_i32_1 = arith.constant 0 : i32
    return %c0_i32, %c0_i32_0 : i32, i32
  }
  func.func @transform_5(%arg0: i32, %arg1: i32) -> (i32, i32) {
    %c0_i32 = arith.constant 0 : i32
    %c0_i32_0 = arith.constant 0 : i32
    %c0_i32_1 = arith.constant 0 : i32
    return %c0_i32, %c0_i32_0 : i32, i32
  }
  func.func @transform_6(%arg0: i32, %arg1: i32) -> (i32, i32) {
    %c0_i32 = arith.constant 0 : i32
    %c0_i32_0 = arith.constant 0 : i32
    %c0_i32_1 = arith.constant 0 : i32
    return %c0_i32, %c0_i32_0 : i32, i32
  }
  func.func @transform_7(%arg0: i32, %arg1: i32) -> (i32, i32) {
    %c0_i32 = arith.constant 0 : i32
    %c0_i32_0 = arith.constant 0 : i32
    %c0_i32_1 = arith.constant 0 : i32
    return %c0_i32, %c0_i32_0 : i32, i32
  }
  func.func @transform_8(%arg0: i32, %arg1: i32) -> (i32, i32, i32) {
    %c0_i32 = arith.constant 0 : i32
    %c0_i32_0 = arith.constant 0 : i32
    %c0_i32_1 = arith.constant 0 : i32
    return %c0_i32, %arg0, %c0_i32_0 : i32, i32, i32
  }
  func.func @transform_9(%arg0: i32, %arg1: i32) -> (i32, i32, i32) {
    %c0_i32 = arith.constant 0 : i32
    %c0_i32_0 = arith.constant 0 : i32
    %c0_i32_1 = arith.constant 0 : i32
    return %c0_i32, %arg0, %c0_i32_0 : i32, i32, i32
  }
  func.func @transform_10(%arg0: i32, %arg1: i32) -> (i32, i32, i32) {
    %c0_i32 = arith.constant 0 : i32
    %c0_i32_0 = arith.constant 0 : i32
    return %arg1, %arg0, %c0_i32 : i32, i32, i32
  }
  func.func @transform_11(%arg0: i32, %arg1: i32) -> (i32, i32, i32) {
    %c0_i32 = arith.constant 0 : i32
    %c0_i32_0 = arith.constant 0 : i32
    %c0_i32_1 = arith.constant 0 : i32
    return %c0_i32, %arg0, %c0_i32_0 : i32, i32, i32
  }
  func.func @transform_12(%arg0: i32, %arg1: i32) -> (i32, i32, i32) {
    %c0_i32 = arith.constant 0 : i32
    %c0_i32_0 = arith.constant 0 : i32
    %c0_i32_1 = arith.constant 0 : i32
    return %c0_i32, %arg0, %c0_i32_0 : i32, i32, i32
  }
}

</mosaic_0001>

<llo_original>
// kernel: tpu_custom_call.1
$region0: #{tpu_custom_call.1}
  #allocation0 [shape = 'u32[]', space=smem, size = 0x4, offset = 0x4, fixed_abs, tag = 'smem constant byte address 0x4 - core index']
  #allocation1 [shape = 'u32[144,128]{1,0:T(1,128)}', space=vmem, size = 0x12000, scoped, tag = 'internal scratch']
  #allocation2 [shape = 'f32[2,2,32]{2,1,0:T(2,128)}', space=vmem, size = 0x800, scoped, tag = 'scratch operand']
  #allocation3 [shape = 'f32[2,2,32]{2,1,0:T(2,128)}', space=vmem, size = 0x800, scoped, tag = 'scratch operand']
  #allocation4 [shape = 'f32[8,2,128]{2,1,0:T(2,128)}', space=vmem, size = 0x2000, scoped, tag = 'scratch operand']
  #allocation5 [shape = 'f32[8,2,32]{2,1,0:T(2,128)}', space=vmem, size = 0x2000, scoped, tag = 'scratch operand']
  %s0 = inlined_call_operand.hbm [shape: f32[16,2,16], index: 0, kind: input, shape index: {}]
  %s1 = inlined_call_operand.hbm [shape: f32[16,128], index: 1, kind: input, shape index: {}]
  %s2 = inlined_call_operand.hbm [shape: f32[32,128], index: 2, kind: input, shape index: {}]
  %s3 = inlined_call_operand.hbm [shape: f32[64,128], index: 3, kind: input, shape index: {}]
  %s4 = inlined_call_operand.vmem [shape: f32[1,128], index: 4, kind: input, shape index: {}]
  %s5 = inlined_call_operand.vmem [shape: f32[1,128], index: 5, kind: input, shape index: {}]
  %s6 = inlined_call_operand.hbm [shape: f32[32,128], index: 6, kind: input, shape index: {}]
  %s7 = inlined_call_operand.vmem [shape: f32[1,128], index: 7, kind: input, shape index: {}]
  %s8 = inlined_call_operand.vmem [shape: f32[2,2,32], index: 8, kind: input, shape index: {}]
  %s9 = inlined_call_operand.vmem [shape: f32[2,2,32], index: 9, kind: input, shape index: {}]
  %s10 = inlined_call_operand.hbm [shape: f32[16,2,128], index: 10, kind: output, shape index: {0}]
  %s11 = inlined_call_operand.hbm [shape: f32[2,2,32], index: 11, kind: output, shape index: {1}]
  %s12 = inlined_call_operand.hbm [shape: f32[2,2,32], index: 12, kind: output, shape index: {2}]
  %13 = xla_tuple %s10, %s11, %s12
  %s14 = sld [smem:[#allocation0]]
  $region117: #{tpu_custom_call.1} parent=0
    _
  %s16 = ssub.s32 1, %s14
  %s17 = scalar_select 0, %s16, %s14
  $region1: #{tpu_custom_call.1} parent=0
    #allocation6 [shape = 'u8[16384]{0}', space=vmem, size = 0x4000, scoped, tag = 'input window, operand 0']
    #allocation7 [shape = 's32[2]{0}', space=sflag, size = 0x8, scoped, tag = 'scoped memory for tpu_custom_call.1']
    #allocation8 [shape = 's32[2]{0}', space=sflag, size = 0x8, scoped, tag = 'scoped memory for tpu_custom_call.1']
    #allocation9 [shape = 'u8[8192]{0}', space=vmem, size = 0x2000, scoped, tag = 'input window, operand 1, single buffered']
    #allocation10 [shape = 's32[1]{0}', space=sflag, size = 0x4, scoped, tag = 'scoped memory for tpu_custom_call.1']
    #allocation11 [shape = 'u8[16384]{0}', space=vmem, size = 0x4000, scoped, tag = 'input window, operand 2, single buffered']
    #allocation12 [shape = 'u8[32768]{0}', space=vmem, size = 0x8000, scoped, tag = 'input window, operand 3, single buffered']
    #allocation13 [shape = 's32[1]{0}', space=sflag, size = 0x4, scoped, tag = 'scoped memory for tpu_custom_call.1']
    #allocation14 [shape = 'u8[16384]{0}', space=vmem, size = 0x4000, scoped, tag = 'input window, operand 6, single buffered']
    #allocation15 [shape = 'u8[16384]{0}', space=vmem, size = 0x4000, scoped, tag = 'output window, operand 0']
    #allocation16 [shape = 'u8[2048]{0}', space=vmem, size = 0x800, scoped, tag = 'output window, operand 1, single buffered']
    #allocation17 [shape = 's32[1]{0}', space=sflag, size = 0x4, scoped, tag = 'scoped memory for tpu_custom_call.1']
    #allocation18 [shape = 'u8[2048]{0}', space=vmem, size = 0x800, scoped, tag = 'output window, operand 2, single buffered']
    %18 = vsyncpa [#allocation7], 0
    %s19 = scalar_lea.sflag [#allocation7], 1
    %20 = vsyncpa %s19, 0
    %21 = vsyncpa [#allocation10], 0
    %22 = vsyncpa [#allocation13], 0
    %23 = vsyncpa [#allocation8], 0
    %s24 = scalar_lea.sflag [#allocation8], 1
    %25 = vsyncpa %s24, 0
    %26 = vsyncpa [#allocation17], 0
    loop: start=0, step=1, limit=4
    $region2: #{tpu_custom_call.1} parent=1 // loop_pre_header
      _
    $region3: #{tpu_custom_call.1} parent=1 // loop_header
      %s28 = sphi 0, %s32
      %p29 = scmp.ge.s32.totalorder %s28, 4
      %s35 = sphi 0, %s47
      %s36 = sphi 0, %s43
      %s37 = sphi 0, %s35
      %s38 = sphi 0, %s36
      %s39 = sphi 0, %s37
      %s40 = sphi 0, %s38
      %s52 = sphi 0, %s54
      %s55 = sphi 0, %s52
      %s56 = sphi 0, %s55
      %s72 = sphi 0, %s56
      %s76 = sphi 0, %s76
      %s78 = sphi 0, %s76
      %s79 = sphi 0, %s78
      %s93 = sphi 0, %s79
      %s97 = sphi 0, %s97
      %s99 = sphi 0, %s97
      %s100 = sphi 0, %s99
      %s114 = sphi 0, %s100
      %s118 = sphi 0, %s118
      %s120 = sphi 0, %s118
      %s121 = sphi 0, %s120
      %s135 = sphi 0, %s121
      %s139 = sphi 0, %s139
      %s141 = sphi 0, %s139
      %s142 = sphi 0, %s141
      %s156 = sphi 0, %s142
      %s160 = sphi 0, %s160
      %s162 = sphi 0, %s160
      %s163 = sphi 0, %s162
      %s177 = sphi 0, %s163
      %s181 = sphi 0, %s181
      %s183 = sphi 0, %s181
      %s184 = sphi 0, %s183
      %s198 = sphi 0, %s184
      %s202 = sphi 0, %s202
      %s204 = sphi 0, %s202
      %s205 = sphi 0, %s204
      %s219 = sphi 0, %s205
      %s225 = sphi 0, %s227
      %s228 = sphi 0, %s225
      %s229 = sphi 0, %s228
      %s245 = sphi 0, %s229
      %s251 = sphi 0, %s253
      %s254 = sphi 0, %s251
      %s255 = sphi 0, %s254
      %s271 = sphi 0, %s255
      %s279 = sphi 0, %s281
      %s282 = sphi 0, %s279
      %s283 = sphi 0, %s282
      %s299 = sphi 0, %s283
      %s305 = sphi 0, %s307
      %s308 = sphi 0, %s305
      %s309 = sphi 0, %s308
      %s325 = sphi 0, %s309
      %s331 = sphi 0, %s333
      %s334 = sphi 0, %s331
      %s335 = sphi 0, %s334
      %s351 = sphi 0, %s335
    $region4: #{tpu_custom_call.1} parent=1 // loop_header_branch
      %31 = sbr.rel (%p29) target = $region8
    $region5: #{tpu_custom_call.1} parent=1 // loop_body
      %s33 = ssub.s32 %s28, 1
      %s34 = ssub.s32 %s28, 2
      %s41 = sadd.s32 1, %s36
      %p42 = scmp.ge.s32.totalorder %s41, 2
      %s43 = scalar_select %p42, 0, %s41
      %s44 = sadd.s32 1, %s35
      %s45 = scalar_select %p42, %s44, %s35
      %p46 = scmp.ge.s32.totalorder %s45, 1
      %s47 = scalar_select %p46, 0, %s45
      %s48 = ssub.s32 %s36, %s43
      %s49 = ssub.s32 %s35, %s47
      %s50 = sor.u32 %s48, %s49
      %p51 = scmp.eq.s32.totalorder %s50, 0
      %s53 = sadd.s32 %s52, 1
      %s54 = scalar_select %p51, %s52, %s53
      %p57 = pneg %p51
      %p58 = scmp.eq.s32.totalorder %s28, 1
      %p59 = por %p57, %p58
      %p60 = scmp.ne.s32.totalorder %s52, %s55
      %p61 = scmp.eq.s32.totalorder %s28, 0
      %p62 = por %p60, %p61
      %p63 = scmp.ne.s32.totalorder %s52, %s55
      %p64 = scmp.eq.s32.totalorder %s33, 1
      %p65 = por %p63, %p64
      %p66 = scmp.ne.s32.totalorder %s55, %s56
      %p67 = scmp.eq.s32.totalorder %s33, 0
      %p68 = por %p66, %p67
      %p69 = scmp.ne.s32.totalorder %s55, %s56
      %p70 = scmp.eq.s32.totalorder %s34, 1
      %p71 = por %p69, %p70
      %p73 = scmp.ne.s32.totalorder %s56, %s72
      %p74 = scmp.eq.s32.totalorder %s34, 0
      %p75 = por %p73, %p74
      %s77 = sadd.s32 %s76, 1
      %p80 = scmp.eq.s32.totalorder %s28, 1
      %p81 = scmp.ne.s32.totalorder %s76, %s78
      %p82 = scmp.eq.s32.totalorder %s28, 0
      %p83 = por %p81, %p82
      %p84 = scmp.ne.s32.totalorder %s76, %s78
      %p85 = scmp.eq.s32.totalorder %s33, 1
      %p86 = por %p84, %p85
      %p87 = scmp.ne.s32.totalorder %s78, %s79
      %p88 = scmp.eq.s32.totalorder %s33, 0
      %p89 = por %p87, %p88
      %p90 = scmp.ne.s32.totalorder %s78, %s79
      %p91 = scmp.eq.s32.totalorder %s34, 1
      %p92 = por %p90, %p91
      %p94 = scmp.ne.s32.totalorder %s79, %s93
      %p95 = scmp.eq.s32.totalorder %s34, 0
      %p96 = por %p94, %p95
      %s98 = sadd.s32 %s97, 1
      %p101 = scmp.eq.s32.totalorder %s28, 1
      %p102 = scmp.ne.s32.totalorder %s97, %s99
      %p103 = scmp.eq.s32.totalorder %s28, 0
      %p104 = por %p102, %p103
      %p105 = scmp.ne.s32.totalorder %s97, %s99
      %p106 = scmp.eq.s32.totalorder %s33, 1
      %p107 = por %p105, %p106
      %p108 = scmp.ne.s32.totalorder %s99, %s100
      %p109 = scmp.eq.s32.totalorder %s33, 0
      %p110 = por %p108, %p109
      %p111 = scmp.ne.s32.totalorder %s99, %s100
      %p112 = scmp.eq.s32.totalorder %s34, 1
      %p113 = por %p111, %p112
      %p115 = scmp.ne.s32.totalorder %s100, %s114
      %p116 = scmp.eq.s32.totalorder %s34, 0
      %p117 = por %p115, %p116
      %s119 = sadd.s32 %s118, 1
      %p122 = scmp.eq.s32.totalorder %s28, 1
      %p123 = scmp.ne.s32.totalorder %s118, %s120
      %p124 = scmp.eq.s32.totalorder %s28, 0
      %p125 = por %p123, %p124
      %p126 = scmp.ne.s32.totalorder %s118, %s120
      %p127 = scmp.eq.s32.totalorder %s33, 1
      %p128 = por %p126, %p127
      %p129 = scmp.ne.s32.totalorder %s120, %s121
      %p130 = scmp.eq.s32.totalorder %s33, 0
      %p131 = por %p129, %p130
      %p132 = scmp.ne.s32.totalorder %s120, %s121
      %p133 = scmp.eq.s32.totalorder %s34, 1
      %p134 = por %p132, %p133
      %p136 = scmp.ne.s32.totalorder %s121, %s135
      %p137 = scmp.eq.s32.totalorder %s34, 0
      %p138 = por %p136, %p137
      %s140 = sadd.s32 %s139, 1
      %p143 = scmp.eq.s32.totalorder %s28, 1
      %p144 = scmp.ne.s32.totalorder %s139, %s141
      %p145 = scmp.eq.s32.totalorder %s28, 0
      %p146 = por %p144, %p145
      %p147 = scmp.ne.s32.totalorder %s139, %s141
      %p148 = scmp.eq.s32.totalorder %s33, 1
      %p149 = por %p147, %p148
      %p150 = scmp.ne.s32.totalorder %s141, %s142
      %p151 = scmp.eq.s32.totalorder %s33, 0
      %p152 = por %p150, %p151
      %p153 = scmp.ne.s32.totalorder %s141, %s142
      %p154 = scmp.eq.s32.totalorder %s34, 1
      %p155 = por %p153, %p154
      %p157 = scmp.ne.s32.totalorder %s142, %s156
      %p158 = scmp.eq.s32.totalorder %s34, 0
      %p159 = por %p157, %p158
      %s161 = sadd.s32 %s160, 1
      %p164 = scmp.eq.s32.totalorder %s28, 1
      %p165 = scmp.ne.s32.totalorder %s160, %s162
      %p166 = scmp.eq.s32.totalorder %s28, 0
      %p167 = por %p165, %p166
      %p168 = scmp.ne.s32.totalorder %s160, %s162
      %p169 = scmp.eq.s32.totalorder %s33, 1
      %p170 = por %p168, %p169
      %p171 = scmp.ne.s32.totalorder %s162, %s163
      %p172 = scmp.eq.s32.totalorder %s33, 0
      %p173 = por %p171, %p172
      %p174 = scmp.ne.s32.totalorder %s162, %s163
      %p175 = scmp.eq.s32.totalorder %s34, 1
      %p176 = por %p174, %p175
      %p178 = scmp.ne.s32.totalorder %s163, %s177
      %p179 = scmp.eq.s32.totalorder %s34, 0
      %p180 = por %p178, %p179
      %s182 = sadd.s32 %s181, 1
      %p185 = scmp.eq.s32.totalorder %s28, 1
      %p186 = scmp.ne.s32.totalorder %s181, %s183
      %p187 = scmp.eq.s32.totalorder %s28, 0
      %p188 = por %p186, %p187
      %p189 = scmp.ne.s32.totalorder %s181, %s183
      %p190 = scmp.eq.s32.totalorder %s33, 1
      %p191 = por %p189, %p190
      %p192 = scmp.ne.s32.totalorder %s183, %s184
      %p193 = scmp.eq.s32.totalorder %s33, 0
      %p194 = por %p192, %p193
      %p195 = scmp.ne.s32.totalorder %s183, %s184
      %p196 = scmp.eq.s32.totalorder %s34, 1
      %p197 = por %p195, %p196
      %p199 = scmp.ne.s32.totalorder %s184, %s198
      %p200 = scmp.eq.s32.totalorder %s34, 0
      %p201 = por %p199, %p200
      %s203 = sadd.s32 %s202, 1
      %p206 = scmp.eq.s32.totalorder %s28, 1
      %p207 = scmp.ne.s32.totalorder %s202, %s204
      %p208 = scmp.eq.s32.totalorder %s28, 0
      %p209 = por %p207, %p208
      %p210 = scmp.ne.s32.totalorder %s202, %s204
      %p211 = scmp.eq.s32.totalorder %s33, 1
      %p212 = por %p210, %p211
      %p213 = scmp.ne.s32.totalorder %s204, %s205
      %p214 = scmp.eq.s32.totalorder %s33, 0
      %p215 = por %p213, %p214
      %p216 = scmp.ne.s32.totalorder %s204, %s205
      %p217 = scmp.eq.s32.totalorder %s34, 1
      %p218 = por %p216, %p217
      %p220 = scmp.ne.s32.totalorder %s205, %s219
      %p221 = scmp.eq.s32.totalorder %s34, 0
      %p222 = por %p220, %p221
      %s223 = ssub.s32 %s35, %s47
      %p224 = scmp.eq.s32.totalorder %s223, 0
      %s226 = sadd.s32 %s225, 1
      %s227 = scalar_select %p224, %s225, %s226
      %p230 = pneg %p224
      %p231 = scmp.eq.s32.totalorder %s28, 1
      %p232 = por %p230, %p231
      %p233 = scmp.ne.s32.totalorder %s225, %s228
      %p234 = scmp.eq.s32.totalorder %s28, 0
      %p235 = por %p233, %p234
      %p236 = scmp.ne.s32.totalorder %s225, %s228
      %p237 = scmp.eq.s32.totalorder %s33, 1
      %p238 = por %p236, %p237
      %p239 = scmp.ne.s32.totalorder %s228, %s229
      %p240 = scmp.eq.s32.totalorder %s33, 0
      %p241 = por %p239, %p240
      %p242 = scmp.ne.s32.totalorder %s228, %s229
      %p243 = scmp.eq.s32.totalorder %s34, 1
      %p244 = por %p242, %p243
      %p246 = scmp.ne.s32.totalorder %s229, %s245
      %p247 = scmp.eq.s32.totalorder %s34, 0
      %p248 = por %p246, %p247
      %s249 = ssub.s32 %s35, %s47
      %p250 = scmp.eq.s32.totalorder %s249, 0
      %s252 = sadd.s32 %s251, 1
      %s253 = scalar_select %p250, %s251, %s252
      %p256 = pneg %p250
      %p257 = scmp.eq.s32.totalorder %s28, 1
      %p258 = por %p256, %p257
      %p259 = scmp.ne.s32.totalorder %s251, %s254
      %p260 = scmp.eq.s32.totalorder %s28, 0
      %p261 = por %p259, %p260
      %p262 = scmp.ne.s32.totalorder %s251, %s254
      %p263 = scmp.eq.s32.totalorder %s33, 1
      %p264 = por %p262, %p263
      %p265 = scmp.ne.s32.totalorder %s254, %s255
      %p266 = scmp.eq.s32.totalorder %s33, 0
      %p267 = por %p265, %p266
      %p268 = scmp.ne.s32.totalorder %s254, %s255
      %p269 = scmp.eq.s32.totalorder %s34, 1
      %p270 = por %p268, %p269
      %p272 = scmp.ne.s32.totalorder %s255, %s271
      %p273 = scmp.eq.s32.totalorder %s34, 0
      %p274 = por %p272, %p273
      %s275 = ssub.s32 %s36, %s43
      %s276 = ssub.s32 %s35, %s47
      %s277 = sor.u32 %s275, %s276
      %p278 = scmp.eq.s32.totalorder %s277, 0
      %s280 = sadd.s32 %s279, 1
      %s281 = scalar_select %p278, %s279, %s280
      %p284 = pneg %p278
      %p285 = scmp.eq.s32.totalorder %s28, 1
      %p286 = por %p284, %p285
      %p287 = scmp.ne.s32.totalorder %s279, %s282
      %p288 = scmp.eq.s32.totalorder %s28, 0
      %p289 = por %p287, %p288
      %p290 = scmp.ne.s32.totalorder %s279, %s282
      %p291 = scmp.eq.s32.totalorder %s33, 1
      %p292 = por %p290, %p291
      %p293 = scmp.ne.s32.totalorder %s282, %s283
      %p294 = scmp.eq.s32.totalorder %s33, 0
      %p295 = por %p293, %p294
      %p296 = scmp.ne.s32.totalorder %s282, %s283
      %p297 = scmp.eq.s32.totalorder %s34, 1
      %p298 = por %p296, %p297
      %p300 = scmp.ne.s32.totalorder %s283, %s299
      %p301 = scmp.eq.s32.totalorder %s34, 0
      %p302 = por %p300, %p301
      %s303 = ssub.s32 %s35, %s47
      %p304 = scmp.eq.s32.totalorder %s303, 0
      %s306 = sadd.s32 %s305, 1
      %s307 = scalar_select %p304, %s305, %s306
      %p310 = pneg %p304
      %p311 = scmp.eq.s32.totalorder %s28, 1
      %p312 = por %p310, %p311
      %p313 = scmp.ne.s32.totalorder %s305, %s308
      %p314 = scmp.eq.s32.totalorder %s28, 0
      %p315 = por %p313, %p314
      %p316 = scmp.ne.s32.totalorder %s305, %s308
      %p317 = scmp.eq.s32.totalorder %s33, 1
      %p318 = por %p316, %p317
      %p319 = scmp.ne.s32.totalorder %s308, %s309
      %p320 = scmp.eq.s32.totalorder %s33, 0
      %p321 = por %p319, %p320
      %p322 = scmp.ne.s32.totalorder %s308, %s309
      %p323 = scmp.eq.s32.totalorder %s34, 1
      %p324 = por %p322, %p323
      %p326 = scmp.ne.s32.totalorder %s309, %s325
      %p327 = scmp.eq.s32.totalorder %s34, 0
      %p328 = por %p326, %p327
      %s329 = ssub.s32 %s35, %s47
      %p330 = scmp.eq.s32.totalorder %s329, 0
      %s332 = sadd.s32 %s331, 1
      %s333 = scalar_select %p330, %s331, %s332
      %p336 = pneg %p330
      %p337 = scmp.eq.s32.totalorder %s28, 1
      %p338 = por %p336, %p337
      %p339 = scmp.ne.s32.totalorder %s331, %s334
      %p340 = scmp.eq.s32.totalorder %s28, 0
      %p341 = por %p339, %p340
      %p342 = scmp.ne.s32.totalorder %s331, %s334
      %p343 = scmp.eq.s32.totalorder %s33, 1
      %p344 = por %p342, %p343
      %p345 = scmp.ne.s32.totalorder %s334, %s335
      %p346 = scmp.eq.s32.totalorder %s33, 0
      %p347 = por %p345, %p346
      %p348 = scmp.ne.s32.totalorder %s334, %s335
      %p349 = scmp.eq.s32.totalorder %s34, 1
      %p350 = por %p348, %p349
      %p352 = scmp.ne.s32.totalorder %s335, %s351
      %p353 = scmp.eq.s32.totalorder %s34, 0
      %p354 = por %p352, %p353
      %p355 = scmp.le.s32.totalorder 1, %s28
      %p356 = scmp.lt.s32.totalorder %s28, 3
      %p357 = pnand %p355, %p356
      %p358 = pneg %p357
      // Predicated region
      $region9: #{tpu_custom_call.1} parent=5 // pred_check
        _
      $region10: #{tpu_custom_call.1} parent=5 // pred_check_branch
        %360 = sbr.rel (%p357) target = $region12
      $region11: #{tpu_custom_call.1} parent=5 // pred_region
        %s361 = ssub.s32 %s28, 1
        // Predicated region
        $region13: #{tpu_custom_call.1} parent=11 // pred_check
          %p362 = pneg %p89
        $region14: #{tpu_custom_call.1} parent=11 // pred_check_branch
          %364 = sbr.rel (%p362) target = $region16
        $region15: #{tpu_custom_call.1} parent=11 // pred_region
          %s366 = ssub.s32 256, 256
          %367 = vsyncadd [#allocation10], %s366
          %s368 = sshll.u32 [#allocation9], 4
          %s369 = int_to_ptr.vmem [resolvable:$true] %s368
          %374 = dma.hbm_to_vmem [thread:$0]  %s1, 256, %s369, [#allocation10], 128, 128, 8
        $region16: #{tpu_custom_call.1} parent=11 // pred_fallthru
          _
        // Predicated region
        $region17: #{tpu_custom_call.1} parent=11 // pred_check
          %p375 = pneg %p110
        $region18: #{tpu_custom_call.1} parent=11 // pred_check_branch
          %377 = sbr.rel (%p375) target = $region20
        $region19: #{tpu_custom_call.1} parent=11 // pred_region
          %s379 = ssub.s32 512, 512
          %380 = vsyncadd [#allocation10], %s379
          %s381 = sshll.u32 [#allocation11], 4
          %s382 = int_to_ptr.vmem [resolvable:$true] %s381
          %387 = dma.hbm_to_vmem [thread:$0]  %s2, 512, %s382, [#allocation10], 128, 128, 8
        $region20: #{tpu_custom_call.1} parent=11 // pred_fallthru
          _
        // Predicated region
        $region21: #{tpu_custom_call.1} parent=11 // pred_check
          %p388 = pneg %p131
        $region22: #{tpu_custom_call.1} parent=11 // pred_check_branch
          %390 = sbr.rel (%p388) target = $region24
        $region23: #{tpu_custom_call.1} parent=11 // pred_region
          %s392 = ssub.s32 1024, 1024
          %393 = vsyncadd [#allocation13], %s392
          %s394 = sshll.u32 [#allocation12], 4
          %s395 = int_to_ptr.vmem [resolvable:$true] %s394
          %400 = dma.hbm_to_vmem [thread:$0]  %s3, 1024, %s395, [#allocation13], 128, 128, 8
        $region24: #{tpu_custom_call.1} parent=11 // pred_fallthru
          _
        // Predicated region
        $region25: #{tpu_custom_call.1} parent=11 // pred_check
          %p401 = pneg %p152
        $region26: #{tpu_custom_call.1} parent=11 // pred_check_branch
          %403 = sbr.rel (%p401) target = $region28
        $region27: #{tpu_custom_call.1} parent=11 // pred_region
          _
        $region28: #{tpu_custom_call.1} parent=11 // pred_fallthru
          _
        // Predicated region
        $region29: #{tpu_custom_call.1} parent=11 // pred_check
          %p404 = pneg %p173
        $region30: #{tpu_custom_call.1} parent=11 // pred_check_branch
          %406 = sbr.rel (%p404) target = $region32
        $region31: #{tpu_custom_call.1} parent=11 // pred_region
          _
        $region32: #{tpu_custom_call.1} parent=11 // pred_fallthru
          _
        // Predicated region
        $region33: #{tpu_custom_call.1} parent=11 // pred_check
          %p407 = pneg %p194
        $region34: #{tpu_custom_call.1} parent=11 // pred_check_branch
          %409 = sbr.rel (%p407) target = $region36
        $region35: #{tpu_custom_call.1} parent=11 // pred_region
          %s411 = ssub.s32 512, 512
          %412 = vsyncadd [#allocation13], %s411
          %s413 = sshll.u32 [#allocation14], 4
          %s414 = int_to_ptr.vmem [resolvable:$true] %s413
          %419 = dma.hbm_to_vmem [thread:$0]  %s6, 512, %s414, [#allocation13], 128, 128, 8
        $region36: #{tpu_custom_call.1} parent=11 // pred_fallthru
          _
        // Predicated region
        $region37: #{tpu_custom_call.1} parent=11 // pred_check
          %p420 = pneg %p215
        $region38: #{tpu_custom_call.1} parent=11 // pred_check_branch
          %422 = sbr.rel (%p420) target = $region40
        $region39: #{tpu_custom_call.1} parent=11 // pred_region
          _
        $region40: #{tpu_custom_call.1} parent=11 // pred_fallthru
          _
        // Predicated region
        $region41: #{tpu_custom_call.1} parent=11 // pred_check
          %p423 = pneg %p241
        $region42: #{tpu_custom_call.1} parent=11 // pred_check_branch
          %425 = sbr.rel (%p423) target = $region44
        $region43: #{tpu_custom_call.1} parent=11 // pred_region
          %p426 = scmp.lt.s32.totalorder %s37, 0
          %s427 = scalar_select %p426, %s37, 0
          %s428 = smul.addr %s427, 2
          %s429 = scalar_lea.vmem %s8, %s428
        $region44: #{tpu_custom_call.1} parent=11 // pred_fallthru
          _
        // Predicated region
        $region45: #{tpu_custom_call.1} parent=11 // pred_check
          %p430 = pneg %p267
        $region46: #{tpu_custom_call.1} parent=11 // pred_check_branch
          %432 = sbr.rel (%p430) target = $region48
        $region47: #{tpu_custom_call.1} parent=11 // pred_region
          %p433 = scmp.lt.s32.totalorder %s37, 0
          %s434 = scalar_select %p433, %s37, 0
          %s435 = smul.addr %s434, 2
          %s436 = scalar_lea.vmem %s9, %s435
        $region48: #{tpu_custom_call.1} parent=11 // pred_fallthru
          _
      $region12: #{tpu_custom_call.1} parent=5 // pred_fallthru
        _
      %p437 = scmp.lt.s32.totalorder %s28, 2
      // Predicated region
      $region49: #{tpu_custom_call.1} parent=5 // pred_check
        %p438 = pneg %p437
      $region50: #{tpu_custom_call.1} parent=5 // pred_check_branch
        %440 = sbr.rel (%p438) target = $region52
      $region51: #{tpu_custom_call.1} parent=5 // pred_region
        // Predicated region
        $region53: #{tpu_custom_call.1} parent=51 // pred_check
          %p441 = pneg %p62
        $region54: #{tpu_custom_call.1} parent=51 // pred_check_branch
          %443 = sbr.rel (%p441) target = $region56
        $region55: #{tpu_custom_call.1} parent=51 // pred_region
          %s444 = sand.u32 %s52, 1
          %s445 = scalar_lea.sflag [#allocation7], %s444
          %s446 = sand.u32 %s52, 1
          %s447 = smul.addr %s446, 16
          %s448 = scalar_lea.vmem [#allocation6], %s447
          %s449 = smul.u32 8, %s36
          %s451 = ssub.s32 256, 256
          %452 = vsyncadd %s445, %s451
          %s453 = sadd.s32 %s35, %s449
          %s454 = smul.addr %s453, 32
          %s455 = scalar_lea.hbm %s0, %s454
          %s456 = sshll.u32 %s448, 4
          %s457 = int_to_ptr.vmem [resolvable:$true] %s456
          %462 = dma.hbm_to_vmem [thread:$0]  %s455, 256, %s457, %s445, 32, 32, 2
        $region56: #{tpu_custom_call.1} parent=51 // pred_fallthru
          _
      $region52: #{tpu_custom_call.1} parent=5 // pred_fallthru
        _
      %p463 = scmp.le.s32.totalorder 1, %s28
      %p464 = scmp.lt.s32.totalorder %s28, 3
      %p465 = pnand %p463, %p464
      %p466 = pneg %p465
      // Predicated region
      $region57: #{tpu_custom_call.1} parent=5 // pred_check
        _
      $region58: #{tpu_custom_call.1} parent=5 // pred_check_branch
        %468 = sbr.rel (%p465) target = $region60
      $region59: #{tpu_custom_call.1} parent=5 // pred_region
        %s469 = ssub.s32 %s28, 1
        %s470 = sand.u32 %s55, 1
        %s471 = scalar_lea.sflag [#allocation7], %s470
        %s472 = sand.u32 %s55, 1
        %s473 = smul.addr %s472, 16
        %s474 = scalar_lea.vmem [#allocation6], %s473
        // Predicated region
        $region61: #{tpu_custom_call.1} parent=59 // pred_check
          %p475 = pneg %p68
        $region62: #{tpu_custom_call.1} parent=59 // pred_check_branch
          %477 = sbr.rel (%p475) target = $region64
        $region63: #{tpu_custom_call.1} parent=59 // pred_region
          %478 = dma.done %s471, 256
        $region64: #{tpu_custom_call.1} parent=59 // pred_fallthru
          _
        // Predicated region
        $region65: #{tpu_custom_call.1} parent=59 // pred_check
          %p479 = pneg %p89
        $region66: #{tpu_custom_call.1} parent=59 // pred_check_branch
          %481 = sbr.rel (%p479) target = $region68
        $region67: #{tpu_custom_call.1} parent=59 // pred_region
          %482 = dma.done [#allocation10], 256
        $region68: #{tpu_custom_call.1} parent=59 // pred_fallthru
          _
        // Predicated region
        $region69: #{tpu_custom_call.1} parent=59 // pred_check
          %p483 = pneg %p110
        $region70: #{tpu_custom_call.1} parent=59 // pred_check_branch
          %485 = sbr.rel (%p483) target = $region72
        $region71: #{tpu_custom_call.1} parent=59 // pred_region
          %486 = dma.done [#allocation10], 512
        $region72: #{tpu_custom_call.1} parent=59 // pred_fallthru
          _
        // Predicated region
        $region73: #{tpu_custom_call.1} parent=59 // pred_check
          %p487 = pneg %p131
        $region74: #{tpu_custom_call.1} parent=59 // pred_check_branch
          %489 = sbr.rel (%p487) target = $region76
        $region75: #{tpu_custom_call.1} parent=59 // pred_region
          %490 = dma.done [#allocation13], 1024
        $region76: #{tpu_custom_call.1} parent=59 // pred_fallthru
          _
        // Predicated region
        $region77: #{tpu_custom_call.1} parent=59 // pred_check
          %p491 = pneg %p194
        $region78: #{tpu_custom_call.1} parent=59 // pred_check_branch
          %493 = sbr.rel (%p491) target = $region80
        $region79: #{tpu_custom_call.1} parent=59 // pred_region
          %494 = dma.done [#allocation13], 512
        $region80: #{tpu_custom_call.1} parent=59 // pred_fallthru
          _
        %s495 = sand.u32 %s55, 1
        %s496 = scalar_lea.sflag [#allocation7], %s495
        %s497 = sand.u32 %s55, 1
        %s498 = smul.addr %s497, 16
        %s499 = scalar_lea.vmem [#allocation6], %s498
        %p500 = pneg %p68
        %p501 = pneg %p65
        %p502 = pneg %p89
        %p503 = pneg %p86
        %p504 = pneg %p110
        %p505 = pneg %p107
        %p506 = pneg %p131
        %p507 = pneg %p128
        %p508 = pneg %p152
        %p509 = pneg %p149
        %p510 = pneg %p173
        %p511 = pneg %p170
        %p512 = pneg %p194
        %p513 = pneg %p191
        %p514 = pneg %p215
        %p515 = pneg %p212
        %p516 = scmp.lt.s32.totalorder %s37, 0
        %s517 = scalar_select %p516, %s37, 0
        %s518 = smul.addr %s517, 2
        %s519 = scalar_lea.vmem %s8, %s518
        %p520 = pneg %p241
        %p521 = pneg %p238
        %p522 = scmp.lt.s32.totalorder %s37, 0
        %s523 = scalar_select %p522, %s37, 0
        %s524 = smul.addr %s523, 2
        %s525 = scalar_lea.vmem %s9, %s524
        %p526 = pneg %p267
        %p527 = pneg %p264
        %p528 = pneg %p295
        %p529 = pneg %p292
        %s530 = sand.u32 %s282, 1
        %s531 = scalar_lea.sflag [#allocation8], %s530
        %s532 = sand.u32 %s282, 1
        %s533 = smul.addr %s532, 16
        %s534 = scalar_lea.vmem [#allocation15], %s533
        %p535 = pneg %p321
        %p536 = pneg %p318
        %p537 = pneg %p347
        %p538 = pneg %p344
        %s539 = smul.u32 8, %s38
        %p540 = scmp.lt.s32.totalorder %s37, 0
        %s541 = scalar_select %p540, %s37, 0
        %s542 = smul.addr %s541, 2
        %s543 = scalar_lea.vmem %s8, %s542
        %p544 = scmp.lt.s32.totalorder %s37, 0
        %s545 = scalar_select %p544, %s37, 0
        %s546 = smul.addr %s545, 2
        %s547 = scalar_lea.vmem %s9, %s546
        %s548 = smul.u32 8, %s38
        %p549 = scmp.eq.s32.totalorder %s38, 0
        // Predicated region
        $region81: #{tpu_custom_call.1} parent=59 // pred_check
          %p550 = pneg %p549
        $region82: #{tpu_custom_call.1} parent=59 // pred_check_branch
          %552 = sbr.rel (%p550) target = $region84
        $region83: #{tpu_custom_call.1} parent=59 // pred_region
          %v553 = vld [vmem:[%s543] sm:$0x3]
          %v554 = vld [vmem:[%s543 + $0x2] sm:$0x3]
          %vm555 = vcmask 254976
          %556 = vst.msk [vmem:[#allocation2] sm:$0x3] %vm555, %v553
          %557 = vst.msk [vmem:[#allocation2 + $0x2] sm:$0x3] %vm555, %v554
          %v558 = vld [vmem:[%s547] sm:$0x3]
          %v559 = vld [vmem:[%s547 + $0x2] sm:$0x3]
          %560 = vst.msk [vmem:[#allocation3] sm:$0x3] %vm555, %v558
          %561 = vst.msk [vmem:[#allocation3 + $0x2] sm:$0x3] %vm555, %v559
        $region84: #{tpu_custom_call.1} parent=59 // pred_fallthru
          _
        %v562 = vld [vmem:[%s474] sm:$0x3]
        %v563 = vld [vmem:[%s474 + $0x2] sm:$0x3]
        %v564 = vld [vmem:[%s474 + $0x4] sm:$0x3]
        %v565 = vld [vmem:[%s474 + $0x6] sm:$0x3]
        %v566 = vld [vmem:[%s474 + $0x8] sm:$0x3]
        %v567 = vld [vmem:[%s474 + $0xa] sm:$0x3]
        %v568 = vld [vmem:[%s474 + $0xc] sm:$0x3]
        %v569 = vld [vmem:[%s474 + $0xe] sm:$0x3]
        %v570 = vld [vmem:[#allocation9] sm:$0xff]
        %v571 = vld [vmem:[#allocation9 + $0x8] sm:$0xff]
        %v572 = vld [vmem:[%s4] sm:$0x1]
        %v574 = vlaneseq
        %v575 = vshrl.u32 %v574, 7
        %v576 = vsub.s32 0, %v575
        %v577 = vrot.slane %v572, %v576
        %v587 = vcombine.low %v562, %v563
        %v588 = vcombine.low %v564, %v565
        %v590 = vunpack.c.l.s4 1983009808
        %v591 = vunpack.c.0.s8 %v590
        %v592 = vlaneseq
        %v593 = vshrl.u32 %v592, 7
        %v594 = vsub.s32 %v591, %v593
        %v595 = vrot.slane %v587, %v594
        %v597 = vunpack.c.l.s4 1983009808
        %v598 = vunpack.c.0.s8 %v597
        %v599 = vlaneseq
        %v600 = vshrl.u32 %v599, 7
        %v601 = vsub.s32 %v598, %v600
        %v602 = vrot.slane %v588, %v601
        %v603 = vcombine.low %v595, %v602
        %v604 = vcombine.low %v566, %v567
        %v605 = vcombine.low %v568, %v569
        %v607 = vunpack.c.l.s4 1983009808
        %v608 = vunpack.c.0.s8 %v607
        %v609 = vlaneseq
        %v610 = vshrl.u32 %v609, 7
        %v611 = vsub.s32 %v608, %v610
        %v612 = vrot.slane %v604, %v611
        %v614 = vunpack.c.l.s4 1983009808
        %v615 = vunpack.c.0.s8 %v614
        %v616 = vlaneseq
        %v617 = vshrl.u32 %v616, 7
        %v618 = vsub.s32 %v615, %v617
        %v619 = vrot.slane %v605, %v618
        %v620 = vcombine.low %v612, %v619
        %vm621 = vcmask 130048
        %v622 = vsel %vm621, %v603, 0
        %v624 = vsel %vm621, %v620, 0
        %626 = vmatprep.subr.mxu0 0.0
        %627 = vmatpush1.msra.mxu0 %v570
        %628 = vmatprep.subr.mxu0 0.0
        %629 = vmatpush1.msra.mxu0 %v571
        %630 = vmatprep.subr.mxu0 0.0
        %631 = vmatpush1.msra.mxu0 0.0
        %632 = vmatprep.subr.mxu0 0.0
        %633 = vmatpush1.msra.mxu0 0.0
        %634 = vmatprep.subr.mxu0 0.0
        %635 = vmatpush1.msra.mxu0 0.0
        %636 = vmatprep.subr.mxu0 0.0
        %637 = vmatpush1.msra.mxu0 0.0
        %638 = vmatprep.subr.mxu0 0.0
        %639 = vmatpush1.msra.mxu0 0.0
        %640 = vmatprep.subr.mxu0 0.0
        %641 = vmatpush1.msra.mxu0 0.0
        %642 = vmatprep.subr.mxu0 0.0
        %643 = vmatpush1.msra.mxu0 0.0
        %644 = vmatprep.subr.mxu0 0.0
        %645 = vmatpush1.msra.mxu0 0.0
        %646 = vmatprep.subr.mxu0 0.0
        %647 = vmatpush1.msra.mxu0 0.0
        %648 = vmatprep.subr.mxu0 0.0
        %649 = vmatpush1.msra.mxu0 0.0
        %650 = vmatprep.subr.mxu0 0.0
        %651 = vmatpush1.msra.mxu0 0.0
        %652 = vmatprep.subr.mxu0 0.0
        %653 = vmatpush1.msra.mxu0 0.0
        %654 = vmatprep.subr.mxu0 0.0
        %655 = vmatpush1.msra.mxu0 0.0
        %656 = vmatprep.subr.mxu0 0.0
        %657 = vmatpush1.msra.mxu0 0.0
        %658 = vmatprep.subr.mxu0 0.0
        %659 = vmatpush1.msra.mxu0 0.0
        %660 = vmatprep.subr.mxu0 0.0
        %661 = vmatpush1.msra.mxu0 0.0
        %662 = vmatprep.subr.mxu0 0.0
        %663 = vmatpush1.msra.mxu0 0.0
        %664 = vmatprep.subr.mxu0 0.0
        %665 = vmatpush1.msra.mxu0 0.0
        %666 = vmatprep.subr.mxu0 0.0
        %667 = vmatpush1.msra.mxu0 0.0
        %668 = vmatprep.subr.mxu0 0.0
        %669 = vmatpush1.msra.mxu0 0.0
        %670 = vmatprep.subr.mxu0 0.0
        %671 = vmatpush1.msra.mxu0 0.0
        %672 = vmatprep.subr.mxu0 0.0
        %673 = vmatpush1.msra.mxu0 0.0
        %674 = vmatprep.subr.mxu0 0.0
        %675 = vmatpush1.msra.mxu0 0.0
        %676 = vmatprep.subr.mxu0 0.0
        %677 = vmatpush1.msra.mxu0 0.0
        %678 = vmatprep.subr.mxu0 0.0
        %679 = vmatpush1.msra.mxu0 0.0
        %680 = vmatprep.subr.mxu0 0.0
        %681 = vmatpush1.msra.mxu0 0.0
        %682 = vmatprep.subr.mxu0 0.0
        %683 = vmatpush1.msra.mxu0 0.0
        %684 = vmatprep.subr.mxu0 0.0
        %685 = vmatpush1.msra.mxu0 0.0
        %686 = vmatprep.subr.mxu0 0.0
        %687 = vmatpush1.msra.mxu0 0.0
        %688 = vmatprep.subr.mxu0 0.0
        %689 = vmatpush1.msra.mxu0 0.0
        %690 = vmatprep.mubr.f32.mxu0 0.0
        %691 = vmatmul.mubr.f32.gmra.mrb[0].mxu0 %v622
        %v692 = vpop.f32.mrb[0].mxu0
        %v693 = vadd.f32 %v577, %v692
        %v694 = vpop.f32.mrb[0].mxu0
        %695 = vmatprep.mubr.f32.mxu0 0.0
        %696 = vmatmul.mubr.f32.gmra.mrb[0].mxu0 %v624
        %v697 = vpop.f32.mrb[0].mxu0
        %v698 = vadd.f32 %v577, %v697
        %v699 = vpop.f32.mrb[0].mxu0
        %700 = vdwg.mxu0
        %v703 = vcombine.high %v693, %v693
        %v705 = vunpack.c.l.s4 1983009808
        %v706 = vunpack.c.0.s8 %v705
        %v707 = vlaneseq
        %v708 = vshrl.u32 %v707, 7
        %v709 = vsub.s32 %v706, %v708
        %v710 = vrot.slane %v693, %v709
        %v712 = vunpack.c.l.s4 1983009808
        %v713 = vunpack.c.0.s8 %v712
        %v714 = vlaneseq
        %v715 = vshrl.u32 %v714, 7
        %v716 = vsub.s32 %v713, %v715
        %v717 = vrot.slane %v703, %v716
        %v718 = vcombine.high %v710, %v710
        %v719 = vcombine.high %v717, %v717
        %v720 = vcombine.high %v698, %v698
        %v722 = vunpack.c.l.s4 1983009808
        %v723 = vunpack.c.0.s8 %v722
        %v724 = vlaneseq
        %v725 = vshrl.u32 %v724, 7
        %v726 = vsub.s32 %v723, %v725
        %v727 = vrot.slane %v698, %v726
        %v729 = vunpack.c.l.s4 1983009808
        %v730 = vunpack.c.0.s8 %v729
        %v731 = vlaneseq
        %v732 = vshrl.u32 %v731, 7
        %v733 = vsub.s32 %v730, %v732
        %v734 = vrot.slane %v720, %v733
        %v735 = vcombine.high %v727, %v727
        %v736 = vcombine.high %v734, %v734
        %745 = vst [vmem:[#allocation4] sm:$0x3] %v710
        %746 = vst [vmem:[#allocation4 + $0x2] sm:$0x3] %v718
        %747 = vst [vmem:[#allocation4 + $0x4] sm:$0x3] %v717
        %748 = vst [vmem:[#allocation4 + $0x6] sm:$0x3] %v719
        %749 = vst [vmem:[#allocation4 + $0x8] sm:$0x3] %v727
        %750 = vst [vmem:[#allocation4 + $0xa] sm:$0x3] %v735
        %751 = vst [vmem:[#allocation4 + $0xc] sm:$0x3] %v734
        %752 = vst [vmem:[#allocation4 + $0xe] sm:$0x3] %v736
        %v753 = vld [vmem:[%s5] sm:$0x1]
        %v755 = vlaneseq
        %v756 = vshrl.u32 %v755, 7
        %v757 = vsub.s32 0, %v756
        %v758 = vrot.slane %v753, %v757
        %v760 = vld [vmem:[#allocation2] sm:$0x3]
        %v761 = vld [vmem:[#allocation3] sm:$0x3]
        %s762 = scalar_lea.vmem [#allocation2], 2
        %v763 = vld [vmem:[%s762] sm:$0x3]
        %s764 = scalar_lea.vmem [#allocation3], 2
        %v765 = vld [vmem:[%s764] sm:$0x3]
        %v766 = vld [vmem:[#allocation4] sm:$0x3]
        %v767 = vld [vmem:[#allocation11] sm:$0xff]
        %v768 = vld [vmem:[#allocation11 + $0x8] sm:$0xff]
        %v769 = vld [vmem:[#allocation11 + $0x10] sm:$0xff]
        %v770 = vld [vmem:[#allocation11 + $0x18] sm:$0xff]
        %vm771 = vcmask 261120
        %v773 = vsel %vm771, %v760, 0
        %775 = vmatprep.subr.mxu0 0.0
        %776 = vmatpush1.msra.mxu0 %v767
        %777 = vmatprep.subr.mxu0 0.0
        %778 = vmatpush1.msra.mxu0 %v768
        %779 = vmatprep.subr.mxu0 0.0
        %780 = vmatpush1.msra.mxu0 %v769
        %781 = vmatprep.subr.mxu0 0.0
        %782 = vmatpush1.msra.mxu0 %v770
        %783 = vmatprep.subr.mxu0 0.0
        %784 = vmatpush1.msra.mxu0 0.0
        %785 = vmatprep.subr.mxu0 0.0
        %786 = vmatpush1.msra.mxu0 0.0
        %787 = vmatprep.subr.mxu0 0.0
        %788 = vmatpush1.msra.mxu0 0.0
        %789 = vmatprep.subr.mxu0 0.0
        %790 = vmatpush1.msra.mxu0 0.0
        %791 = vmatprep.subr.mxu0 0.0
        %792 = vmatpush1.msra.mxu0 0.0
        %793 = vmatprep.subr.mxu0 0.0
        %794 = vmatpush1.msra.mxu0 0.0
        %795 = vmatprep.subr.mxu0 0.0
        %796 = vmatpush1.msra.mxu0 0.0
        %797 = vmatprep.subr.mxu0 0.0
        %798 = vmatpush1.msra.mxu0 0.0
        %799 = vmatprep.subr.mxu0 0.0
        %800 = vmatpush1.msra.mxu0 0.0
        %801 = vmatprep.subr.mxu0 0.0
        %802 = vmatpush1.msra.mxu0 0.0
        %803 = vmatprep.subr.mxu0 0.0
        %804 = vmatpush1.msra.mxu0 0.0
        %805 = vmatprep.subr.mxu0 0.0
        %806 = vmatpush1.msra.mxu0 0.0
        %807 = vmatprep.subr.mxu0 0.0
        %808 = vmatpush1.msra.mxu0 0.0
        %809 = vmatprep.subr.mxu0 0.0
        %810 = vmatpush1.msra.mxu0 0.0
        %811 = vmatprep.subr.mxu0 0.0
        %812 = vmatpush1.msra.mxu0 0.0
        %813 = vmatprep.subr.mxu0 0.0
        %814 = vmatpush1.msra.mxu0 0.0
        %815 = vmatprep.subr.mxu0 0.0
        %816 = vmatpush1.msra.mxu0 0.0
        %817 = vmatprep.subr.mxu0 0.0
        %818 = vmatpush1.msra.mxu0 0.0
        %819 = vmatprep.subr.mxu0 0.0
        %820 = vmatpush1.msra.mxu0 0.0
        %821 = vmatprep.subr.mxu0 0.0
        %822 = vmatpush1.msra.mxu0 0.0
        %823 = vmatprep.subr.mxu0 0.0
        %824 = vmatpush1.msra.mxu0 0.0
        %825 = vmatprep.subr.mxu0 0.0
        %826 = vmatpush1.msra.mxu0 0.0
        %827 = vmatprep.subr.mxu0 0.0
        %828 = vmatpush1.msra.mxu0 0.0
        %829 = vmatprep.subr.mxu0 0.0
        %830 = vmatpush1.msra.mxu0 0.0
        %831 = vmatprep.subr.mxu0 0.0
        %832 = vmatpush1.msra.mxu0 0.0
        %833 = vmatprep.subr.mxu0 0.0
        %834 = vmatpush1.msra.mxu0 0.0
        %835 = vmatprep.subr.mxu0 0.0
        %836 = vmatpush1.msra.mxu0 0.0
        %837 = vmatprep.subr.mxu0 0.0
        %838 = vmatpush1.msra.mxu0 0.0
        %839 = vmatprep.mubr.f32.mxu0 0.0
        %840 = vmatmul.mubr.f32.gmra.mrb[0].mxu0 %v773
        %v841 = vpop.f32.mrb[0].mxu0
        %v842 = vadd.f32 0.0, %v841
        %v843 = vpop.f32.mrb[0].mxu0
        %844 = vdwg.mxu0
        %v845 = vadd.f32 %v766, %v842
        %v846 = vmul.f32 %v845, 0.5
        %v847 = vtanh.pop %v846
        %v848 = vmul.f32 %v847, 0.5
        %v849 = vadd.f32 %v848, 0.5
        %v850 = vtanh.pop %v845
        %852 = vrot.lane.b32.xlu0 %v761, 32
        %v853 = vpop.permute.xlu0 %852
        %v855 = vmul.f32 %v849, %v853
        %857 = vrot.lane.b32.xlu0 %v850, 64
        %v858 = vpop.permute.xlu0 %857
        %v860 = vmul.f32 %v849, %v858
        %862 = vrot.lane.b32.xlu0 %v860, 32
        %v863 = vpop.permute.xlu0 %862
        %v865 = vadd.f32 %v855, %v863
        %v866 = vtanh.pop %v865
        %868 = vrot.lane.b32.xlu0 %v866, 64
        %v869 = vpop.permute.xlu0 %868
        %v871 = vmul.f32 %v849, %v869
        %873 = vrot.lane.b32.xlu0 %v871, 32
        %v874 = vpop.permute.xlu0 %873
        %877 = vrot.lane.b32.xlu0 %v763, 32
        %v878 = vpop.permute.xlu0 %877
        %v880 = vsel %vm771, %v874, %v878
        %v881 = vld [vmem:[#allocation12] sm:$0xff]
        %v882 = vld [vmem:[#allocation12 + $0x8] sm:$0xff]
        %v883 = vld [vmem:[#allocation12 + $0x10] sm:$0xff]
        %v884 = vld [vmem:[#allocation12 + $0x18] sm:$0xff]
        %v885 = vld [vmem:[#allocation12 + $0x20] sm:$0xff]
        %v886 = vld [vmem:[#allocation12 + $0x28] sm:$0xff]
        %v887 = vld [vmem:[#allocation12 + $0x30] sm:$0xff]
        %v888 = vld [vmem:[#allocation12 + $0x38] sm:$0xff]
        %vm889 = vcmask 523264
        %v891 = vsel %vm889, %v880, 0
        %893 = vmatprep.subr.mxu0 0.0
        %894 = vmatpush1.msra.mxu0 %v881
        %895 = vmatprep.subr.mxu0 0.0
        %896 = vmatpush1.msra.mxu0 %v882
        %897 = vmatprep.subr.mxu0 0.0
        %898 = vmatpush1.msra.mxu0 %v883
        %899 = vmatprep.subr.mxu0 0.0
        %900 = vmatpush1.msra.mxu0 %v884
        %901 = vmatprep.subr.mxu0 0.0
        %902 = vmatpush1.msra.mxu0 %v885
        %903 = vmatprep.subr.mxu0 0.0
        %904 = vmatpush1.msra.mxu0 %v886
        %905 = vmatprep.subr.mxu0 0.0
        %906 = vmatpush1.msra.mxu0 %v887
        %907 = vmatprep.subr.mxu0 0.0
        %908 = vmatpush1.msra.mxu0 %v888
        %909 = vmatprep.subr.mxu0 0.0
        %910 = vmatpush1.msra.mxu0 0.0
        %911 = vmatprep.subr.mxu0 0.0
        %912 = vmatpush1.msra.mxu0 0.0
        %913 = vmatprep.subr.mxu0 0.0
        %914 = vmatpush1.msra.mxu0 0.0
        %915 = vmatprep.subr.mxu0 0.0
        %916 = vmatpush1.msra.mxu0 0.0
        %917 = vmatprep.subr.mxu0 0.0
        %918 = vmatpush1.msra.mxu0 0.0
        %919 = vmatprep.subr.mxu0 0.0
        %920 = vmatpush1.msra.mxu0 0.0
        %921 = vmatprep.subr.mxu0 0.0
        %922 = vmatpush1.msra.mxu0 0.0
        %923 = vmatprep.subr.mxu0 0.0
        %924 = vmatpush1.msra.mxu0 0.0
        %925 = vmatprep.subr.mxu0 0.0
        %926 = vmatpush1.msra.mxu0 0.0
        %927 = vmatprep.subr.mxu0 0.0
        %928 = vmatpush1.msra.mxu0 0.0
        %929 = vmatprep.subr.mxu0 0.0
        %930 = vmatpush1.msra.mxu0 0.0
        %931 = vmatprep.subr.mxu0 0.0
        %932 = vmatpush1.msra.mxu0 0.0
        %933 = vmatprep.subr.mxu0 0.0
        %934 = vmatpush1.msra.mxu0 0.0
        %935 = vmatprep.subr.mxu0 0.0
        %936 = vmatpush1.msra.mxu0 0.0
        %937 = vmatprep.subr.mxu0 0.0
        %938 = vmatpush1.msra.mxu0 0.0
        %939 = vmatprep.subr.mxu0 0.0
        %940 = vmatpush1.msra.mxu0 0.0
        %941 = vmatprep.subr.mxu0 0.0
        %942 = vmatpush1.msra.mxu0 0.0
        %943 = vmatprep.subr.mxu0 0.0
        %944 = vmatpush1.msra.mxu0 0.0
        %945 = vmatprep.subr.mxu0 0.0
        %946 = vmatpush1.msra.mxu0 0.0
        %947 = vmatprep.subr.mxu0 0.0
        %948 = vmatpush1.msra.mxu0 0.0
        %949 = vmatprep.subr.mxu0 0.0
        %950 = vmatpush1.msra.mxu0 0.0
        %951 = vmatprep.subr.mxu0 0.0
        %952 = vmatpush1.msra.mxu0 0.0
        %953 = vmatprep.subr.mxu0 0.0
        %954 = vmatpush1.msra.mxu0 0.0
        %955 = vmatprep.subr.mxu0 0.0
        %956 = vmatpush1.msra.mxu0 0.0
        %957 = vmatprep.mubr.f32.mxu0 0.0
        %958 = vmatmul.mubr.f32.gmra.mrb[0].mxu0 %v891
        %v959 = vpop.f32.mrb[0].mxu0
        %v960 = vadd.f32 %v758, %v959
        %v961 = vpop.f32.mrb[0].mxu0
        %962 = vdwg.mxu0
        %v963 = vmul.f32 %v960, 0.5
        %v964 = vtanh.pop %v963
        %v965 = vmul.f32 %v964, 0.5
        %v966 = vadd.f32 %v965, 0.5
        %v967 = vtanh.pop %v960
        %969 = vrot.lane.b32.xlu0 %v765, 32
        %v970 = vpop.permute.xlu0 %969
        %v972 = vmul.f32 %v966, %v970
        %974 = vrot.lane.b32.xlu0 %v967, 64
        %v975 = vpop.permute.xlu0 %974
        %v977 = vmul.f32 %v966, %v975
        %979 = vrot.lane.b32.xlu0 %v977, 32
        %v980 = vpop.permute.xlu0 %979
        %v982 = vadd.f32 %v972, %v980
        %v983 = vtanh.pop %v982
        %985 = vrot.lane.b32.xlu0 %v983, 64
        %v986 = vpop.permute.xlu0 %985
        %v988 = vmul.f32 %v966, %v986
        %990 = vrot.lane.b32.xlu0 %v988, 32
        %v991 = vpop.permute.xlu0 %990
        %vm993 = vcmask 254976
        %994 = vst.msk [vmem:[#allocation5] sm:$0x3] %vm993, %v991
        %s995 = scalar_lea.vmem [#allocation4], 2
        %v996 = vld [vmem:[%s995] sm:$0x3]
        %v997 = vld [vmem:[#allocation11] sm:$0xff]
        %v998 = vld [vmem:[#allocation11 + $0x8] sm:$0xff]
        %v999 = vld [vmem:[#allocation11 + $0x10] sm:$0xff]
        %v1000 = vld [vmem:[#allocation11 + $0x18] sm:$0xff]
        %v1001 = vsel %vm771, %v874, 0
        %1003 = vmatprep.subr.mxu0 0.0
        %1004 = vmatpush1.msra.mxu0 %v997
        %1005 = vmatprep.subr.mxu0 0.0
        %1006 = vmatpush1.msra.mxu0 %v998
        %1007 = vmatprep.subr.mxu0 0.0
        %1008 = vmatpush1.msra.mxu0 %v999
        %1009 = vmatprep.subr.mxu0 0.0
        %1010 = vmatpush1.msra.mxu0 %v1000
        %1011 = vmatprep.subr.mxu0 0.0
        %1012 = vmatpush1.msra.mxu0 0.0
        %1013 = vmatprep.subr.mxu0 0.0
        %1014 = vmatpush1.msra.mxu0 0.0
        %1015 = vmatprep.subr.mxu0 0.0
        %1016 = vmatpush1.msra.mxu0 0.0
        %1017 = vmatprep.subr.mxu0 0.0
        %1018 = vmatpush1.msra.mxu0 0.0
        %1019 = vmatprep.subr.mxu0 0.0
        %1020 = vmatpush1.msra.mxu0 0.0
        %1021 = vmatprep.subr.mxu0 0.0
        %1022 = vmatpush1.msra.mxu0 0.0
        %1023 = vmatprep.subr.mxu0 0.0
        %1024 = vmatpush1.msra.mxu0 0.0
        %1025 = vmatprep.subr.mxu0 0.0
        %1026 = vmatpush1.msra.mxu0 0.0
        %1027 = vmatprep.subr.mxu0 0.0
        %1028 = vmatpush1.msra.mxu0 0.0
        %1029 = vmatprep.subr.mxu0 0.0
        %1030 = vmatpush1.msra.mxu0 0.0
        %1031 = vmatprep.subr.mxu0 0.0
        %1032 = vmatpush1.msra.mxu0 0.0
        %1033 = vmatprep.subr.mxu0 0.0
        %1034 = vmatpush1.msra.mxu0 0.0
        %1035 = vmatprep.subr.mxu0 0.0
        %1036 = vmatpush1.msra.mxu0 0.0
        %1037 = vmatprep.subr.mxu0 0.0
        %1038 = vmatpush1.msra.mxu0 0.0
        %1039 = vmatprep.subr.mxu0 0.0
        %1040 = vmatpush1.msra.mxu0 0.0
        %1041 = vmatprep.subr.mxu0 0.0
        %1042 = vmatpush1.msra.mxu0 0.0
        %1043 = vmatprep.subr.mxu0 0.0
        %1044 = vmatpush1.msra.mxu0 0.0
        %1045 = vmatprep.subr.mxu0 0.0
        %1046 = vmatpush1.msra.mxu0 0.0
        %1047 = vmatprep.subr.mxu0 0.0
        %1048 = vmatpush1.msra.mxu0 0.0
        %1049 = vmatprep.subr.mxu0 0.0
        %1050 = vmatpush1.msra.mxu0 0.0
        %1051 = vmatprep.subr.mxu0 0.0
        %1052 = vmatpush1.msra.mxu0 0.0
        %1053 = vmatprep.subr.mxu0 0.0
        %1054 = vmatpush1.msra.mxu0 0.0
        %1055 = vmatprep.subr.mxu0 0.0
        %1056 = vmatpush1.msra.mxu0 0.0
        %1057 = vmatprep.subr.mxu0 0.0
        %1058 = vmatpush1.msra.mxu0 0.0
        %1059 = vmatprep.subr.mxu0 0.0
        %1060 = vmatpush1.msra.mxu0 0.0
        %1061 = vmatprep.subr.mxu0 0.0
        %1062 = vmatpush1.msra.mxu0 0.0
        %1063 = vmatprep.subr.mxu0 0.0
        %1064 = vmatpush1.msra.mxu0 0.0
        %1065 = vmatprep.subr.mxu0 0.0
        %1066 = vmatpush1.msra.mxu0 0.0
        %1067 = vmatprep.mubr.f32.mxu0 0.0
        %1068 = vmatmul.mubr.f32.gmra.mrb[0].mxu0 %v1001
        %v1069 = vpop.f32.mrb[0].mxu0
        %v1070 = vadd.f32 0.0, %v1069
        %v1071 = vpop.f32.mrb[0].mxu0
        %1072 = vdwg.mxu0
        %v1073 = vadd.f32 %v996, %v1070
        %v1074 = vmul.f32 %v1073, 0.5
        %v1075 = vtanh.pop %v1074
        %v1076 = vmul.f32 %v1075, 0.5
        %v1077 = vadd.f32 %v1076, 0.5
        %v1078 = vtanh.pop %v1073
        %v1079 = vmul.f32 %v1077, %v865
        %1081 = vrot.lane.b32.xlu0 %v1078, 64
        %v1082 = vpop.permute.xlu0 %1081
        %v1084 = vmul.f32 %v1077, %v1082
        %1086 = vrot.lane.b32.xlu0 %v1084, 32
        %v1087 = vpop.permute.xlu0 %1086
        %v1089 = vadd.f32 %v1079, %v1087
        %v1090 = vtanh.pop %v1089
        %1092 = vrot.lane.b32.xlu0 %v1090, 64
        %v1093 = vpop.permute.xlu0 %1092
        %v1095 = vmul.f32 %v1077, %v1093
        %1097 = vrot.lane.b32.xlu0 %v1095, 32
        %v1098 = vpop.permute.xlu0 %1097
        %1100 = vrot.lane.b32.xlu0 %v988, 64
        %v1101 = vpop.permute.xlu0 %1100
        %v1103 = vsel %vm771, %v1098, %v1101
        %v1104 = vld [vmem:[#allocation12] sm:$0xff]
        %v1105 = vld [vmem:[#allocation12 + $0x8] sm:$0xff]
        %v1106 = vld [vmem:[#allocation12 + $0x10] sm:$0xff]
        %v1107 = vld [vmem:[#allocation12 + $0x18] sm:$0xff]
        %v1108 = vld [vmem:[#allocation12 + $0x20] sm:$0xff]
        %v1109 = vld [vmem:[#allocation12 + $0x28] sm:$0xff]
        %v1110 = vld [vmem:[#allocation12 + $0x30] sm:$0xff]
        %v1111 = vld [vmem:[#allocation12 + $0x38] sm:$0xff]
        %v1113 = vsel %vm889, %v1103, 0
        %1115 = vmatprep.subr.mxu0 0.0
        %1116 = vmatpush1.msra.mxu0 %v1104
        %1117 = vmatprep.subr.mxu0 0.0
        %1118 = vmatpush1.msra.mxu0 %v1105
        %1119 = vmatprep.subr.mxu0 0.0
        %1120 = vmatpush1.msra.mxu0 %v1106
        %1121 = vmatprep.subr.mxu0 0.0
        %1122 = vmatpush1.msra.mxu0 %v1107
        %1123 = vmatprep.subr.mxu0 0.0
        %1124 = vmatpush1.msra.mxu0 %v1108
        %1125 = vmatprep.subr.mxu0 0.0
        %1126 = vmatpush1.msra.mxu0 %v1109
        %1127 = vmatprep.subr.mxu0 0.0
        %1128 = vmatpush1.msra.mxu0 %v1110
        %1129 = vmatprep.subr.mxu0 0.0
        %1130 = vmatpush1.msra.mxu0 %v1111
        %1131 = vmatprep.subr.mxu0 0.0
        %1132 = vmatpush1.msra.mxu0 0.0
        %1133 = vmatprep.subr.mxu0 0.0
        %1134 = vmatpush1.msra.mxu0 0.0
        %1135 = vmatprep.subr.mxu0 0.0
        %1136 = vmatpush1.msra.mxu0 0.0
        %1137 = vmatprep.subr.mxu0 0.0
        %1138 = vmatpush1.msra.mxu0 0.0
        %1139 = vmatprep.subr.mxu0 0.0
        %1140 = vmatpush1.msra.mxu0 0.0
        %1141 = vmatprep.subr.mxu0 0.0
        %1142 = vmatpush1.msra.mxu0 0.0
        %1143 = vmatprep.subr.mxu0 0.0
        %1144 = vmatpush1.msra.mxu0 0.0
        %1145 = vmatprep.subr.mxu0 0.0
        %1146 = vmatpush1.msra.mxu0 0.0
        %1147 = vmatprep.subr.mxu0 0.0
        %1148 = vmatpush1.msra.mxu0 0.0
        %1149 = vmatprep.subr.mxu0 0.0
        %1150 = vmatpush1.msra.mxu0 0.0
        %1151 = vmatprep.subr.mxu0 0.0
        %1152 = vmatpush1.msra.mxu0 0.0
        %1153 = vmatprep.subr.mxu0 0.0
        %1154 = vmatpush1.msra.mxu0 0.0
        %1155 = vmatprep.subr.mxu0 0.0
        %1156 = vmatpush1.msra.mxu0 0.0
        %1157 = vmatprep.subr.mxu0 0.0
        %1158 = vmatpush1.msra.mxu0 0.0
        %1159 = vmatprep.subr.mxu0 0.0
        %1160 = vmatpush1.msra.mxu0 0.0
        %1161 = vmatprep.subr.mxu0 0.0
        %1162 = vmatpush1.msra.mxu0 0.0
        %1163 = vmatprep.subr.mxu0 0.0
        %1164 = vmatpush1.msra.mxu0 0.0
        %1165 = vmatprep.subr.mxu0 0.0
        %1166 = vmatpush1.msra.mxu0 0.0
        %1167 = vmatprep.subr.mxu0 0.0
        %1168 = vmatpush1.msra.mxu0 0.0
        %1169 = vmatprep.subr.mxu0 0.0
        %1170 = vmatpush1.msra.mxu0 0.0
        %1171 = vmatprep.subr.mxu0 0.0
        %1172 = vmatpush1.msra.mxu0 0.0
        %1173 = vmatprep.subr.mxu0 0.0
        %1174 = vmatpush1.msra.mxu0 0.0
        %1175 = vmatprep.subr.mxu0 0.0
        %1176 = vmatpush1.msra.mxu0 0.0
        %1177 = vmatprep.subr.mxu0 0.0
        %1178 = vmatpush1.msra.mxu0 0.0
        %1179 = vmatprep.mubr.f32.mxu0 0.0
        %1180 = vmatmul.mubr.f32.gmra.mrb[0].mxu0 %v1113
        %v1181 = vpop.f32.mrb[0].mxu0
        %v1182 = vadd.f32 %v758, %v1181
        %v1183 = vpop.f32.mrb[0].mxu0
        %1184 = vdwg.mxu0
        %v1185 = vmul.f32 %v1182, 0.5
        %v1186 = vtanh.pop %v1185
        %v1187 = vmul.f32 %v1186, 0.5
        %v1188 = vadd.f32 %v1187, 0.5
        %v1189 = vtanh.pop %v1182
        %v1190 = vmul.f32 %v1188, %v982
        %1192 = vrot.lane.b32.xlu0 %v1189, 64
        %v1193 = vpop.permute.xlu0 %1192
        %v1195 = vmul.f32 %v1188, %v1193
        %1197 = vrot.lane.b32.xlu0 %v1195, 32
        %v1198 = vpop.permute.xlu0 %1197
        %v1200 = vadd.f32 %v1190, %v1198
        %v1201 = vtanh.pop %v1200
        %1203 = vrot.lane.b32.xlu0 %v1201, 64
        %v1204 = vpop.permute.xlu0 %1203
        %v1206 = vmul.f32 %v1188, %v1204
        %1208 = vrot.lane.b32.xlu0 %v1206, 32
        %v1209 = vpop.permute.xlu0 %1208
        %s1211 = scalar_lea.vmem [#allocation5], 2
        %1212 = vst.msk [vmem:[%s1211] sm:$0x3] %vm993, %v1209
        %s1213 = scalar_lea.vmem [#allocation4], 4
        %v1214 = vld [vmem:[%s1213] sm:$0x3]
        %v1215 = vld [vmem:[#allocation11] sm:$0xff]
        %v1216 = vld [vmem:[#allocation11 + $0x8] sm:$0xff]
        %v1217 = vld [vmem:[#allocation11 + $0x10] sm:$0xff]
        %v1218 = vld [vmem:[#allocation11 + $0x18] sm:$0xff]
        %v1219 = vsel %vm771, %v1098, 0
        %1221 = vmatprep.subr.mxu0 0.0
        %1222 = vmatpush1.msra.mxu0 %v1215
        %1223 = vmatprep.subr.mxu0 0.0
        %1224 = vmatpush1.msra.mxu0 %v1216
        %1225 = vmatprep.subr.mxu0 0.0
        %1226 = vmatpush1.msra.mxu0 %v1217
        %1227 = vmatprep.subr.mxu0 0.0
        %1228 = vmatpush1.msra.mxu0 %v1218
        %1229 = vmatprep.subr.mxu0 0.0
        %1230 = vmatpush1.msra.mxu0 0.0
        %1231 = vmatprep.subr.mxu0 0.0
        %1232 = vmatpush1.msra.mxu0 0.0
        %1233 = vmatprep.subr.mxu0 0.0
        %1234 = vmatpush1.msra.mxu0 0.0
        %1235 = vmatprep.subr.mxu0 0.0
        %1236 = vmatpush1.msra.mxu0 0.0
        %1237 = vmatprep.subr.mxu0 0.0
        %1238 = vmatpush1.msra.mxu0 0.0
        %1239 = vmatprep.subr.mxu0 0.0
        %1240 = vmatpush1.msra.mxu0 0.0
        %1241 = vmatprep.subr.mxu0 0.0
        %1242 = vmatpush1.msra.mxu0 0.0
        %1243 = vmatprep.subr.mxu0 0.0
        %1244 = vmatpush1.msra.mxu0 0.0
        %1245 = vmatprep.subr.mxu0 0.0
        %1246 = vmatpush1.msra.mxu0 0.0
        %1247 = vmatprep.subr.mxu0 0.0
        %1248 = vmatpush1.msra.mxu0 0.0
        %1249 = vmatprep.subr.mxu0 0.0
        %1250 = vmatpush1.msra.mxu0 0.0
        %1251 = vmatprep.subr.mxu0 0.0
        %1252 = vmatpush1.msra.mxu0 0.0
        %1253 = vmatprep.subr.mxu0 0.0
        %1254 = vmatpush1.msra.mxu0 0.0
        %1255 = vmatprep.subr.mxu0 0.0
        %1256 = vmatpush1.msra.mxu0 0.0
        %1257 = vmatprep.subr.mxu0 0.0
        %1258 = vmatpush1.msra.mxu0 0.0
        %1259 = vmatprep.subr.mxu0 0.0
        %1260 = vmatpush1.msra.mxu0 0.0
        %1261 = vmatprep.subr.mxu0 0.0
        %1262 = vmatpush1.msra.mxu0 0.0
        %1263 = vmatprep.subr.mxu0 0.0
        %1264 = vmatpush1.msra.mxu0 0.0
        %1265 = vmatprep.subr.mxu0 0.0
        %1266 = vmatpush1.msra.mxu0 0.0
        %1267 = vmatprep.subr.mxu0 0.0
        %1268 = vmatpush1.msra.mxu0 0.0
        %1269 = vmatprep.subr.mxu0 0.0
        %1270 = vmatpush1.msra.mxu0 0.0
        %1271 = vmatprep.subr.mxu0 0.0
        %1272 = vmatpush1.msra.mxu0 0.0
        %1273 = vmatprep.subr.mxu0 0.0
        %1274 = vmatpush1.msra.mxu0 0.0
        %1275 = vmatprep.subr.mxu0 0.0
        %1276 = vmatpush1.msra.mxu0 0.0
        %1277 = vmatprep.subr.mxu0 0.0
        %1278 = vmatpush1.msra.mxu0 0.0
        %1279 = vmatprep.subr.mxu0 0.0
        %1280 = vmatpush1.msra.mxu0 0.0
        %1281 = vmatprep.subr.mxu0 0.0
        %1282 = vmatpush1.msra.mxu0 0.0
        %1283 = vmatprep.subr.mxu0 0.0
        %1284 = vmatpush1.msra.mxu0 0.0
        %1285 = vmatprep.mubr.f32.mxu0 0.0
        %1286 = vmatmul.mubr.f32.gmra.mrb[0].mxu0 %v1219
        %v1287 = vpop.f32.mrb[0].mxu0
        %v1288 = vadd.f32 0.0, %v1287
        %v1289 = vpop.f32.mrb[0].mxu0
        %1290 = vdwg.mxu0
        %v1291 = vadd.f32 %v1214, %v1288
        %v1292 = vmul.f32 %v1291, 0.5
        %v1293 = vtanh.pop %v1292
        %v1294 = vmul.f32 %v1293, 0.5
        %v1295 = vadd.f32 %v1294, 0.5
        %v1296 = vtanh.pop %v1291
        %v1297 = vmul.f32 %v1295, %v1089
        %1299 = vrot.lane.b32.xlu0 %v1296, 64
        %v1300 = vpop.permute.xlu0 %1299
        %v1302 = vmul.f32 %v1295, %v1300
        %1304 = vrot.lane.b32.xlu0 %v1302, 32
        %v1305 = vpop.permute.xlu0 %1304
        %v1307 = vadd.f32 %v1297, %v1305
        %v1308 = vtanh.pop %v1307
        %1310 = vrot.lane.b32.xlu0 %v1308, 64
        %v1311 = vpop.permute.xlu0 %1310
        %v1313 = vmul.f32 %v1295, %v1311
        %1315 = vrot.lane.b32.xlu0 %v1313, 32
        %v1316 = vpop.permute.xlu0 %1315
        %1318 = vrot.lane.b32.xlu0 %v1206, 64
        %v1319 = vpop.permute.xlu0 %1318
        %v1321 = vsel %vm771, %v1316, %v1319
        %v1322 = vld [vmem:[#allocation12] sm:$0xff]
        %v1323 = vld [vmem:[#allocation12 + $0x8] sm:$0xff]
        %v1324 = vld [vmem:[#allocation12 + $0x10] sm:$0xff]
        %v1325 = vld [vmem:[#allocation12 + $0x18] sm:$0xff]
        %v1326 = vld [vmem:[#allocation12 + $0x20] sm:$0xff]
        %v1327 = vld [vmem:[#allocation12 + $0x28] sm:$0xff]
        %v1328 = vld [vmem:[#allocation12 + $0x30] sm:$0xff]
        %v1329 = vld [vmem:[#allocation12 + $0x38] sm:$0xff]
        %v1331 = vsel %vm889, %v1321, 0
        %1333 = vmatprep.subr.mxu0 0.0
        %1334 = vmatpush1.msra.mxu0 %v1322
        %1335 = vmatprep.subr.mxu0 0.0
        %1336 = vmatpush1.msra.mxu0 %v1323
        %1337 = vmatprep.subr.mxu0 0.0
        %1338 = vmatpush1.msra.mxu0 %v1324
        %1339 = vmatprep.subr.mxu0 0.0
        %1340 = vmatpush1.msra.mxu0 %v1325
        %1341 = vmatprep.subr.mxu0 0.0
        %1342 = vmatpush1.msra.mxu0 %v1326
        %1343 = vmatprep.subr.mxu0 0.0
        %1344 = vmatpush1.msra.mxu0 %v1327
        %1345 = vmatprep.subr.mxu0 0.0
        %1346 = vmatpush1.msra.mxu0 %v1328
        %1347 = vmatprep.subr.mxu0 0.0
        %1348 = vmatpush1.msra.mxu0 %v1329
        %1349 = vmatprep.subr.mxu0 0.0
        %1350 = vmatpush1.msra.mxu0 0.0
        %1351 = vmatprep.subr.mxu0 0.0
        %1352 = vmatpush1.msra.mxu0 0.0
        %1353 = vmatprep.subr.mxu0 0.0
        %1354 = vmatpush1.msra.mxu0 0.0
        %1355 = vmatprep.subr.mxu0 0.0
        %1356 = vmatpush1.msra.mxu0 0.0
        %1357 = vmatprep.subr.mxu0 0.0
        %1358 = vmatpush1.msra.mxu0 0.0
        %1359 = vmatprep.subr.mxu0 0.0
        %1360 = vmatpush1.msra.mxu0 0.0
        %1361 = vmatprep.subr.mxu0 0.0
        %1362 = vmatpush1.msra.mxu0 0.0
        %1363 = vmatprep.subr.mxu0 0.0
        %1364 = vmatpush1.msra.mxu0 0.0
        %1365 = vmatprep.subr.mxu0 0.0
        %1366 = vmatpush1.msra.mxu0 0.0
        %1367 = vmatprep.subr.mxu0 0.0
        %1368 = vmatpush1.msra.mxu0 0.0
        %1369 = vmatprep.subr.mxu0 0.0
        %1370 = vmatpush1.msra.mxu0 0.0
        %1371 = vmatprep.subr.mxu0 0.0
        %1372 = vmatpush1.msra.mxu0 0.0
        %1373 = vmatprep.subr.mxu0 0.0
        %1374 = vmatpush1.msra.mxu0 0.0
        %1375 = vmatprep.subr.mxu0 0.0
        %1376 = vmatpush1.msra.mxu0 0.0
        %1377 = vmatprep.subr.mxu0 0.0
        %1378 = vmatpush1.msra.mxu0 0.0
        %1379 = vmatprep.subr.mxu0 0.0
        %1380 = vmatpush1.msra.mxu0 0.0
        %1381 = vmatprep.subr.mxu0 0.0
        %1382 = vmatpush1.msra.mxu0 0.0
        %1383 = vmatprep.subr.mxu0 0.0
        %1384 = vmatpush1.msra.mxu0 0.0
        %1385 = vmatprep.subr.mxu0 0.0
        %1386 = vmatpush1.msra.mxu0 0.0
        %1387 = vmatprep.subr.mxu0 0.0
        %1388 = vmatpush1.msra.mxu0 0.0
        %1389 = vmatprep.subr.mxu0 0.0
        %1390 = vmatpush1.msra.mxu0 0.0
        %1391 = vmatprep.subr.mxu0 0.0
        %1392 = vmatpush1.msra.mxu0 0.0
        %1393 = vmatprep.subr.mxu0 0.0
        %1394 = vmatpush1.msra.mxu0 0.0
        %1395 = vmatprep.subr.mxu0 0.0
        %1396 = vmatpush1.msra.mxu0 0.0
        %1397 = vmatprep.mubr.f32.mxu0 0.0
        %1398 = vmatmul.mubr.f32.gmra.mrb[0].mxu0 %v1331
        %v1399 = vpop.f32.mrb[0].mxu0
        %v1400 = vadd.f32 %v758, %v1399
        %v1401 = vpop.f32.mrb[0].mxu0
        %1402 = vdwg.mxu0
        %v1403 = vmul.f32 %v1400, 0.5
        %v1404 = vtanh.pop %v1403
        %v1405 = vmul.f32 %v1404, 0.5
        %v1406 = vadd.f32 %v1405, 0.5
        %v1407 = vtanh.pop %v1400
        %v1408 = vmul.f32 %v1406, %v1200
        %1410 = vrot.lane.b32.xlu0 %v1407, 64
        %v1411 = vpop.permute.xlu0 %1410
        %v1413 = vmul.f32 %v1406, %v1411
        %1415 = vrot.lane.b32.xlu0 %v1413, 32
        %v1416 = vpop.permute.xlu0 %1415
        %v1418 = vadd.f32 %v1408, %v1416
        %v1419 = vtanh.pop %v1418
        %1421 = vrot.lane.b32.xlu0 %v1419, 64
        %v1422 = vpop.permute.xlu0 %1421
        %v1424 = vmul.f32 %v1406, %v1422
        %1426 = vrot.lane.b32.xlu0 %v1424, 32
        %v1427 = vpop.permute.xlu0 %1426
        %s1429 = scalar_lea.vmem [#allocation5], 4
        %1430 = vst.msk [vmem:[%s1429] sm:$0x3] %vm993, %v1427
        %s1431 = scalar_lea.vmem [#allocation4], 6
        %v1432 = vld [vmem:[%s1431] sm:$0x3]
        %v1433 = vld [vmem:[#allocation11] sm:$0xff]
        %v1434 = vld [vmem:[#allocation11 + $0x8] sm:$0xff]
        %v1435 = vld [vmem:[#allocation11 + $0x10] sm:$0xff]
        %v1436 = vld [vmem:[#allocation11 + $0x18] sm:$0xff]
        %v1437 = vsel %vm771, %v1316, 0
        %1439 = vmatprep.subr.mxu0 0.0
        %1440 = vmatpush1.msra.mxu0 %v1433
        %1441 = vmatprep.subr.mxu0 0.0
        %1442 = vmatpush1.msra.mxu0 %v1434
        %1443 = vmatprep.subr.mxu0 0.0
        %1444 = vmatpush1.msra.mxu0 %v1435
        %1445 = vmatprep.subr.mxu0 0.0
        %1446 = vmatpush1.msra.mxu0 %v1436
        %1447 = vmatprep.subr.mxu0 0.0
        %1448 = vmatpush1.msra.mxu0 0.0
        %1449 = vmatprep.subr.mxu0 0.0
        %1450 = vmatpush1.msra.mxu0 0.0
        %1451 = vmatprep.subr.mxu0 0.0
        %1452 = vmatpush1.msra.mxu0 0.0
        %1453 = vmatprep.subr.mxu0 0.0
        %1454 = vmatpush1.msra.mxu0 0.0
        %1455 = vmatprep.subr.mxu0 0.0
        %1456 = vmatpush1.msra.mxu0 0.0
        %1457 = vmatprep.subr.mxu0 0.0
        %1458 = vmatpush1.msra.mxu0 0.0
        %1459 = vmatprep.subr.mxu0 0.0
        %1460 = vmatpush1.msra.mxu0 0.0
        %1461 = vmatprep.subr.mxu0 0.0
        %1462 = vmatpush1.msra.mxu0 0.0
        %1463 = vmatprep.subr.mxu0 0.0
        %1464 = vmatpush1.msra.mxu0 0.0
        %1465 = vmatprep.subr.mxu0 0.0
        %1466 = vmatpush1.msra.mxu0 0.0
        %1467 = vmatprep.subr.mxu0 0.0
        %1468 = vmatpush1.msra.mxu0 0.0
        %1469 = vmatprep.subr.mxu0 0.0
        %1470 = vmatpush1.msra.mxu0 0.0
        %1471 = vmatprep.subr.mxu0 0.0
        %1472 = vmatpush1.msra.mxu0 0.0
        %1473 = vmatprep.subr.mxu0 0.0
        %1474 = vmatpush1.msra.mxu0 0.0
        %1475 = vmatprep.subr.mxu0 0.0
        %1476 = vmatpush1.msra.mxu0 0.0
        %1477 = vmatprep.subr.mxu0 0.0
        %1478 = vmatpush1.msra.mxu0 0.0
        %1479 = vmatprep.subr.mxu0 0.0
        %1480 = vmatpush1.msra.mxu0 0.0
        %1481 = vmatprep.subr.mxu0 0.0
        %1482 = vmatpush1.msra.mxu0 0.0
        %1483 = vmatprep.subr.mxu0 0.0
        %1484 = vmatpush1.msra.mxu0 0.0
        %1485 = vmatprep.subr.mxu0 0.0
        %1486 = vmatpush1.msra.mxu0 0.0
        %1487 = vmatprep.subr.mxu0 0.0
        %1488 = vmatpush1.msra.mxu0 0.0
        %1489 = vmatprep.subr.mxu0 0.0
        %1490 = vmatpush1.msra.mxu0 0.0
        %1491 = vmatprep.subr.mxu0 0.0
        %1492 = vmatpush1.msra.mxu0 0.0
        %1493 = vmatprep.subr.mxu0 0.0
        %1494 = vmatpush1.msra.mxu0 0.0
        %1495 = vmatprep.subr.mxu0 0.0
        %1496 = vmatpush1.msra.mxu0 0.0
        %1497 = vmatprep.subr.mxu0 0.0
        %1498 = vmatpush1.msra.mxu0 0.0
        %1499 = vmatprep.subr.mxu0 0.0
        %1500 = vmatpush1.msra.mxu0 0.0
        %1501 = vmatprep.subr.mxu0 0.0
        %1502 = vmatpush1.msra.mxu0 0.0
        %1503 = vmatprep.mubr.f32.mxu0 0.0
        %1504 = vmatmul.mubr.f32.gmra.mrb[0].mxu0 %v1437
        %v1505 = vpop.f32.mrb[0].mxu0
        %v1506 = vadd.f32 0.0, %v1505
        %v1507 = vpop.f32.mrb[0].mxu0
        %1508 = vdwg.mxu0
        %v1509 = vadd.f32 %v1432, %v1506
        %v1510 = vmul.f32 %v1509, 0.5
        %v1511 = vtanh.pop %v1510
        %v1512 = vmul.f32 %v1511, 0.5
        %v1513 = vadd.f32 %v1512, 0.5
        %v1514 = vtanh.pop %v1509
        %v1515 = vmul.f32 %v1513, %v1307
        %1517 = vrot.lane.b32.xlu0 %v1514, 64
        %v1518 = vpop.permute.xlu0 %1517
        %v1520 = vmul.f32 %v1513, %v1518
        %1522 = vrot.lane.b32.xlu0 %v1520, 32
        %v1523 = vpop.permute.xlu0 %1522
        %v1525 = vadd.f32 %v1515, %v1523
        %v1526 = vtanh.pop %v1525
        %1528 = vrot.lane.b32.xlu0 %v1526, 64
        %v1529 = vpop.permute.xlu0 %1528
        %v1531 = vmul.f32 %v1513, %v1529
        %1533 = vrot.lane.b32.xlu0 %v1531, 32
        %v1534 = vpop.permute.xlu0 %1533
        %1536 = vrot.lane.b32.xlu0 %v1424, 64
        %v1537 = vpop.permute.xlu0 %1536
        %v1539 = vsel %vm771, %v1534, %v1537
        %v1540 = vld [vmem:[#allocation12] sm:$0xff]
        %v1541 = vld [vmem:[#allocation12 + $0x8] sm:$0xff]
        %v1542 = vld [vmem:[#allocation12 + $0x10] sm:$0xff]
        %v1543 = vld [vmem:[#allocation12 + $0x18] sm:$0xff]
        %v1544 = vld [vmem:[#allocation12 + $0x20] sm:$0xff]
        %v1545 = vld [vmem:[#allocation12 + $0x28] sm:$0xff]
        %v1546 = vld [vmem:[#allocation12 + $0x30] sm:$0xff]
        %v1547 = vld [vmem:[#allocation12 + $0x38] sm:$0xff]
        %v1549 = vsel %vm889, %v1539, 0
        %1551 = vmatprep.subr.mxu0 0.0
        %1552 = vmatpush1.msra.mxu0 %v1540
        %1553 = vmatprep.subr.mxu0 0.0
        %1554 = vmatpush1.msra.mxu0 %v1541
        %1555 = vmatprep.subr.mxu0 0.0
        %1556 = vmatpush1.msra.mxu0 %v1542
        %1557 = vmatprep.subr.mxu0 0.0
        %1558 = vmatpush1.msra.mxu0 %v1543
        %1559 = vmatprep.subr.mxu0 0.0
        %1560 = vmatpush1.msra.mxu0 %v1544
        %1561 = vmatprep.subr.mxu0 0.0
        %1562 = vmatpush1.msra.mxu0 %v1545
        %1563 = vmatprep.subr.mxu0 0.0
        %1564 = vmatpush1.msra.mxu0 %v1546
        %1565 = vmatprep.subr.mxu0 0.0
        %1566 = vmatpush1.msra.mxu0 %v1547
        %1567 = vmatprep.subr.mxu0 0.0
        %1568 = vmatpush1.msra.mxu0 0.0
        %1569 = vmatprep.subr.mxu0 0.0
        %1570 = vmatpush1.msra.mxu0 0.0
        %1571 = vmatprep.subr.mxu0 0.0
        %1572 = vmatpush1.msra.mxu0 0.0
        %1573 = vmatprep.subr.mxu0 0.0
        %1574 = vmatpush1.msra.mxu0 0.0
        %1575 = vmatprep.subr.mxu0 0.0
        %1576 = vmatpush1.msra.mxu0 0.0
        %1577 = vmatprep.subr.mxu0 0.0
        %1578 = vmatpush1.msra.mxu0 0.0
        %1579 = vmatprep.subr.mxu0 0.0
        %1580 = vmatpush1.msra.mxu0 0.0
        %1581 = vmatprep.subr.mxu0 0.0
        %1582 = vmatpush1.msra.mxu0 0.0
        %1583 = vmatprep.subr.mxu0 0.0
        %1584 = vmatpush1.msra.mxu0 0.0
        %1585 = vmatprep.subr.mxu0 0.0
        %1586 = vmatpush1.msra.mxu0 0.0
        %1587 = vmatprep.subr.mxu0 0.0
        %1588 = vmatpush1.msra.mxu0 0.0
        %1589 = vmatprep.subr.mxu0 0.0
        %1590 = vmatpush1.msra.mxu0 0.0
        %1591 = vmatprep.subr.mxu0 0.0
        %1592 = vmatpush1.msra.mxu0 0.0
        %1593 = vmatprep.subr.mxu0 0.0
        %1594 = vmatpush1.msra.mxu0 0.0
        %1595 = vmatprep.subr.mxu0 0.0
        %1596 = vmatpush1.msra.mxu0 0.0
        %1597 = vmatprep.subr.mxu0 0.0
        %1598 = vmatpush1.msra.mxu0 0.0
        %1599 = vmatprep.subr.mxu0 0.0
        %1600 = vmatpush1.msra.mxu0 0.0
        %1601 = vmatprep.subr.mxu0 0.0
        %1602 = vmatpush1.msra.mxu0 0.0
        %1603 = vmatprep.subr.mxu0 0.0
        %1604 = vmatpush1.msra.mxu0 0.0
        %1605 = vmatprep.subr.mxu0 0.0
        %1606 = vmatpush1.msra.mxu0 0.0
        %1607 = vmatprep.subr.mxu0 0.0
        %1608 = vmatpush1.msra.mxu0 0.0
        %1609 = vmatprep.subr.mxu0 0.0
        %1610 = vmatpush1.msra.mxu0 0.0
        %1611 = vmatprep.subr.mxu0 0.0
        %1612 = vmatpush1.msra.mxu0 0.0
        %1613 = vmatprep.subr.mxu0 0.0
        %1614 = vmatpush1.msra.mxu0 0.0
        %1615 = vmatprep.mubr.f32.mxu0 0.0
        %1616 = vmatmul.mubr.f32.gmra.mrb[0].mxu0 %v1549
        %v1617 = vpop.f32.mrb[0].mxu0
        %v1618 = vadd.f32 %v758, %v1617
        %v1619 = vpop.f32.mrb[0].mxu0
        %1620 = vdwg.mxu0
        %v1621 = vmul.f32 %v1618, 0.5
        %v1622 = vtanh.pop %v1621
        %v1623 = vmul.f32 %v1622, 0.5
        %v1624 = vadd.f32 %v1623, 0.5
        %v1625 = vtanh.pop %v1618
        %v1626 = vmul.f32 %v1624, %v1418
        %1628 = vrot.lane.b32.xlu0 %v1625, 64
        %v1629 = vpop.permute.xlu0 %1628
        %v1631 = vmul.f32 %v1624, %v1629
        %1633 = vrot.lane.b32.xlu0 %v1631, 32
        %v1634 = vpop.permute.xlu0 %1633
        %v1636 = vadd.f32 %v1626, %v1634
        %v1637 = vtanh.pop %v1636
        %1639 = vrot.lane.b32.xlu0 %v1637, 64
        %v1640 = vpop.permute.xlu0 %1639
        %v1642 = vmul.f32 %v1624, %v1640
        %1644 = vrot.lane.b32.xlu0 %v1642, 32
        %v1645 = vpop.permute.xlu0 %1644
        %s1647 = scalar_lea.vmem [#allocation5], 6
        %1648 = vst.msk [vmem:[%s1647] sm:$0x3] %vm993, %v1645
        %s1649 = scalar_lea.vmem [#allocation4], 8
        %v1650 = vld [vmem:[%s1649] sm:$0x3]
        %v1651 = vld [vmem:[#allocation11] sm:$0xff]
        %v1652 = vld [vmem:[#allocation11 + $0x8] sm:$0xff]
        %v1653 = vld [vmem:[#allocation11 + $0x10] sm:$0xff]
        %v1654 = vld [vmem:[#allocation11 + $0x18] sm:$0xff]
        %v1655 = vsel %vm771, %v1534, 0
        %1657 = vmatprep.subr.mxu0 0.0
        %1658 = vmatpush1.msra.mxu0 %v1651
        %1659 = vmatprep.subr.mxu0 0.0
        %1660 = vmatpush1.msra.mxu0 %v1652
        %1661 = vmatprep.subr.mxu0 0.0
        %1662 = vmatpush1.msra.mxu0 %v1653
        %1663 = vmatprep.subr.mxu0 0.0
        %1664 = vmatpush1.msra.mxu0 %v1654
        %1665 = vmatprep.subr.mxu0 0.0
        %1666 = vmatpush1.msra.mxu0 0.0
        %1667 = vmatprep.subr.mxu0 0.0
        %1668 = vmatpush1.msra.mxu0 0.0
        %1669 = vmatprep.subr.mxu0 0.0
        %1670 = vmatpush1.msra.mxu0 0.0
        %1671 = vmatprep.subr.mxu0 0.0
        %1672 = vmatpush1.msra.mxu0 0.0
        %1673 = vmatprep.subr.mxu0 0.0
        %1674 = vmatpush1.msra.mxu0 0.0
        %1675 = vmatprep.subr.mxu0 0.0
        %1676 = vmatpush1.msra.mxu0 0.0
        %1677 = vmatprep.subr.mxu0 0.0
        %1678 = vmatpush1.msra.mxu0 0.0
        %1679 = vmatprep.subr.mxu0 0.0
        %1680 = vmatpush1.msra.mxu0 0.0
        %1681 = vmatprep.subr.mxu0 0.0
        %1682 = vmatpush1.msra.mxu0 0.0
        %1683 = vmatprep.subr.mxu0 0.0
        %1684 = vmatpush1.msra.mxu0 0.0
        %1685 = vmatprep.subr.mxu0 0.0
        %1686 = vmatpush1.msra.mxu0 0.0
        %1687 = vmatprep.subr.mxu0 0.0
        %1688 = vmatpush1.msra.mxu0 0.0
        %1689 = vmatprep.subr.mxu0 0.0
        %1690 = vmatpush1.msra.mxu0 0.0
        %1691 = vmatprep.subr.mxu0 0.0
        %1692 = vmatpush1.msra.mxu0 0.0
        %1693 = vmatprep.subr.mxu0 0.0
        %1694 = vmatpush1.msra.mxu0 0.0
        %1695 = vmatprep.subr.mxu0 0.0
        %1696 = vmatpush1.msra.mxu0 0.0
        %1697 = vmatprep.subr.mxu0 0.0
        %1698 = vmatpush1.msra.mxu0 0.0
        %1699 = vmatprep.subr.mxu0 0.0
        %1700 = vmatpush1.msra.mxu0 0.0
        %1701 = vmatprep.subr.mxu0 0.0
        %1702 = vmatpush1.msra.mxu0 0.0
        %1703 = vmatprep.subr.mxu0 0.0
        %1704 = vmatpush1.msra.mxu0 0.0
        %1705 = vmatprep.subr.mxu0 0.0
        %1706 = vmatpush1.msra.mxu0 0.0
        %1707 = vmatprep.subr.mxu0 0.0
        %1708 = vmatpush1.msra.mxu0 0.0
        %1709 = vmatprep.subr.mxu0 0.0
        %1710 = vmatpush1.msra.mxu0 0.0
        %1711 = vmatprep.subr.mxu0 0.0
        %1712 = vmatpush1.msra.mxu0 0.0
        %1713 = vmatprep.subr.mxu0 0.0
        %1714 = vmatpush1.msra.mxu0 0.0
        %1715 = vmatprep.subr.mxu0 0.0
        %1716 = vmatpush1.msra.mxu0 0.0
        %1717 = vmatprep.subr.mxu0 0.0
        %1718 = vmatpush1.msra.mxu0 0.0
        %1719 = vmatprep.subr.mxu0 0.0
        %1720 = vmatpush1.msra.mxu0 0.0
        %1721 = vmatprep.mubr.f32.mxu0 0.0
        %1722 = vmatmul.mubr.f32.gmra.mrb[0].mxu0 %v1655
        %v1723 = vpop.f32.mrb[0].mxu0
        %v1724 = vadd.f32 0.0, %v1723
        %v1725 = vpop.f32.mrb[0].mxu0
        %1726 = vdwg.mxu0
        %v1727 = vadd.f32 %v1650, %v1724
        %v1728 = vmul.f32 %v1727, 0.5
        %v1729 = vtanh.pop %v1728
        %v1730 = vmul.f32 %v1729, 0.5
        %v1731 = vadd.f32 %v1730, 0.5
        %v1732 = vtanh.pop %v1727
        %v1733 = vmul.f32 %v1731, %v1525
        %1735 = vrot.lane.b32.xlu0 %v1732, 64
        %v1736 = vpop.permute.xlu0 %1735
        %v1738 = vmul.f32 %v1731, %v1736
        %1740 = vrot.lane.b32.xlu0 %v1738, 32
        %v1741 = vpop.permute.xlu0 %1740
        %v1743 = vadd.f32 %v1733, %v1741
        %v1744 = vtanh.pop %v1743
        %1746 = vrot.lane.b32.xlu0 %v1744, 64
        %v1747 = vpop.permute.xlu0 %1746
        %v1749 = vmul.f32 %v1731, %v1747
        %1751 = vrot.lane.b32.xlu0 %v1749, 32
        %v1752 = vpop.permute.xlu0 %1751
        %1754 = vrot.lane.b32.xlu0 %v1642, 64
        %v1755 = vpop.permute.xlu0 %1754
        %v1757 = vsel %vm771, %v1752, %v1755
        %v1758 = vld [vmem:[#allocation12] sm:$0xff]
        %v1759 = vld [vmem:[#allocation12 + $0x8] sm:$0xff]
        %v1760 = vld [vmem:[#allocation12 + $0x10] sm:$0xff]
        %v1761 = vld [vmem:[#allocation12 + $0x18] sm:$0xff]
        %v1762 = vld [vmem:[#allocation12 + $0x20] sm:$0xff]
        %v1763 = vld [vmem:[#allocation12 + $0x28] sm:$0xff]
        %v1764 = vld [vmem:[#allocation12 + $0x30] sm:$0xff]
        %v1765 = vld [vmem:[#allocation12 + $0x38] sm:$0xff]
        %v1767 = vsel %vm889, %v1757, 0
        %1769 = vmatprep.subr.mxu0 0.0
        %1770 = vmatpush1.msra.mxu0 %v1758
        %1771 = vmatprep.subr.mxu0 0.0
        %1772 = vmatpush1.msra.mxu0 %v1759
        %1773 = vmatprep.subr.mxu0 0.0
        %1774 = vmatpush1.msra.mxu0 %v1760
        %1775 = vmatprep.subr.mxu0 0.0
        %1776 = vmatpush1.msra.mxu0 %v1761
        %1777 = vmatprep.subr.mxu0 0.0
        %1778 = vmatpush1.msra.mxu0 %v1762
        %1779 = vmatprep.subr.mxu0 0.0
        %1780 = vmatpush1.msra.mxu0 %v1763
        %1781 = vmatprep.subr.mxu0 0.0
        %1782 = vmatpush1.msra.mxu0 %v1764
        %1783 = vmatprep.subr.mxu0 0.0
        %1784 = vmatpush1.msra.mxu0 %v1765
        %1785 = vmatprep.subr.mxu0 0.0
        %1786 = vmatpush1.msra.mxu0 0.0
        %1787 = vmatprep.subr.mxu0 0.0
        %1788 = vmatpush1.msra.mxu0 0.0
        %1789 = vmatprep.subr.mxu0 0.0
        %1790 = vmatpush1.msra.mxu0 0.0
        %1791 = vmatprep.subr.mxu0 0.0
        %1792 = vmatpush1.msra.mxu0 0.0
        %1793 = vmatprep.subr.mxu0 0.0
        %1794 = vmatpush1.msra.mxu0 0.0
        %1795 = vmatprep.subr.mxu0 0.0
        %1796 = vmatpush1.msra.mxu0 0.0
        %1797 = vmatprep.subr.mxu0 0.0
        %1798 = vmatpush1.msra.mxu0 0.0
        %1799 = vmatprep.subr.mxu0 0.0
        %1800 = vmatpush1.msra.mxu0 0.0
        %1801 = vmatprep.subr.mxu0 0.0
        %1802 = vmatpush1.msra.mxu0 0.0
        %1803 = vmatprep.subr.mxu0 0.0
        %1804 = vmatpush1.msra.mxu0 0.0
        %1805 = vmatprep.subr.mxu0 0.0
        %1806 = vmatpush1.msra.mxu0 0.0
        %1807 = vmatprep.subr.mxu0 0.0
        %1808 = vmatpush1.msra.mxu0 0.0
        %1809 = vmatprep.subr.mxu0 0.0
        %1810 = vmatpush1.msra.mxu0 0.0
        %1811 = vmatprep.subr.mxu0 0.0
        %1812 = vmatpush1.msra.mxu0 0.0
        %1813 = vmatprep.subr.mxu0 0.0
        %1814 = vmatpush1.msra.mxu0 0.0
        %1815 = vmatprep.subr.mxu0 0.0
        %1816 = vmatpush1.msra.mxu0 0.0
        %1817 = vmatprep.subr.mxu0 0.0
        %1818 = vmatpush1.msra.mxu0 0.0
        %1819 = vmatprep.subr.mxu0 0.0
        %1820 = vmatpush1.msra.mxu0 0.0
        %1821 = vmatprep.subr.mxu0 0.0
        %1822 = vmatpush1.msra.mxu0 0.0
        %1823 = vmatprep.subr.mxu0 0.0
        %1824 = vmatpush1.msra.mxu0 0.0
        %1825 = vmatprep.subr.mxu0 0.0
        %1826 = vmatpush1.msra.mxu0 0.0
        %1827 = vmatprep.subr.mxu0 0.0
        %1828 = vmatpush1.msra.mxu0 0.0
        %1829 = vmatprep.subr.mxu0 0.0
        %1830 = vmatpush1.msra.mxu0 0.0
        %1831 = vmatprep.subr.mxu0 0.0
        %1832 = vmatpush1.msra.mxu0 0.0
        %1833 = vmatprep.mubr.f32.mxu0 0.0
        %1834 = vmatmul.mubr.f32.gmra.mrb[0].mxu0 %v1767
        %v1835 = vpop.f32.mrb[0].mxu0
        %v1836 = vadd.f32 %v758, %v1835
        %v1837 = vpop.f32.mrb[0].mxu0
        %1838 = vdwg.mxu0
        %v1839 = vmul.f32 %v1836, 0.5
        %v1840 = vtanh.pop %v1839
        %v1841 = vmul.f32 %v1840, 0.5
        %v1842 = vadd.f32 %v1841, 0.5
        %v1843 = vtanh.pop %v1836
        %v1844 = vmul.f32 %v1842, %v1636
        %1846 = vrot.lane.b32.xlu0 %v1843, 64
        %v1847 = vpop.permute.xlu0 %1846
        %v1849 = vmul.f32 %v1842, %v1847
        %1851 = vrot.lane.b32.xlu0 %v1849, 32
        %v1852 = vpop.permute.xlu0 %1851
        %v1854 = vadd.f32 %v1844, %v1852
        %v1855 = vtanh.pop %v1854
        %1857 = vrot.lane.b32.xlu0 %v1855, 64
        %v1858 = vpop.permute.xlu0 %1857
        %v1860 = vmul.f32 %v1842, %v1858
        %1862 = vrot.lane.b32.xlu0 %v1860, 32
        %v1863 = vpop.permute.xlu0 %1862
        %s1865 = scalar_lea.vmem [#allocation5], 8
        %1866 = vst.msk [vmem:[%s1865] sm:$0x3] %vm993, %v1863
        %s1867 = scalar_lea.vmem [#allocation4], 10
        %v1868 = vld [vmem:[%s1867] sm:$0x3]
        %v1869 = vld [vmem:[#allocation11] sm:$0xff]
        %v1870 = vld [vmem:[#allocation11 + $0x8] sm:$0xff]
        %v1871 = vld [vmem:[#allocation11 + $0x10] sm:$0xff]
        %v1872 = vld [vmem:[#allocation11 + $0x18] sm:$0xff]
        %v1873 = vsel %vm771, %v1752, 0
        %1875 = vmatprep.subr.mxu0 0.0
        %1876 = vmatpush1.msra.mxu0 %v1869
        %1877 = vmatprep.subr.mxu0 0.0
        %1878 = vmatpush1.msra.mxu0 %v1870
        %1879 = vmatprep.subr.mxu0 0.0
        %1880 = vmatpush1.msra.mxu0 %v1871
        %1881 = vmatprep.subr.mxu0 0.0
        %1882 = vmatpush1.msra.mxu0 %v1872
        %1883 = vmatprep.subr.mxu0 0.0
        %1884 = vmatpush1.msra.mxu0 0.0
        %1885 = vmatprep.subr.mxu0 0.0
        %1886 = vmatpush1.msra.mxu0 0.0
        %1887 = vmatprep.subr.mxu0 0.0
        %1888 = vmatpush1.msra.mxu0 0.0
        %1889 = vmatprep.subr.mxu0 0.0
        %1890 = vmatpush1.msra.mxu0 0.0
        %1891 = vmatprep.subr.mxu0 0.0
        %1892 = vmatpush1.msra.mxu0 0.0
        %1893 = vmatprep.subr.mxu0 0.0
        %1894 = vmatpush1.msra.mxu0 0.0
        %1895 = vmatprep.subr.mxu0 0.0
        %1896 = vmatpush1.msra.mxu0 0.0
        %1897 = vmatprep.subr.mxu0 0.0
        %1898 = vmatpush1.msra.mxu0 0.0
        %1899 = vmatprep.subr.mxu0 0.0
        %1900 = vmatpush1.msra.mxu0 0.0
        %1901 = vmatprep.subr.mxu0 0.0
        %1902 = vmatpush1.msra.mxu0 0.0
        %1903 = vmatprep.subr.mxu0 0.0
        %1904 = vmatpush1.msra.mxu0 0.0
        %1905 = vmatprep.subr.mxu0 0.0
        %1906 = vmatpush1.msra.mxu0 0.0
        %1907 = vmatprep.subr.mxu0 0.0
        %1908 = vmatpush1.msra.mxu0 0.0
        %1909 = vmatprep.subr.mxu0 0.0
        %1910 = vmatpush1.msra.mxu0 0.0
        %1911 = vmatprep.subr.mxu0 0.0
        %1912 = vmatpush1.msra.mxu0 0.0
        %1913 = vmatprep.subr.mxu0 0.0
        %1914 = vmatpush1.msra.mxu0 0.0
        %1915 = vmatprep.subr.mxu0 0.0
        %1916 = vmatpush1.msra.mxu0 0.0
        %1917 = vmatprep.subr.mxu0 0.0
        %1918 = vmatpush1.msra.mxu0 0.0
        %1919 = vmatprep.subr.mxu0 0.0
        %1920 = vmatpush1.msra.mxu0 0.0
        %1921 = vmatprep.subr.mxu0 0.0
        %1922 = vmatpush1.msra.mxu0 0.0
        %1923 = vmatprep.subr.mxu0 0.0
        %1924 = vmatpush1.msra.mxu0 0.0
        %1925 = vmatprep.subr.mxu0 0.0
        %1926 = vmatpush1.msra.mxu0 0.0
        %1927 = vmatprep.subr.mxu0 0.0
        %1928 = vmatpush1.msra.mxu0 0.0
        %1929 = vmatprep.subr.mxu0 0.0
        %1930 = vmatpush1.msra.mxu0 0.0
        %1931 = vmatprep.subr.mxu0 0.0
        %1932 = vmatpush1.msra.mxu0 0.0
        %1933 = vmatprep.subr.mxu0 0.0
        %1934 = vmatpush1.msra.mxu0 0.0
        %1935 = vmatprep.subr.mxu0 0.0
        %1936 = vmatpush1.msra.mxu0 0.0
        %1937 = vmatprep.subr.mxu0 0.0
        %1938 = vmatpush1.msra.mxu0 0.0
        %1939 = vmatprep.mubr.f32.mxu0 0.0
        %1940 = vmatmul.mubr.f32.gmra.mrb[0].mxu0 %v1873
        %v1941 = vpop.f32.mrb[0].mxu0
        %v1942 = vadd.f32 0.0, %v1941
        %v1943 = vpop.f32.mrb[0].mxu0
        %1944 = vdwg.mxu0
        %v1945 = vadd.f32 %v1868, %v1942
        %v1946 = vmul.f32 %v1945, 0.5
        %v1947 = vtanh.pop %v1946
        %v1948 = vmul.f32 %v1947, 0.5
        %v1949 = vadd.f32 %v1948, 0.5
        %v1950 = vtanh.pop %v1945
        %v1951 = vmul.f32 %v1949, %v1743
        %1953 = vrot.lane.b32.xlu0 %v1950, 64
        %v1954 = vpop.permute.xlu0 %1953
        %v1956 = vmul.f32 %v1949, %v1954
        %1958 = vrot.lane.b32.xlu0 %v1956, 32
        %v1959 = vpop.permute.xlu0 %1958
        %v1961 = vadd.f32 %v1951, %v1959
        %v1962 = vtanh.pop %v1961
        %1964 = vrot.lane.b32.xlu0 %v1962, 64
        %v1965 = vpop.permute.xlu0 %1964
        %v1967 = vmul.f32 %v1949, %v1965
        %1969 = vrot.lane.b32.xlu0 %v1967, 32
        %v1970 = vpop.permute.xlu0 %1969
        %1972 = vrot.lane.b32.xlu0 %v1860, 64
        %v1973 = vpop.permute.xlu0 %1972
        %v1975 = vsel %vm771, %v1970, %v1973
        %v1976 = vld [vmem:[#allocation12] sm:$0xff]
        %v1977 = vld [vmem:[#allocation12 + $0x8] sm:$0xff]
        %v1978 = vld [vmem:[#allocation12 + $0x10] sm:$0xff]
        %v1979 = vld [vmem:[#allocation12 + $0x18] sm:$0xff]
        %v1980 = vld [vmem:[#allocation12 + $0x20] sm:$0xff]
        %v1981 = vld [vmem:[#allocation12 + $0x28] sm:$0xff]
        %v1982 = vld [vmem:[#allocation12 + $0x30] sm:$0xff]
        %v1983 = vld [vmem:[#allocation12 + $0x38] sm:$0xff]
        %v1985 = vsel %vm889, %v1975, 0
        %1987 = vmatprep.subr.mxu0 0.0
        %1988 = vmatpush1.msra.mxu0 %v1976
        %1989 = vmatprep.subr.mxu0 0.0
        %1990 = vmatpush1.msra.mxu0 %v1977
        %1991 = vmatprep.subr.mxu0 0.0
        %1992 = vmatpush1.msra.mxu0 %v1978
        %1993 = vmatprep.subr.mxu0 0.0
        %1994 = vmatpush1.msra.mxu0 %v1979
        %1995 = vmatprep.subr.mxu0 0.0
        %1996 = vmatpush1.msra.mxu0 %v1980
        %1997 = vmatprep.subr.mxu0 0.0
        %1998 = vmatpush1.msra.mxu0 %v1981
        %1999 = vmatprep.subr.mxu0 0.0
        %2000 = vmatpush1.msra.mxu0 %v1982
        %2001 = vmatprep.subr.mxu0 0.0
        %2002 = vmatpush1.msra.mxu0 %v1983
        %2003 = vmatprep.subr.mxu0 0.0
        %2004 = vmatpush1.msra.mxu0 0.0
        %2005 = vmatprep.subr.mxu0 0.0
        %2006 = vmatpush1.msra.mxu0 0.0
        %2007 = vmatprep.subr.mxu0 0.0
        %2008 = vmatpush1.msra.mxu0 0.0
        %2009 = vmatprep.subr.mxu0 0.0
        %2010 = vmatpush1.msra.mxu0 0.0
        %2011 = vmatprep.subr.mxu0 0.0
        %2012 = vmatpush1.msra.mxu0 0.0
        %2013 = vmatprep.subr.mxu0 0.0
        %2014 = vmatpush1.msra.mxu0 0.0
        %2015 = vmatprep.subr.mxu0 0.0
        %2016 = vmatpush1.msra.mxu0 0.0
        %2017 = vmatprep.subr.mxu0 0.0
        %2018 = vmatpush1.msra.mxu0 0.0
        %2019 = vmatprep.subr.mxu0 0.0
        %2020 = vmatpush1.msra.mxu0 0.0
        %2021 = vmatprep.subr.mxu0 0.0
        %2022 = vmatpush1.msra.mxu0 0.0
        %2023 = vmatprep.subr.mxu0 0.0
        %2024 = vmatpush1.msra.mxu0 0.0
        %2025 = vmatprep.subr.mxu0 0.0
        %2026 = vmatpush1.msra.mxu0 0.0
        %2027 = vmatprep.subr.mxu0 0.0
        %2028 = vmatpush1.msra.mxu0 0.0
        %2029 = vmatprep.subr.mxu0 0.0
        %2030 = vmatpush1.msra.mxu0 0.0
        %2031 = vmatprep.subr.mxu0 0.0
        %2032 = vmatpush1.msra.mxu0 0.0
        %2033 = vmatprep.subr.mxu0 0.0
        %2034 = vmatpush1.msra.mxu0 0.0
        %2035 = vmatprep.subr.mxu0 0.0
        %2036 = vmatpush1.msra.mxu0 0.0
        %2037 = vmatprep.subr.mxu0 0.0
        %2038 = vmatpush1.msra.mxu0 0.0
        %2039 = vmatprep.subr.mxu0 0.0
        %2040 = vmatpush1.msra.mxu0 0.0
        %2041 = vmatprep.subr.mxu0 0.0
        %2042 = vmatpush1.msra.mxu0 0.0
        %2043 = vmatprep.subr.mxu0 0.0
        %2044 = vmatpush1.msra.mxu0 0.0
        %2045 = vmatprep.subr.mxu0 0.0
        %2046 = vmatpush1.msra.mxu0 0.0
        %2047 = vmatprep.subr.mxu0 0.0
        %2048 = vmatpush1.msra.mxu0 0.0
        %2049 = vmatprep.subr.mxu0 0.0
        %2050 = vmatpush1.msra.mxu0 0.0
        %2051 = vmatprep.mubr.f32.mxu0 0.0
        %2052 = vmatmul.mubr.f32.gmra.mrb[0].mxu0 %v1985
        %v2053 = vpop.f32.mrb[0].mxu0
        %v2054 = vadd.f32 %v758, %v2053
        %v2055 = vpop.f32.mrb[0].mxu0
        %2056 = vdwg.mxu0
        %v2057 = vmul.f32 %v2054, 0.5
        %v2058 = vtanh.pop %v2057
        %v2059 = vmul.f32 %v2058, 0.5
        %v2060 = vadd.f32 %v2059, 0.5
        %v2061 = vtanh.pop %v2054
        %v2062 = vmul.f32 %v2060, %v1854
        %2064 = vrot.lane.b32.xlu0 %v2061, 64
        %v2065 = vpop.permute.xlu0 %2064
        %v2067 = vmul.f32 %v2060, %v2065
        %2069 = vrot.lane.b32.xlu0 %v2067, 32
        %v2070 = vpop.permute.xlu0 %2069
        %v2072 = vadd.f32 %v2062, %v2070
        %v2073 = vtanh.pop %v2072
        %2075 = vrot.lane.b32.xlu0 %v2073, 64
        %v2076 = vpop.permute.xlu0 %2075
        %v2078 = vmul.f32 %v2060, %v2076
        %2080 = vrot.lane.b32.xlu0 %v2078, 32
        %v2081 = vpop.permute.xlu0 %2080
        %s2083 = scalar_lea.vmem [#allocation5], 10
        %2084 = vst.msk [vmem:[%s2083] sm:$0x3] %vm993, %v2081
        %s2085 = scalar_lea.vmem [#allocation4], 12
        %v2086 = vld [vmem:[%s2085] sm:$0x3]
        %v2087 = vld [vmem:[#allocation11] sm:$0xff]
        %v2088 = vld [vmem:[#allocation11 + $0x8] sm:$0xff]
        %v2089 = vld [vmem:[#allocation11 + $0x10] sm:$0xff]
        %v2090 = vld [vmem:[#allocation11 + $0x18] sm:$0xff]
        %v2091 = vsel %vm771, %v1970, 0
        %2093 = vmatprep.subr.mxu0 0.0
        %2094 = vmatpush1.msra.mxu0 %v2087
        %2095 = vmatprep.subr.mxu0 0.0
        %2096 = vmatpush1.msra.mxu0 %v2088
        %2097 = vmatprep.subr.mxu0 0.0
        %2098 = vmatpush1.msra.mxu0 %v2089
        %2099 = vmatprep.subr.mxu0 0.0
        %2100 = vmatpush1.msra.mxu0 %v2090
        %2101 = vmatprep.subr.mxu0 0.0
        %2102 = vmatpush1.msra.mxu0 0.0
        %2103 = vmatprep.subr.mxu0 0.0
        %2104 = vmatpush1.msra.mxu0 0.0
        %2105 = vmatprep.subr.mxu0 0.0
        %2106 = vmatpush1.msra.mxu0 0.0
        %2107 = vmatprep.subr.mxu0 0.0
        %2108 = vmatpush1.msra.mxu0 0.0
        %2109 = vmatprep.subr.mxu0 0.0
        %2110 = vmatpush1.msra.mxu0 0.0
        %2111 = vmatprep.subr.mxu0 0.0
        %2112 = vmatpush1.msra.mxu0 0.0
        %2113 = vmatprep.subr.mxu0 0.0
        %2114 = vmatpush1.msra.mxu0 0.0
        %2115 = vmatprep.subr.mxu0 0.0
        %2116 = vmatpush1.msra.mxu0 0.0
        %2117 = vmatprep.subr.mxu0 0.0
        %2118 = vmatpush1.msra.mxu0 0.0
        %2119 = vmatprep.subr.mxu0 0.0
        %2120 = vmatpush1.msra.mxu0 0.0
        %2121 = vmatprep.subr.mxu0 0.0
        %2122 = vmatpush1.msra.mxu0 0.0
        %2123 = vmatprep.subr.mxu0 0.0
        %2124 = vmatpush1.msra.mxu0 0.0
        %2125 = vmatprep.subr.mxu0 0.0
        %2126 = vmatpush1.msra.mxu0 0.0
        %2127 = vmatprep.subr.mxu0 0.0
        %2128 = vmatpush1.msra.mxu0 0.0
        %2129 = vmatprep.subr.mxu0 0.0
        %2130 = vmatpush1.msra.mxu0 0.0
        %2131 = vmatprep.subr.mxu0 0.0
        %2132 = vmatpush1.msra.mxu0 0.0
        %2133 = vmatprep.subr.mxu0 0.0
        %2134 = vmatpush1.msra.mxu0 0.0
        %2135 = vmatprep.subr.mxu0 0.0
        %2136 = vmatpush1.msra.mxu0 0.0
        %2137 = vmatprep.subr.mxu0 0.0
        %2138 = vmatpush1.msra.mxu0 0.0
        %2139 = vmatprep.subr.mxu0 0.0
        %2140 = vmatpush1.msra.mxu0 0.0
        %2141 = vmatprep.subr.mxu0 0.0
        %2142 = vmatpush1.msra.mxu0 0.0
        %2143 = vmatprep.subr.mxu0 0.0
        %2144 = vmatpush1.msra.mxu0 0.0
        %2145 = vmatprep.subr.mxu0 0.0
        %2146 = vmatpush1.msra.mxu0 0.0
        %2147 = vmatprep.subr.mxu0 0.0
        %2148 = vmatpush1.msra.mxu0 0.0
        %2149 = vmatprep.subr.mxu0 0.0
        %2150 = vmatpush1.msra.mxu0 0.0
        %2151 = vmatprep.subr.mxu0 0.0
        %2152 = vmatpush1.msra.mxu0 0.0
        %2153 = vmatprep.subr.mxu0 0.0
        %2154 = vmatpush1.msra.mxu0 0.0
        %2155 = vmatprep.subr.mxu0 0.0
        %2156 = vmatpush1.msra.mxu0 0.0
        %2157 = vmatprep.mubr.f32.mxu0 0.0
        %2158 = vmatmul.mubr.f32.gmra.mrb[0].mxu0 %v2091
        %v2159 = vpop.f32.mrb[0].mxu0
        %v2160 = vadd.f32 0.0, %v2159
        %v2161 = vpop.f32.mrb[0].mxu0
        %2162 = vdwg.mxu0
        %v2163 = vadd.f32 %v2086, %v2160
        %v2164 = vmul.f32 %v2163, 0.5
        %v2165 = vtanh.pop %v2164
        %v2166 = vmul.f32 %v2165, 0.5
        %v2167 = vadd.f32 %v2166, 0.5
        %v2168 = vtanh.pop %v2163
        %v2169 = vmul.f32 %v2167, %v1961
        %2171 = vrot.lane.b32.xlu0 %v2168, 64
        %v2172 = vpop.permute.xlu0 %2171
        %v2174 = vmul.f32 %v2167, %v2172
        %2176 = vrot.lane.b32.xlu0 %v2174, 32
        %v2177 = vpop.permute.xlu0 %2176
        %v2179 = vadd.f32 %v2169, %v2177
        %v2180 = vtanh.pop %v2179
        %2182 = vrot.lane.b32.xlu0 %v2180, 64
        %v2183 = vpop.permute.xlu0 %2182
        %v2185 = vmul.f32 %v2167, %v2183
        %2187 = vrot.lane.b32.xlu0 %v2185, 32
        %v2188 = vpop.permute.xlu0 %2187
        %2190 = vrot.lane.b32.xlu0 %v2078, 64
        %v2191 = vpop.permute.xlu0 %2190
        %v2193 = vsel %vm771, %v2188, %v2191
        %v2194 = vld [vmem:[#allocation12] sm:$0xff]
        %v2195 = vld [vmem:[#allocation12 + $0x8] sm:$0xff]
        %v2196 = vld [vmem:[#allocation12 + $0x10] sm:$0xff]
        %v2197 = vld [vmem:[#allocation12 + $0x18] sm:$0xff]
        %v2198 = vld [vmem:[#allocation12 + $0x20] sm:$0xff]
        %v2199 = vld [vmem:[#allocation12 + $0x28] sm:$0xff]
        %v2200 = vld [vmem:[#allocation12 + $0x30] sm:$0xff]
        %v2201 = vld [vmem:[#allocation12 + $0x38] sm:$0xff]
        %v2203 = vsel %vm889, %v2193, 0
        %2205 = vmatprep.subr.mxu0 0.0
        %2206 = vmatpush1.msra.mxu0 %v2194
        %2207 = vmatprep.subr.mxu0 0.0
        %2208 = vmatpush1.msra.mxu0 %v2195
        %2209 = vmatprep.subr.mxu0 0.0
        %2210 = vmatpush1.msra.mxu0 %v2196
        %2211 = vmatprep.subr.mxu0 0.0
        %2212 = vmatpush1.msra.mxu0 %v2197
        %2213 = vmatprep.subr.mxu0 0.0
        %2214 = vmatpush1.msra.mxu0 %v2198
        %2215 = vmatprep.subr.mxu0 0.0
        %2216 = vmatpush1.msra.mxu0 %v2199
        %2217 = vmatprep.subr.mxu0 0.0
        %2218 = vmatpush1.msra.mxu0 %v2200
        %2219 = vmatprep.subr.mxu0 0.0
        %2220 = vmatpush1.msra.mxu0 %v2201
        %2221 = vmatprep.subr.mxu0 0.0
        %2222 = vmatpush1.msra.mxu0 0.0
        %2223 = vmatprep.subr.mxu0 0.0
        %2224 = vmatpush1.msra.mxu0 0.0
        %2225 = vmatprep.subr.mxu0 0.0
        %2226 = vmatpush1.msra.mxu0 0.0
        %2227 = vmatprep.subr.mxu0 0.0
        %2228 = vmatpush1.msra.mxu0 0.0
        %2229 = vmatprep.subr.mxu0 0.0
        %2230 = vmatpush1.msra.mxu0 0.0
        %2231 = vmatprep.subr.mxu0 0.0
        %2232 = vmatpush1.msra.mxu0 0.0
        %2233 = vmatprep.subr.mxu0 0.0
        %2234 = vmatpush1.msra.mxu0 0.0
        %2235 = vmatprep.subr.mxu0 0.0
        %2236 = vmatpush1.msra.mxu0 0.0
        %2237 = vmatprep.subr.mxu0 0.0
        %2238 = vmatpush1.msra.mxu0 0.0
        %2239 = vmatprep.subr.mxu0 0.0
        %2240 = vmatpush1.msra.mxu0 0.0
        %2241 = vmatprep.subr.mxu0 0.0
        %2242 = vmatpush1.msra.mxu0 0.0
        %2243 = vmatprep.subr.mxu0 0.0
        %2244 = vmatpush1.msra.mxu0 0.0
        %2245 = vmatprep.subr.mxu0 0.0
        %2246 = vmatpush1.msra.mxu0 0.0
        %2247 = vmatprep.subr.mxu0 0.0
        %2248 = vmatpush1.msra.mxu0 0.0
        %2249 = vmatprep.subr.mxu0 0.0
        %2250 = vmatpush1.msra.mxu0 0.0
        %2251 = vmatprep.subr.mxu0 0.0
        %2252 = vmatpush1.msra.mxu0 0.0
        %2253 = vmatprep.subr.mxu0 0.0
        %2254 = vmatpush1.msra.mxu0 0.0
        %2255 = vmatprep.subr.mxu0 0.0
        %2256 = vmatpush1.msra.mxu0 0.0
        %2257 = vmatprep.subr.mxu0 0.0
        %2258 = vmatpush1.msra.mxu0 0.0
        %2259 = vmatprep.subr.mxu0 0.0
        %2260 = vmatpush1.msra.mxu0 0.0
        %2261 = vmatprep.subr.mxu0 0.0
        %2262 = vmatpush1.msra.mxu0 0.0
        %2263 = vmatprep.subr.mxu0 0.0
        %2264 = vmatpush1.msra.mxu0 0.0
        %2265 = vmatprep.subr.mxu0 0.0
        %2266 = vmatpush1.msra.mxu0 0.0
        %2267 = vmatprep.subr.mxu0 0.0
        %2268 = vmatpush1.msra.mxu0 0.0
        %2269 = vmatprep.mubr.f32.mxu0 0.0
        %2270 = vmatmul.mubr.f32.gmra.mrb[0].mxu0 %v2203
        %v2271 = vpop.f32.mrb[0].mxu0
        %v2272 = vadd.f32 %v758, %v2271
        %v2273 = vpop.f32.mrb[0].mxu0
        %2274 = vdwg.mxu0
        %v2275 = vmul.f32 %v2272, 0.5
        %v2276 = vtanh.pop %v2275
        %v2277 = vmul.f32 %v2276, 0.5
        %v2278 = vadd.f32 %v2277, 0.5
        %v2279 = vtanh.pop %v2272
        %v2280 = vmul.f32 %v2278, %v2072
        %2282 = vrot.lane.b32.xlu0 %v2279, 64
        %v2283 = vpop.permute.xlu0 %2282
        %v2285 = vmul.f32 %v2278, %v2283
        %2287 = vrot.lane.b32.xlu0 %v2285, 32
        %v2288 = vpop.permute.xlu0 %2287
        %v2290 = vadd.f32 %v2280, %v2288
        %v2291 = vtanh.pop %v2290
        %2293 = vrot.lane.b32.xlu0 %v2291, 64
        %v2294 = vpop.permute.xlu0 %2293
        %v2296 = vmul.f32 %v2278, %v2294
        %2298 = vrot.lane.b32.xlu0 %v2296, 32
        %v2299 = vpop.permute.xlu0 %2298
        %s2301 = scalar_lea.vmem [#allocation5], 12
        %2302 = vst.msk [vmem:[%s2301] sm:$0x3] %vm993, %v2299
        %s2303 = scalar_lea.vmem [#allocation4], 14
        %v2304 = vld [vmem:[%s2303] sm:$0x3]
        %v2305 = vld [vmem:[#allocation11] sm:$0xff]
        %v2306 = vld [vmem:[#allocation11 + $0x8] sm:$0xff]
        %v2307 = vld [vmem:[#allocation11 + $0x10] sm:$0xff]
        %v2308 = vld [vmem:[#allocation11 + $0x18] sm:$0xff]
        %v2309 = vsel %vm771, %v2188, 0
        %2311 = vmatprep.subr.mxu0 0.0
        %2312 = vmatpush1.msra.mxu0 %v2305
        %2313 = vmatprep.subr.mxu0 0.0
        %2314 = vmatpush1.msra.mxu0 %v2306
        %2315 = vmatprep.subr.mxu0 0.0
        %2316 = vmatpush1.msra.mxu0 %v2307
        %2317 = vmatprep.subr.mxu0 0.0
        %2318 = vmatpush1.msra.mxu0 %v2308
        %2319 = vmatprep.subr.mxu0 0.0
        %2320 = vmatpush1.msra.mxu0 0.0
        %2321 = vmatprep.subr.mxu0 0.0
        %2322 = vmatpush1.msra.mxu0 0.0
        %2323 = vmatprep.subr.mxu0 0.0
        %2324 = vmatpush1.msra.mxu0 0.0
        %2325 = vmatprep.subr.mxu0 0.0
        %2326 = vmatpush1.msra.mxu0 0.0
        %2327 = vmatprep.subr.mxu0 0.0
        %2328 = vmatpush1.msra.mxu0 0.0
        %2329 = vmatprep.subr.mxu0 0.0
        %2330 = vmatpush1.msra.mxu0 0.0
        %2331 = vmatprep.subr.mxu0 0.0
        %2332 = vmatpush1.msra.mxu0 0.0
        %2333 = vmatprep.subr.mxu0 0.0
        %2334 = vmatpush1.msra.mxu0 0.0
        %2335 = vmatprep.subr.mxu0 0.0
        %2336 = vmatpush1.msra.mxu0 0.0
        %2337 = vmatprep.subr.mxu0 0.0
        %2338 = vmatpush1.msra.mxu0 0.0
        %2339 = vmatprep.subr.mxu0 0.0
        %2340 = vmatpush1.msra.mxu0 0.0
        %2341 = vmatprep.subr.mxu0 0.0
        %2342 = vmatpush1.msra.mxu0 0.0
        %2343 = vmatprep.subr.mxu0 0.0
        %2344 = vmatpush1.msra.mxu0 0.0
        %2345 = vmatprep.subr.mxu0 0.0
        %2346 = vmatpush1.msra.mxu0 0.0
        %2347 = vmatprep.subr.mxu0 0.0
        %2348 = vmatpush1.msra.mxu0 0.0
        %2349 = vmatprep.subr.mxu0 0.0
        %2350 = vmatpush1.msra.mxu0 0.0
        %2351 = vmatprep.subr.mxu0 0.0
        %2352 = vmatpush1.msra.mxu0 0.0
        %2353 = vmatprep.subr.mxu0 0.0
        %2354 = vmatpush1.msra.mxu0 0.0
        %2355 = vmatprep.subr.mxu0 0.0
        %2356 = vmatpush1.msra.mxu0 0.0
        %2357 = vmatprep.subr.mxu0 0.0
        %2358 = vmatpush1.msra.mxu0 0.0
        %2359 = vmatprep.subr.mxu0 0.0
        %2360 = vmatpush1.msra.mxu0 0.0
        %2361 = vmatprep.subr.mxu0 0.0
        %2362 = vmatpush1.msra.mxu0 0.0
        %2363 = vmatprep.subr.mxu0 0.0
        %2364 = vmatpush1.msra.mxu0 0.0
        %2365 = vmatprep.subr.mxu0 0.0
        %2366 = vmatpush1.msra.mxu0 0.0
        %2367 = vmatprep.subr.mxu0 0.0
        %2368 = vmatpush1.msra.mxu0 0.0
        %2369 = vmatprep.subr.mxu0 0.0
        %2370 = vmatpush1.msra.mxu0 0.0
        %2371 = vmatprep.subr.mxu0 0.0
        %2372 = vmatpush1.msra.mxu0 0.0
        %2373 = vmatprep.subr.mxu0 0.0
        %2374 = vmatpush1.msra.mxu0 0.0
        %2375 = vmatprep.mubr.f32.mxu0 0.0
        %2376 = vmatmul.mubr.f32.gmra.mrb[0].mxu0 %v2309
        %v2377 = vpop.f32.mrb[0].mxu0
        %v2378 = vadd.f32 0.0, %v2377
        %v2379 = vpop.f32.mrb[0].mxu0
        %2380 = vdwg.mxu0
        %v2381 = vadd.f32 %v2304, %v2378
        %v2382 = vmul.f32 %v2381, 0.5
        %v2383 = vtanh.pop %v2382
        %v2384 = vmul.f32 %v2383, 0.5
        %v2385 = vadd.f32 %v2384, 0.5
        %v2386 = vtanh.pop %v2381
        %v2387 = vmul.f32 %v2385, %v2179
        %2389 = vrot.lane.b32.xlu0 %v2386, 64
        %v2390 = vpop.permute.xlu0 %2389
        %v2392 = vmul.f32 %v2385, %v2390
        %2394 = vrot.lane.b32.xlu0 %v2392, 32
        %v2395 = vpop.permute.xlu0 %2394
        %v2397 = vadd.f32 %v2387, %v2395
        %v2398 = vtanh.pop %v2397
        %2400 = vrot.lane.b32.xlu0 %v2398, 64
        %v2401 = vpop.permute.xlu0 %2400
        %v2403 = vmul.f32 %v2385, %v2401
        %2405 = vrot.lane.b32.xlu0 %v2403, 32
        %v2406 = vpop.permute.xlu0 %2405
        %2408 = vrot.lane.b32.xlu0 %v2296, 64
        %v2409 = vpop.permute.xlu0 %2408
        %v2411 = vsel %vm771, %v2406, %v2409
        %v2412 = vld [vmem:[#allocation12] sm:$0xff]
        %v2413 = vld [vmem:[#allocation12 + $0x8] sm:$0xff]
        %v2414 = vld [vmem:[#allocation12 + $0x10] sm:$0xff]
        %v2415 = vld [vmem:[#allocation12 + $0x18] sm:$0xff]
        %v2416 = vld [vmem:[#allocation12 + $0x20] sm:$0xff]
        %v2417 = vld [vmem:[#allocation12 + $0x28] sm:$0xff]
        %v2418 = vld [vmem:[#allocation12 + $0x30] sm:$0xff]
        %v2419 = vld [vmem:[#allocation12 + $0x38] sm:$0xff]
        %v2421 = vsel %vm889, %v2411, 0
        %2423 = vmatprep.subr.mxu0 0.0
        %2424 = vmatpush1.msra.mxu0 %v2412
        %2425 = vmatprep.subr.mxu0 0.0
        %2426 = vmatpush1.msra.mxu0 %v2413
        %2427 = vmatprep.subr.mxu0 0.0
        %2428 = vmatpush1.msra.mxu0 %v2414
        %2429 = vmatprep.subr.mxu0 0.0
        %2430 = vmatpush1.msra.mxu0 %v2415
        %2431 = vmatprep.subr.mxu0 0.0
        %2432 = vmatpush1.msra.mxu0 %v2416
        %2433 = vmatprep.subr.mxu0 0.0
        %2434 = vmatpush1.msra.mxu0 %v2417
        %2435 = vmatprep.subr.mxu0 0.0
        %2436 = vmatpush1.msra.mxu0 %v2418
        %2437 = vmatprep.subr.mxu0 0.0
        %2438 = vmatpush1.msra.mxu0 %v2419
        %2439 = vmatprep.subr.mxu0 0.0
        %2440 = vmatpush1.msra.mxu0 0.0
        %2441 = vmatprep.subr.mxu0 0.0
        %2442 = vmatpush1.msra.mxu0 0.0
        %2443 = vmatprep.subr.mxu0 0.0
        %2444 = vmatpush1.msra.mxu0 0.0
        %2445 = vmatprep.subr.mxu0 0.0
        %2446 = vmatpush1.msra.mxu0 0.0
        %2447 = vmatprep.subr.mxu0 0.0
        %2448 = vmatpush1.msra.mxu0 0.0
        %2449 = vmatprep.subr.mxu0 0.0
        %2450 = vmatpush1.msra.mxu0 0.0
        %2451 = vmatprep.subr.mxu0 0.0
        %2452 = vmatpush1.msra.mxu0 0.0
        %2453 = vmatprep.subr.mxu0 0.0
        %2454 = vmatpush1.msra.mxu0 0.0
        %2455 = vmatprep.subr.mxu0 0.0
        %2456 = vmatpush1.msra.mxu0 0.0
        %2457 = vmatprep.subr.mxu0 0.0
        %2458 = vmatpush1.msra.mxu0 0.0
        %2459 = vmatprep.subr.mxu0 0.0
        %2460 = vmatpush1.msra.mxu0 0.0
        %2461 = vmatprep.subr.mxu0 0.0
        %2462 = vmatpush1.msra.mxu0 0.0
        %2463 = vmatprep.subr.mxu0 0.0
        %2464 = vmatpush1.msra.mxu0 0.0
        %2465 = vmatprep.subr.mxu0 0.0
        %2466 = vmatpush1.msra.mxu0 0.0
        %2467 = vmatprep.subr.mxu0 0.0
        %2468 = vmatpush1.msra.mxu0 0.0
        %2469 = vmatprep.subr.mxu0 0.0
        %2470 = vmatpush1.msra.mxu0 0.0
        %2471 = vmatprep.subr.mxu0 0.0
        %2472 = vmatpush1.msra.mxu0 0.0
        %2473 = vmatprep.subr.mxu0 0.0
        %2474 = vmatpush1.msra.mxu0 0.0
        %2475 = vmatprep.subr.mxu0 0.0
        %2476 = vmatpush1.msra.mxu0 0.0
        %2477 = vmatprep.subr.mxu0 0.0
        %2478 = vmatpush1.msra.mxu0 0.0
        %2479 = vmatprep.subr.mxu0 0.0
        %2480 = vmatpush1.msra.mxu0 0.0
        %2481 = vmatprep.subr.mxu0 0.0
        %2482 = vmatpush1.msra.mxu0 0.0
        %2483 = vmatprep.subr.mxu0 0.0
        %2484 = vmatpush1.msra.mxu0 0.0
        %2485 = vmatprep.subr.mxu0 0.0
        %2486 = vmatpush1.msra.mxu0 0.0
        %2487 = vmatprep.mubr.f32.mxu0 0.0
        %2488 = vmatmul.mubr.f32.gmra.mrb[0].mxu0 %v2421
        %v2489 = vpop.f32.mrb[0].mxu0
        %v2490 = vadd.f32 %v758, %v2489
        %v2491 = vpop.f32.mrb[0].mxu0
        %2492 = vdwg.mxu0
        %v2493 = vmul.f32 %v2490, 0.5
        %v2494 = vtanh.pop %v2493
        %v2495 = vmul.f32 %v2494, 0.5
        %v2496 = vadd.f32 %v2495, 0.5
        %v2497 = vtanh.pop %v2490
        %v2498 = vmul.f32 %v2496, %v2290
        %2500 = vrot.lane.b32.xlu0 %v2497, 64
        %v2501 = vpop.permute.xlu0 %2500
        %v2503 = vmul.f32 %v2496, %v2501
        %2505 = vrot.lane.b32.xlu0 %v2503, 32
        %v2506 = vpop.permute.xlu0 %2505
        %v2508 = vadd.f32 %v2498, %v2506
        %v2509 = vtanh.pop %v2508
        %2511 = vrot.lane.b32.xlu0 %v2509, 64
        %v2512 = vpop.permute.xlu0 %2511
        %v2514 = vmul.f32 %v2496, %v2512
        %2516 = vrot.lane.b32.xlu0 %v2514, 32
        %v2517 = vpop.permute.xlu0 %2516
        %s2519 = scalar_lea.vmem [#allocation5], 14
        %2520 = vst.msk [vmem:[%s2519] sm:$0x3] %vm993, %v2517
        %2521 = vst.msk [vmem:[#allocation2] sm:$0x3] %vm993, %v2406
        %2523 = vrot.lane.b32.xlu0 %v2397, 96
        %v2524 = vpop.permute.xlu0 %2523
        %2526 = vst.msk [vmem:[#allocation3] sm:$0x3] %vm993, %v2524
        %2527 = vst.msk [vmem:[%s762] sm:$0x3] %vm993, %v2517
        %2529 = vrot.lane.b32.xlu0 %v2508, 96
        %v2530 = vpop.permute.xlu0 %2529
        %2532 = vst.msk [vmem:[%s764] sm:$0x3] %vm993, %v2530
        %v2533 = vld [vmem:[#allocation5] sm:$0x3]
        %v2534 = vld [vmem:[#allocation5 + $0x2] sm:$0x3]
        %v2535 = vld [vmem:[#allocation5 + $0x4] sm:$0x3]
        %v2536 = vld [vmem:[#allocation5 + $0x6] sm:$0x3]
        %v2537 = vld [vmem:[#allocation5 + $0x8] sm:$0x3]
        %v2538 = vld [vmem:[#allocation5 + $0xa] sm:$0x3]
        %v2539 = vld [vmem:[#allocation5 + $0xc] sm:$0x3]
        %v2540 = vld [vmem:[#allocation5 + $0xe] sm:$0x3]
        %v2541 = vld [vmem:[#allocation14] sm:$0xff]
        %v2542 = vld [vmem:[#allocation14 + $0x8] sm:$0xff]
        %v2543 = vld [vmem:[#allocation14 + $0x10] sm:$0xff]
        %v2544 = vld [vmem:[#allocation14 + $0x18] sm:$0xff]
        %v2545 = vld [vmem:[%s7] sm:$0x1]
        %v2547 = vlaneseq
        %v2548 = vshrl.u32 %v2547, 7
        %v2549 = vsub.s32 0, %v2548
        %v2550 = vrot.slane %v2545, %v2549
        %v2560 = vcombine.low %v2533, %v2534
        %v2561 = vcombine.low %v2535, %v2536
        %v2563 = vunpack.c.l.s4 1983009808
        %v2564 = vunpack.c.0.s8 %v2563
        %v2565 = vlaneseq
        %v2566 = vshrl.u32 %v2565, 7
        %v2567 = vsub.s32 %v2564, %v2566
        %v2568 = vrot.slane %v2560, %v2567
        %v2570 = vunpack.c.l.s4 1983009808
        %v2571 = vunpack.c.0.s8 %v2570
        %v2572 = vlaneseq
        %v2573 = vshrl.u32 %v2572, 7
        %v2574 = vsub.s32 %v2571, %v2573
        %v2575 = vrot.slane %v2561, %v2574
        %v2576 = vcombine.low %v2568, %v2575
        %v2577 = vcombine.low %v2537, %v2538
        %v2578 = vcombine.low %v2539, %v2540
        %v2580 = vunpack.c.l.s4 1983009808
        %v2581 = vunpack.c.0.s8 %v2580
        %v2582 = vlaneseq
        %v2583 = vshrl.u32 %v2582, 7
        %v2584 = vsub.s32 %v2581, %v2583
        %v2585 = vrot.slane %v2577, %v2584
        %v2587 = vunpack.c.l.s4 1983009808
        %v2588 = vunpack.c.0.s8 %v2587
        %v2589 = vlaneseq
        %v2590 = vshrl.u32 %v2589, 7
        %v2591 = vsub.s32 %v2588, %v2590
        %v2592 = vrot.slane %v2578, %v2591
        %v2593 = vcombine.low %v2585, %v2592
        %v2594 = vsel %vm771, %v2576, 0
        %v2596 = vsel %vm771, %v2593, 0
        %2598 = vmatprep.subr.mxu0 0.0
        %2599 = vmatpush1.msra.mxu0 %v2541
        %2600 = vmatprep.subr.mxu0 0.0
        %2601 = vmatpush1.msra.mxu0 %v2542
        %2602 = vmatprep.subr.mxu0 0.0
        %2603 = vmatpush1.msra.mxu0 %v2543
        %2604 = vmatprep.subr.mxu0 0.0
        %2605 = vmatpush1.msra.mxu0 %v2544
        %2606 = vmatprep.subr.mxu0 0.0
        %2607 = vmatpush1.msra.mxu0 0.0
        %2608 = vmatprep.subr.mxu0 0.0
        %2609 = vmatpush1.msra.mxu0 0.0
        %2610 = vmatprep.subr.mxu0 0.0
        %2611 = vmatpush1.msra.mxu0 0.0
        %2612 = vmatprep.subr.mxu0 0.0
        %2613 = vmatpush1.msra.mxu0 0.0
        %2614 = vmatprep.subr.mxu0 0.0
        %2615 = vmatpush1.msra.mxu0 0.0
        %2616 = vmatprep.subr.mxu0 0.0
        %2617 = vmatpush1.msra.mxu0 0.0
        %2618 = vmatprep.subr.mxu0 0.0
        %2619 = vmatpush1.msra.mxu0 0.0
        %2620 = vmatprep.subr.mxu0 0.0
        %2621 = vmatpush1.msra.mxu0 0.0
        %2622 = vmatprep.subr.mxu0 0.0
        %2623 = vmatpush1.msra.mxu0 0.0
        %2624 = vmatprep.subr.mxu0 0.0
        %2625 = vmatpush1.msra.mxu0 0.0
        %2626 = vmatprep.subr.mxu0 0.0
        %2627 = vmatpush1.msra.mxu0 0.0
        %2628 = vmatprep.subr.mxu0 0.0
        %2629 = vmatpush1.msra.mxu0 0.0
        %2630 = vmatprep.subr.mxu0 0.0
        %2631 = vmatpush1.msra.mxu0 0.0
        %2632 = vmatprep.subr.mxu0 0.0
        %2633 = vmatpush1.msra.mxu0 0.0
        %2634 = vmatprep.subr.mxu0 0.0
        %2635 = vmatpush1.msra.mxu0 0.0
        %2636 = vmatprep.subr.mxu0 0.0
        %2637 = vmatpush1.msra.mxu0 0.0
        %2638 = vmatprep.subr.mxu0 0.0
        %2639 = vmatpush1.msra.mxu0 0.0
        %2640 = vmatprep.subr.mxu0 0.0
        %2641 = vmatpush1.msra.mxu0 0.0
        %2642 = vmatprep.subr.mxu0 0.0
        %2643 = vmatpush1.msra.mxu0 0.0
        %2644 = vmatprep.subr.mxu0 0.0
        %2645 = vmatpush1.msra.mxu0 0.0
        %2646 = vmatprep.subr.mxu0 0.0
        %2647 = vmatpush1.msra.mxu0 0.0
        %2648 = vmatprep.subr.mxu0 0.0
        %2649 = vmatpush1.msra.mxu0 0.0
        %2650 = vmatprep.subr.mxu0 0.0
        %2651 = vmatpush1.msra.mxu0 0.0
        %2652 = vmatprep.subr.mxu0 0.0
        %2653 = vmatpush1.msra.mxu0 0.0
        %2654 = vmatprep.subr.mxu0 0.0
        %2655 = vmatpush1.msra.mxu0 0.0
        %2656 = vmatprep.subr.mxu0 0.0
        %2657 = vmatpush1.msra.mxu0 0.0
        %2658 = vmatprep.subr.mxu0 0.0
        %2659 = vmatpush1.msra.mxu0 0.0
        %2660 = vmatprep.subr.mxu0 0.0
        %2661 = vmatpush1.msra.mxu0 0.0
        %2662 = vmatprep.mubr.f32.mxu0 0.0
        %2663 = vmatmul.mubr.f32.gmra.mrb[0].mxu0 %v2594
        %v2664 = vpop.f32.mrb[0].mxu0
        %v2665 = vadd.f32 %v2550, %v2664
        %v2666 = vpop.f32.mrb[0].mxu0
        %2667 = vmatprep.mubr.f32.mxu0 0.0
        %2668 = vmatmul.mubr.f32.gmra.mrb[0].mxu0 %v2596
        %v2669 = vpop.f32.mrb[0].mxu0
        %v2670 = vadd.f32 %v2550, %v2669
        %v2671 = vpop.f32.mrb[0].mxu0
        %2672 = vdwg.mxu0
        %v2675 = vcombine.high %v2665, %v2665
        %v2677 = vunpack.c.l.s4 1983009808
        %v2678 = vunpack.c.0.s8 %v2677
        %v2679 = vlaneseq
        %v2680 = vshrl.u32 %v2679, 7
        %v2681 = vsub.s32 %v2678, %v2680
        %v2682 = vrot.slane %v2665, %v2681
        %v2684 = vunpack.c.l.s4 1983009808
        %v2685 = vunpack.c.0.s8 %v2684
        %v2686 = vlaneseq
        %v2687 = vshrl.u32 %v2686, 7
        %v2688 = vsub.s32 %v2685, %v2687
        %v2689 = vrot.slane %v2675, %v2688
        %v2690 = vcombine.high %v2682, %v2682
        %v2691 = vcombine.high %v2689, %v2689
        %v2692 = vcombine.high %v2670, %v2670
        %v2694 = vunpack.c.l.s4 1983009808
        %v2695 = vunpack.c.0.s8 %v2694
        %v2696 = vlaneseq
        %v2697 = vshrl.u32 %v2696, 7
        %v2698 = vsub.s32 %v2695, %v2697
        %v2699 = vrot.slane %v2670, %v2698
        %v2701 = vunpack.c.l.s4 1983009808
        %v2702 = vunpack.c.0.s8 %v2701
        %v2703 = vlaneseq
        %v2704 = vshrl.u32 %v2703, 7
        %v2705 = vsub.s32 %v2702, %v2704
        %v2706 = vrot.slane %v2692, %v2705
        %v2707 = vcombine.high %v2699, %v2699
        %v2708 = vcombine.high %v2706, %v2706
        %2717 = vst [vmem:[%s534] sm:$0x3] %v2682
        %2718 = vst [vmem:[%s534 + $0x2] sm:$0x3] %v2690
        %2719 = vst [vmem:[%s534 + $0x4] sm:$0x3] %v2689
        %2720 = vst [vmem:[%s534 + $0x6] sm:$0x3] %v2691
        %2721 = vst [vmem:[%s534 + $0x8] sm:$0x3] %v2699
        %2722 = vst [vmem:[%s534 + $0xa] sm:$0x3] %v2707
        %2723 = vst [vmem:[%s534 + $0xc] sm:$0x3] %v2706
        %2724 = vst [vmem:[%s534 + $0xe] sm:$0x3] %v2708
        %p2725 = scmp.eq.s32.totalorder %s38, 1
        // Predicated region
        $region85: #{tpu_custom_call.1} parent=59 // pred_check
          %p2726 = pneg %p2725
        $region86: #{tpu_custom_call.1} parent=59 // pred_check_branch
          %2728 = sbr.rel (%p2726) target = $region88
        $region87: #{tpu_custom_call.1} parent=59 // pred_region
          %v2729 = vld [vmem:[#allocation2] sm:$0x3]
          %v2730 = vld [vmem:[#allocation2 + $0x2] sm:$0x3]
          %2731 = vst.msk [vmem:[#allocation16] sm:$0x3] %vm993, %v2729
          %2732 = vst.msk [vmem:[#allocation16 + $0x2] sm:$0x3] %vm993, %v2730
          %v2733 = vld [vmem:[#allocation3] sm:$0x3]
          %v2734 = vld [vmem:[#allocation3 + $0x2] sm:$0x3]
          %2735 = vst.msk [vmem:[#allocation18] sm:$0x3] %vm993, %v2733
          %2736 = vst.msk [vmem:[#allocation18 + $0x2] sm:$0x3] %vm993, %v2734
        $region88: #{tpu_custom_call.1} parent=59 // pred_fallthru
          _
        %s2737 = sand.u32 %s282, 1
        %s2738 = scalar_lea.sflag [#allocation8], %s2737
        %s2739 = sand.u32 %s282, 1
        %s2740 = smul.addr %s2739, 16
        %s2741 = scalar_lea.vmem [#allocation15], %s2740
        // Predicated region
        $region89: #{tpu_custom_call.1} parent=59 // pred_check
          %p2742 = pneg %p292
        $region90: #{tpu_custom_call.1} parent=59 // pred_check_branch
          %2744 = sbr.rel (%p2742) target = $region92
        $region91: #{tpu_custom_call.1} parent=59 // pred_region
          %s2745 = smul.u32 8, %s38
          %s2747 = ssub.s32 256, 256
          %2748 = vsyncadd %s2738, %s2747
          %s2749 = sadd.s32 %s37, %s2745
          %s2750 = smul.addr %s2749, 32
          %s2751 = scalar_lea.hbm %s10, %s2750
          %s2752 = sshll.u32 %s2741, 4
          %s2753 = int_to_ptr.vmem [resolvable:$true] %s2752
          %2758 = dma.vmem_to_hbm [thread:$0]  %s2753, 256, %s2751, %s2738, 32, 32, 2
        $region92: #{tpu_custom_call.1} parent=59 // pred_fallthru
          _
        // Predicated region
        $region93: #{tpu_custom_call.1} parent=59 // pred_check
          %p2759 = pneg %p318
        $region94: #{tpu_custom_call.1} parent=59 // pred_check_branch
          %2761 = sbr.rel (%p2759) target = $region96
        $region95: #{tpu_custom_call.1} parent=59 // pred_region
          %s2763 = ssub.s32 64, 64
          %2764 = vsyncadd [#allocation17], %s2763
          %s2765 = smul.addr %s37, 32
          %s2766 = scalar_lea.hbm %s11, %s2765
          %s2767 = sshll.u32 [#allocation16], 4
          %s2768 = int_to_ptr.vmem [resolvable:$true] %s2767
          %2773 = dma.vmem_to_hbm [thread:$0]  %s2768, 64, %s2766, [#allocation17], 32, 32, 2
        $region96: #{tpu_custom_call.1} parent=59 // pred_fallthru
          _
        // Predicated region
        $region97: #{tpu_custom_call.1} parent=59 // pred_check
          %p2774 = pneg %p344
        $region98: #{tpu_custom_call.1} parent=59 // pred_check_branch
          %2776 = sbr.rel (%p2774) target = $region100
        $region99: #{tpu_custom_call.1} parent=59 // pred_region
          %s2778 = ssub.s32 64, 64
          %2779 = vsyncadd [#allocation17], %s2778
          %s2780 = smul.addr %s37, 32
          %s2781 = scalar_lea.hbm %s12, %s2780
          %s2782 = sshll.u32 [#allocation18], 4
          %s2783 = int_to_ptr.vmem [resolvable:$true] %s2782
          %2788 = dma.vmem_to_hbm [thread:$0]  %s2783, 64, %s2781, [#allocation17], 32, 32, 2
        $region100: #{tpu_custom_call.1} parent=59 // pred_fallthru
          _
        // Predicated region
        $region101: #{tpu_custom_call.1} parent=59 // pred_check
          %p2789 = pneg %p318
        $region102: #{tpu_custom_call.1} parent=59 // pred_check_branch
          %2791 = sbr.rel (%p2789) target = $region104
        $region103: #{tpu_custom_call.1} parent=59 // pred_region
          %2792 = dma.done [#allocation17], 64
        $region104: #{tpu_custom_call.1} parent=59 // pred_fallthru
          _
        // Predicated region
        $region105: #{tpu_custom_call.1} parent=59 // pred_check
          %p2793 = pneg %p344
        $region106: #{tpu_custom_call.1} parent=59 // pred_check_branch
          %2795 = sbr.rel (%p2793) target = $region108
        $region107: #{tpu_custom_call.1} parent=59 // pred_region
          %2796 = dma.done [#allocation17], 64
        $region108: #{tpu_custom_call.1} parent=59 // pred_fallthru
          _
      $region60: #{tpu_custom_call.1} parent=5 // pred_fallthru
        _
      %p2797 = scmp.le.s32.totalorder 2, %s28
      // Predicated region
      $region109: #{tpu_custom_call.1} parent=5 // pred_check
        %p2798 = pneg %p2797
      $region110: #{tpu_custom_call.1} parent=5 // pred_check_branch
        %2800 = sbr.rel (%p2798) target = $region112
      $region111: #{tpu_custom_call.1} parent=5 // pred_region
        %s2801 = ssub.s32 %s28, 2
        // Predicated region
        $region113: #{tpu_custom_call.1} parent=111 // pred_check
          %p2802 = pneg %p298
        $region114: #{tpu_custom_call.1} parent=111 // pred_check_branch
          %2804 = sbr.rel (%p2802) target = $region116
        $region115: #{tpu_custom_call.1} parent=111 // pred_region
          %s2805 = sand.u32 %s283, 1
          %s2806 = scalar_lea.sflag [#allocation8], %s2805
          %s2807 = sand.u32 %s283, 1
          %s2808 = smul.addr %s2807, 16
          %s2809 = scalar_lea.vmem [#allocation15], %s2808
          %2810 = dma.done %s2806, 256
        $region116: #{tpu_custom_call.1} parent=111 // pred_fallthru
          _
      $region112: #{tpu_custom_call.1} parent=5 // pred_fallthru
        _
    $region6: #{tpu_custom_call.1} parent=1 // loop_footer
      %s32 = sadd.s32 1, %s28
    $region7: #{tpu_custom_call.1} parent=1 // loop_footer_branch
      %27 = sbr.rel target = $region3
    $region8: #{tpu_custom_call.1} parent=1 // loop_exit
      _
    %2811 = vsyncpa [#allocation7], 1
    %s2812 = scalar_lea.sflag [#allocation7], 1
    %2813 = vsyncpa %s2812, 1
    %2814 = vsyncpa [#allocation10], 1
    %2815 = vsyncpa [#allocation13], 1
    %2816 = vsyncpa [#allocation8], 1
    %s2817 = scalar_lea.sflag [#allocation8], 1
    %2818 = vsyncpa %s2817, 1
    %2819 = vsyncpa [#allocation17], 1

</llo_original>
